<compile_context>
chip_gen: v7x
topology: tpu7x:2x2x1
jax: 0.10.0
libtpu: 0.0.40
codegen_flags: <defaults>
</compile_context>

<pallas_src>
import functools

import jax
import jax.numpy as jnp
from jax.experimental import pallas as pl
from jax.experimental.pallas import tpu as pltpu

HIDDEN = 512
EPS = 1e-5
LANE = 128


def _round_up(n, m):
    return ((n + m - 1) // m) * m


def _bn_relu(h, gamma, beta, groups, inv_b):
    """Training-mode BatchNorm1d (biased variance, eps=1e-5) + ReLU, f32.

    groups == 1: stats over all rows (exact nn.BatchNorm1d semantics).
    groups  > 1: rows are `groups` independent BN batches packed in this tile;
                 reshape to (G, B, C) (B % 8 == 0 -> layout-preserving) and
                 reduce over axis=1.
    """
    if groups == 1:
        mean = jnp.sum(h, axis=0, keepdims=True) * inv_b
        d = h - mean
        var = jnp.sum(d * d, axis=0, keepdims=True) * inv_b
        scale = gamma * jax.lax.rsqrt(var + EPS)
        return jnp.maximum(d * scale + beta, 0.0)

    rows, cols = h.shape
    hg = h.reshape(groups, rows // groups, cols)
    mean = jnp.sum(hg, axis=1, keepdims=True) * inv_b
    d = hg - mean
    var = jnp.sum(d * d, axis=1, keepdims=True) * inv_b
    scale = gamma * jax.lax.rsqrt(var + EPS)          # (1,C) * (G,1,C) -> (G,1,C)
    return jnp.maximum(d * scale + beta, 0.0).reshape(rows, cols)


def discriminator_kernel(x_ref, w1_ref, g1_ref, b1_ref,
                         w2_ref, g2_ref, b2_ref, w3_ref, o_ref,
                         *, groups, inv_b):
    # Layer 1: Linear(in_features, 512, bias=False) -> BN -> ReLU
    x = x_ref[...].astype(jnp.bfloat16)               # bf16 MXU operands, f32 accum
    h = jnp.dot(x, w1_ref[...], preferred_element_type=jnp.float32)
    h = _bn_relu(h, g1_ref[...], b1_ref[...], groups, inv_b)

    # Layer 2: Linear(512, 512, bias=False) -> BN -> ReLU
    h = jnp.dot(h.astype(jnp.bfloat16), w2_ref[...],
                preferred_element_type=jnp.float32)
    h = _bn_relu(h, g2_ref[...], b2_ref[...], groups, inv_b)

    # Layer 3: Linear(512, client_num, bias=False)  (cols padded to 128 lanes)
    out = jnp.dot(h.astype(jnp.bfloat16), w3_ref[...],
                  preferred_element_type=jnp.float32)
    o_ref[...] = out.astype(o_ref.dtype)


def prepare_params(raw_params):
    """One-time conversion of f32 [in, out] params to kernel-ready form:
    bf16 weights, w3 zero-padded to a 128-lane multiple.  Returns
    (kernel_params, client_num)."""
    w1, g1, b1, w2, g2, b2, w3 = raw_params
    client_num = w3.shape[1]
    n_pad = _round_up(client_num, LANE)
    w3p = jnp.pad(w3, ((0, 0), (0, n_pad - client_num)))
    kparams = (w1.astype(jnp.bfloat16), g1, b1,
               w2.astype(jnp.bfloat16), g2, b2,
               w3p.astype(jnp.bfloat16))
    return kparams, client_num


def discriminator_forward(x, kparams, client_num, *, bn_batch=None,
                          groups_per_step=None):
    """x: [M, in_features] f32.

    bn_batch=None (default): BatchNorm over the full batch -> exact
    nn.BatchNorm1d training-mode semantics of the PyTorch module.
    bn_batch=B: rows are treated as M//B independent BN batches; several groups
    are packed per grid step so each step still feeds the MXU >=128-256 rows.
    """
    w1, g1, b1, w2, g2, b2, w3p = kparams
    M, K = x.shape
    n_pad = w3p.shape[1]

    if bn_batch is None:
        bn_batch = M
    assert M % bn_batch == 0, "M must be a multiple of bn_batch"
    n_groups = M // bn_batch

    if groups_per_step is None:
        # Smallest divisor of n_groups giving >=256 rows/step (fills the MXU on
        # v6e/v7x); with large M this naturally keeps >=2 grid steps for the two
        # v7x TensorCores (grid axis is "parallel").
        target = max(1, min(n_groups, -(-256 // bn_batch)))
        groups_per_step = n_groups
        for g in range(target, n_groups + 1):
            if n_groups % g == 0:
                groups_per_step = g
                break
    assert n_groups % groups_per_step == 0
    rows_per_step = groups_per_step * bn_batch
    n_steps = n_groups // groups_per_step
    if groups_per_step > 1:
        assert bn_batch % 8 == 0, "bn_batch must be a multiple of 8 when packing"
    if n_steps > 1:
        assert rows_per_step % 8 == 0

    const = lambda s: (0, 0)          # weights fetched once, VMEM-resident
    in_specs = [
        pl.BlockSpec((rows_per_step, K), lambda s: (s, 0)),   # x (true K, no pad)
        pl.BlockSpec((K, HIDDEN), const),                     # w1 (bf16)
        pl.BlockSpec((1, HIDDEN), const),                     # gamma1
        pl.BlockSpec((1, HIDDEN), const),                     # beta1
        pl.BlockSpec((HIDDEN, HIDDEN), const),                # w2 (bf16)
        pl.BlockSpec((1, HIDDEN), const),                     # gamma2
        pl.BlockSpec((1, HIDDEN), const),                     # beta2
        pl.BlockSpec((HIDDEN, n_pad), const),                 # w3 (bf16, padded)
    ]
    out_spec = pl.BlockSpec((rows_per_step, n_pad), lambda s: (s, 0))

    # VMEM budget from actual block sizes (double-buffered I/O + resident weights
    # + generous allowance for f32 intermediates), capped well under 64 MiB (v7x).
    w_bytes = (K * HIDDEN + HIDDEN * HIDDEN + HIDDEN * n_pad) * 2 * 2
    gb_bytes = 4 * HIDDEN * 4 * 2
    io_bytes = rows_per_step * (K * 4 + n_pad * 4) * 2
    act_bytes = 8 * rows_per_step * HIDDEN * 4
    vmem_limit = int(min(w_bytes + gb_bytes + io_bytes + act_bytes + (8 << 20),
                         48 << 20))

    flops = 2 * M * (K * HIDDEN + HIDDEN * HIDDEN + HIDDEN * n_pad) + 10 * M * HIDDEN
    transcendentals = 2 * n_groups * HIDDEN
    bytes_accessed = (M * K * 4
                      + (K * HIDDEN + HIDDEN * HIDDEN + HIDDEN * n_pad) * 2
                      + 4 * HIDDEN * 4
                      + M * n_pad * 4)

    out = pl.pallas_call(
        functools.partial(discriminator_kernel,
                          groups=groups_per_step, inv_b=1.0 / bn_batch),
        out_shape=jax.ShapeDtypeStruct((M, n_pad), jnp.float32),
        grid=(n_steps,),
        in_specs=in_specs,
        out_specs=out_spec,
        compiler_params=pltpu.CompilerParams(
            dimension_semantics=("parallel",),
            vmem_limit_bytes=vmem_limit,
        ),
        cost_estimate=pl.CostEstimate(flops=int(flops),
                                      transcendentals=int(transcendentals),
                                      bytes_accessed=int(bytes_accessed)),
    )(x, w1, g1, b1, w2, g2, b2, w3p)
    return out[:, :client_num]


def init_params(key, in_features, client_num):
    """PyTorch-default-like init (kaiming-uniform Linear, BN ones/zeros).
    Linear weights are pre-transposed to [in, out], f32."""
    k1, k2, k3 = jax.random.split(key, 3)

    def linear_w(k, fan_in, fan_out):
        bound = 1.0 / jnp.sqrt(fan_in)
        return jax.random.uniform(k, (fan_in, fan_out), jnp.float32, -bound, bound)

    w1 = linear_w(k1, in_features, HIDDEN)
    w2 = linear_w(k2, HIDDEN, HIDDEN)
    w3 = linear_w(k3, HIDDEN, client_num)
    g1 = jnp.ones((1, HIDDEN), jnp.float32)
    b1 = jnp.zeros((1, HIDDEN), jnp.float32)
    g2 = jnp.ones((1, HIDDEN), jnp.float32)
    b2 = jnp.zeros((1, HIDDEN), jnp.float32)
    return (w1, g1, b1, w2, g2, b2, w3)


def reference_forward(x, kparams, client_num, *, bn_batch=None):
    """Plain-JAX reference with identical math (bf16 matmul operands, f32 accum,
    centered biased-variance training-mode BN)."""
    w1, g1, b1, w2, g2, b2, w3p = kparams
    M = x.shape[0]
    if bn_batch is None:
        bn_batch = M

    def bn_relu(h, g, b):
        mean = h.mean(axis=0, keepdims=True)
        d = h - mean
        var = (d * d).mean(axis=0, keepdims=True)
        return jnp.maximum(d * (g * jax.lax.rsqrt(var + EPS)) + b, 0.0)

    def one_group(xg):
        h = jnp.dot(xg.astype(jnp.bfloat16), w1, preferred_element_type=jnp.float32)
        h = bn_relu(h, g1, b1)
        h = jnp.dot(h.astype(jnp.bfloat16), w2, preferred_element_type=jnp.float32)
        h = bn_relu(h, g2, b2)
        return jnp.dot(h.astype(jnp.bfloat16), w3p, preferred_element_type=jnp.float32)

    outs = [one_group(x[g * bn_batch:(g + 1) * bn_batch])
            for g in range(M // bn_batch)]
    return jnp.concatenate(outs, axis=0)[:, :client_num]


if __name__ == "__main__":
    key = jax.random.PRNGKey(0)
    kx, kp = jax.random.split(key)

    in_features = 32     # base_model.classifier.in_features
    client_num = 4
    M = 256              # batch rows

    x = jax.random.normal(kx, (M, in_features), jnp.float32)
    raw_params = init_params(kp, in_features, client_num)
    kparams, cn = prepare_params(raw_params)   # one-time bf16 cast / w3 pad

    # 1) Module semantics: BatchNorm over the full batch, one 256-row grid step.
    out = discriminator_forward(x, kparams, cn)
    out = jax.block_until_ready(out)
    ref = reference_forward(x, kparams, cn)
    assert out.shape == (M, client_num)
    assert jnp.allclose(out, ref, atol=1e-3, rtol=1e-3), "full-batch mismatch"

    # 2) Grouped mode: 8 independent 32-row BN batches, packed 4 per grid step
    #    (128 rows/step, 2 parallel grid steps -> both v7x TensorCores).
    out_g = discriminator_forward(x, kparams, cn, bn_batch=32, groups_per_step=4)
    out_g = jax.block_until_ready(out_g)
    ref_g = reference_forward(x, kparams, cn, bn_batch=32)
    assert jnp.allclose(out_g, ref_g, atol=1e-3, rtol=1e-3), "grouped mismatch"

    print("KERNEL_OK")
</pallas_src>

<mosaic_0001>
module attributes {stable_mosaic.version = 11 : i64} {
  func.func @discriminator_kernel(%arg0: i32, %arg1: memref<256x32xf32, #tpu.memory_space<vmem>>, %arg2: memref<32x512xbf16, #tpu.memory_space<vmem>>, %arg3: memref<1x512xf32, #tpu.memory_space<vmem>>, %arg4: memref<1x512xf32, #tpu.memory_space<vmem>>, %arg5: memref<512x512xbf16, #tpu.memory_space<vmem>>, %arg6: memref<1x512xf32, #tpu.memory_space<vmem>>, %arg7: memref<1x512xf32, #tpu.memory_space<vmem>>, %arg8: memref<512x128xbf16, #tpu.memory_space<vmem>>, %arg9: memref<256x128xf32, #tpu.memory_space<vmem>>) attributes {dimension_semantics = [#tpu.dimension_semantics<parallel>], iteration_bounds = array<i64: 1>, scalar_prefetch = 0 : i64, scratch_operands = 0 : i64, tpu.core_type = #tpu.core_type<tc>, window_params = [{transform_indices = @transform_0, window_bounds = array<i64: 256, 32>}, {pipeline_mode = #tpu.pipeline_mode<synchronous>, transform_indices = @transform_1, window_bounds = array<i64: 32, 512>}, {pipeline_mode = #tpu.pipeline_mode<synchronous>, transform_indices = @transform_2, window_bounds = array<i64: 1, 512>}, {pipeline_mode = #tpu.pipeline_mode<synchronous>, transform_indices = @transform_3, window_bounds = array<i64: 1, 512>}, {pipeline_mode = #tpu.pipeline_mode<synchronous>, transform_indices = @transform_4, window_bounds = array<i64: 512, 512>}, {pipeline_mode = #tpu.pipeline_mode<synchronous>, transform_indices = @transform_5, window_bounds = array<i64: 1, 512>}, {pipeline_mode = #tpu.pipeline_mode<synchronous>, transform_indices = @transform_6, window_bounds = array<i64: 1, 512>}, {pipeline_mode = #tpu.pipeline_mode<synchronous>, transform_indices = @transform_7, window_bounds = array<i64: 512, 128>}, {transform_indices = @transform_8, window_bounds = array<i64: 256, 128>}]} {
    %c0 = arith.constant 0 : index
    %c0_0 = arith.constant 0 : index
    %0 = vector.load %arg1[%c0, %c0_0] : memref<256x32xf32, #tpu.memory_space<vmem>>, vector<256x32xf32>
    %1 = arith.truncf %0 : vector<256x32xf32> to vector<256x32xbf16>
    %c0_1 = arith.constant 0 : index
    %c0_2 = arith.constant 0 : index
    %2 = vector.load %arg2[%c0_1, %c0_2] : memref<32x512xbf16, #tpu.memory_space<vmem>>, vector<32x512xbf16>
    %cst = arith.constant dense<0.000000e+00> : vector<256x512xf32>
    %3 = tpu.matmul %1, %2, %cst {dimension_numbers = #tpu.dot_dimension_numbers<[1], [0], [0], [1], [0, 0, 1, 1], [], []>} : vector<256x32xbf16>, vector<32x512xbf16>, vector<256x512xf32> -> vector<256x512xf32>
    %c0_3 = arith.constant 0 : index
    %c0_4 = arith.constant 0 : index
    %4 = vector.load %arg3[%c0_3, %c0_4] : memref<1x512xf32, #tpu.memory_space<vmem>>, vector<1x512xf32>
    %c0_5 = arith.constant 0 : index
    %c0_6 = arith.constant 0 : index
    %5 = vector.load %arg4[%c0_5, %c0_6] : memref<1x512xf32, #tpu.memory_space<vmem>>, vector<1x512xf32>
    %cst_7 = arith.constant dense<0.000000e+00> : vector<512xf32>
    %6 = vector.multi_reduction <add>, %3, %cst_7 [0] : vector<256x512xf32> to vector<512xf32>
    %7 = vector.shape_cast %6 : vector<512xf32> to vector<1x512xf32>
    %cst_8 = arith.constant 3.906250e-03 : f32
    %8 = vector.broadcast %cst_8 : f32 to vector<1x512xf32>
    %9 = arith.mulf %7, %8 : vector<1x512xf32>
    %10 = vector.broadcast %9 : vector<1x512xf32> to vector<256x512xf32>
    %11 = arith.subf %3, %10 : vector<256x512xf32>
    %12 = arith.mulf %11, %11 : vector<256x512xf32>
    %cst_9 = arith.constant dense<0.000000e+00> : vector<512xf32>
    %13 = vector.multi_reduction <add>, %12, %cst_9 [0] : vector<256x512xf32> to vector<512xf32>
    %14 = vector.shape_cast %13 : vector<512xf32> to vector<1x512xf32>
    %cst_10 = arith.constant 3.906250e-03 : f32
    %15 = vector.broadcast %cst_10 : f32 to vector<1x512xf32>
    %16 = arith.mulf %14, %15 : vector<1x512xf32>
    %cst_11 = arith.constant 9.99999974E-6 : f32
    %17 = vector.broadcast %cst_11 : f32 to vector<1x512xf32>
    %18 = arith.addf %16, %17 : vector<1x512xf32>
    %19 = math.rsqrt %18 : vector<1x512xf32>
    %20 = arith.mulf %4, %19 : vector<1x512xf32>
    %21 = vector.broadcast %20 : vector<1x512xf32> to vector<256x512xf32>
    %22 = arith.mulf %11, %21 : vector<256x512xf32>
    %23 = vector.broadcast %5 : vector<1x512xf32> to vector<256x512xf32>
    %24 = arith.addf %22, %23 : vector<256x512xf32>
    %cst_12 = arith.constant 0.000000e+00 : f32
    %25 = vector.broadcast %cst_12 : f32 to vector<256x512xf32>
    %26 = arith.maximumf %24, %25 : vector<256x512xf32>
    %27 = arith.truncf %26 : vector<256x512xf32> to vector<256x512xbf16>
    %c0_13 = arith.constant 0 : index
    %c0_14 = arith.constant 0 : index
    %28 = vector.load %arg5[%c0_13, %c0_14] : memref<512x512xbf16, #tpu.memory_space<vmem>>, vector<512x512xbf16>
    %cst_15 = arith.constant dense<0.000000e+00> : vector<256x512xf32>
    %29 = tpu.matmul %27, %28, %cst_15 {dimension_numbers = #tpu.dot_dimension_numbers<[1], [0], [0], [1], [0, 0, 1, 1], [], []>} : vector<256x512xbf16>, vector<512x512xbf16>, vector<256x512xf32> -> vector<256x512xf32>
    %c0_16 = arith.constant 0 : index
    %c0_17 = arith.constant 0 : index
    %30 = vector.load %arg6[%c0_16, %c0_17] : memref<1x512xf32, #tpu.memory_space<vmem>>, vector<1x512xf32>
    %c0_18 = arith.constant 0 : index
    %c0_19 = arith.constant 0 : index
    %31 = vector.load %arg7[%c0_18, %c0_19] : memref<1x512xf32, #tpu.memory_space<vmem>>, vector<1x512xf32>
    %cst_20 = arith.constant dense<0.000000e+00> : vector<512xf32>
    %32 = vector.multi_reduction <add>, %29, %cst_20 [0] : vector<256x512xf32> to vector<512xf32>
    %33 = vector.shape_cast %32 : vector<512xf32> to vector<1x512xf32>
    %cst_21 = arith.constant 3.906250e-03 : f32
    %34 = vector.broadcast %cst_21 : f32 to vector<1x512xf32>
    %35 = arith.mulf %33, %34 : vector<1x512xf32>
    %36 = vector.broadcast %35 : vector<1x512xf32> to vector<256x512xf32>
    %37 = arith.subf %29, %36 : vector<256x512xf32>
    %38 = arith.mulf %37, %37 : vector<256x512xf32>
    %cst_22 = arith.constant dense<0.000000e+00> : vector<512xf32>
    %39 = vector.multi_reduction <add>, %38, %cst_22 [0] : vector<256x512xf32> to vector<512xf32>
    %40 = vector.shape_cast %39 : vector<512xf32> to vector<1x512xf32>
    %cst_23 = arith.constant 3.906250e-03 : f32
    %41 = vector.broadcast %cst_23 : f32 to vector<1x512xf32>
    %42 = arith.mulf %40, %41 : vector<1x512xf32>
    %cst_24 = arith.constant 9.99999974E-6 : f32
    %43 = vector.broadcast %cst_24 : f32 to vector<1x512xf32>
    %44 = arith.addf %42, %43 : vector<1x512xf32>
    %45 = math.rsqrt %44 : vector<1x512xf32>
    %46 = arith.mulf %30, %45 : vector<1x512xf32>
    %47 = vector.broadcast %46 : vector<1x512xf32> to vector<256x512xf32>
    %48 = arith.mulf %37, %47 : vector<256x512xf32>
    %49 = vector.broadcast %31 : vector<1x512xf32> to vector<256x512xf32>
    %50 = arith.addf %48, %49 : vector<256x512xf32>
    %cst_25 = arith.constant 0.000000e+00 : f32
    %51 = vector.broadcast %cst_25 : f32 to vector<256x512xf32>
    %52 = arith.maximumf %50, %51 : vector<256x512xf32>
    %53 = arith.truncf %52 : vector<256x512xf32> to vector<256x512xbf16>
    %c0_26 = arith.constant 0 : index
    %c0_27 = arith.constant 0 : index
    %54 = vector.load %arg8[%c0_26, %c0_27] : memref<512x128xbf16, #tpu.memory_space<vmem>>, vector<512x128xbf16>
    %cst_28 = arith.constant dense<0.000000e+00> : vector<256x128xf32>
    %55 = tpu.matmul %53, %54, %cst_28 {dimension_numbers = #tpu.dot_dimension_numbers<[1], [0], [0], [1], [0, 0, 1, 1], [], []>} : vector<256x512xbf16>, vector<512x128xbf16>, vector<256x128xf32> -> vector<256x128xf32>
    %c0_29 = arith.constant 0 : index
    %c0_30 = arith.constant 0 : index
    %56 = vector.load %arg9[%c0_29, %c0_30] : memref<256x128xf32, #tpu.memory_space<vmem>>, vector<256x128xf32>
    tpu.vector_store %arg9[%c0_29, %c0_30], %55 {strides = array<i32>} : memref<256x128xf32, #tpu.memory_space<vmem>>, vector<256x128xf32>,
    return
  }
  func.func @transform_0(%arg0: i32) -> (i32, i32) {
    %c0_i32 = arith.constant 0 : i32
    %c0_i32_0 = arith.constant 0 : i32
    return %arg0, %c0_i32 : i32, i32
  }
  func.func @transform_1(%arg0: i32) -> (i32, i32) {
    %c0_i32 = arith.constant 0 : i32
    %c0_i32_0 = arith.constant 0 : i32
    %c0_i32_1 = arith.constant 0 : i32
    return %c0_i32, %c0_i32_0 : i32, i32
  }
  func.func @transform_2(%arg0: i32) -> (i32, i32) {
    %c0_i32 = arith.constant 0 : i32
    %c0_i32_0 = arith.constant 0 : i32
    %c0_i32_1 = arith.constant 0 : i32
    return %c0_i32, %c0_i32_0 : i32, i32
  }
  func.func @transform_3(%arg0: i32) -> (i32, i32) {
    %c0_i32 = arith.constant 0 : i32
    %c0_i32_0 = arith.constant 0 : i32
    %c0_i32_1 = arith.constant 0 : i32
    return %c0_i32, %c0_i32_0 : i32, i32
  }
  func.func @transform_4(%arg0: i32) -> (i32, i32) {
    %c0_i32 = arith.constant 0 : i32
    %c0_i32_0 = arith.constant 0 : i32
    %c0_i32_1 = arith.constant 0 : i32
    return %c0_i32, %c0_i32_0 : i32, i32
  }
  func.func @transform_5(%arg0: i32) -> (i32, i32) {
    %c0_i32 = arith.constant 0 : i32
    %c0_i32_0 = arith.constant 0 : i32
    %c0_i32_1 = arith.constant 0 : i32
    return %c0_i32, %c0_i32_0 : i32, i32
  }
  func.func @transform_6(%arg0: i32) -> (i32, i32) {
    %c0_i32 = arith.constant 0 : i32
    %c0_i32_0 = arith.constant 0 : i32
    %c0_i32_1 = arith.constant 0 : i32
    return %c0_i32, %c0_i32_0 : i32, i32
  }
  func.func @transform_7(%arg0: i32) -> (i32, i32) {
    %c0_i32 = arith.constant 0 : i32
    %c0_i32_0 = arith.constant 0 : i32
    %c0_i32_1 = arith.constant 0 : i32
    return %c0_i32, %c0_i32_0 : i32, i32
  }
  func.func @transform_8(%arg0: i32) -> (i32, i32) {
    %c0_i32 = arith.constant 0 : i32
    %c0_i32_0 = arith.constant 0 : i32
    return %arg0, %c0_i32 : i32, i32
  }
}

</mosaic_0001>

<llo_original>
// kernel: tpu_custom_call.1
$region0: #{tpu_custom_call.1}
  #allocation0 [shape = 'u32[]', space=smem, size = 0x4, offset = 0x4, fixed_abs, tag = 'smem constant byte address 0x4 - core index']
  #allocation1 [shape = 'u32[144,128]{1,0:T(1,128)}', space=vmem, size = 0x12000, scoped, tag = 'internal scratch']
  %s0 = inlined_call_operand.vmem [shape: f32[256,32], index: 0, kind: input, shape index: {}]
  %s1 = inlined_call_operand.vmem [shape: bf16[32,512], index: 1, kind: input, shape index: {}]
  %s2 = inlined_call_operand.vmem [shape: f32[1,512], index: 2, kind: input, shape index: {}]
  %s3 = inlined_call_operand.vmem [shape: f32[1,512], index: 3, kind: input, shape index: {}]
  %s4 = inlined_call_operand.hbm [shape: bf16[512,512], index: 4, kind: input, shape index: {}]
  %s5 = inlined_call_operand.vmem [shape: f32[1,512], index: 5, kind: input, shape index: {}]
  %s6 = inlined_call_operand.vmem [shape: f32[1,512], index: 6, kind: input, shape index: {}]
  %s7 = inlined_call_operand.vmem [shape: bf16[512,128], index: 7, kind: input, shape index: {}]
  %s8 = inlined_call_operand.hbm [shape: f32[256,128], index: 8, kind: output, shape index: {}]
  %s9 = sld [smem:[#allocation0]]
  $region46: #{tpu_custom_call.1} parent=0
    _
  %s11 = ssub.s32 1, %s9
  %s12 = scalar_select 0, %s11, %s9
  $region1: #{tpu_custom_call.1} parent=0
    #allocation2 [shape = 'u8[524288]{0}', space=vmem, size = 0x80000, scoped, tag = 'input window, operand 4, single buffered']
    #allocation3 [shape = 's32[1]{0}', space=sflag, size = 0x4, scoped, tag = 'scoped memory for tpu_custom_call.1']
    #allocation4 [shape = 's32[1]{0}', space=sflag, size = 0x4, scoped, tag = 'scoped memory for tpu_custom_call.1']
    #allocation5 [shape = 'u8[131072]{0}', space=vmem, size = 0x20000, scoped, tag = 'output window, operand 0, single buffered']
    %13 = vsyncpa [#allocation3], 0
    %14 = vsyncpa [#allocation4], 0
    // Predicated region
    $region2: #{tpu_custom_call.1} parent=1 // pred_check
      _
    $region3: #{tpu_custom_call.1} parent=1 // pred_check_branch
      %16 = sbr.rel (0) target = $region5
    $region4: #{tpu_custom_call.1} parent=1 // pred_region
      _
    $region5: #{tpu_custom_call.1} parent=1 // pred_fallthru
      _
    // Predicated region
    $region6: #{tpu_custom_call.1} parent=1 // pred_check
      _
    $region7: #{tpu_custom_call.1} parent=1 // pred_check_branch
      %18 = sbr.rel (0) target = $region9
    $region8: #{tpu_custom_call.1} parent=1 // pred_region
      _
    $region9: #{tpu_custom_call.1} parent=1 // pred_fallthru
      _
    // Predicated region
    $region10: #{tpu_custom_call.1} parent=1 // pred_check
      _
    $region11: #{tpu_custom_call.1} parent=1 // pred_check_branch
      %20 = sbr.rel (0) target = $region13
    $region12: #{tpu_custom_call.1} parent=1 // pred_region
      _
    $region13: #{tpu_custom_call.1} parent=1 // pred_fallthru
      _
    // Predicated region
    $region14: #{tpu_custom_call.1} parent=1 // pred_check
      _
    $region15: #{tpu_custom_call.1} parent=1 // pred_check_branch
      %22 = sbr.rel (0) target = $region17
    $region16: #{tpu_custom_call.1} parent=1 // pred_region
      _
    $region17: #{tpu_custom_call.1} parent=1 // pred_fallthru
      _
    // Predicated region
    $region18: #{tpu_custom_call.1} parent=1 // pred_check
      _
    $region19: #{tpu_custom_call.1} parent=1 // pred_check_branch
      %24 = sbr.rel (0) target = $region21
    $region20: #{tpu_custom_call.1} parent=1 // pred_region
      %s26 = ssub.s32 16384, 16384
      %27 = vsyncadd [#allocation3], %s26
      %s28 = sshll.u32 [#allocation2], 4
      %s29 = int_to_ptr.vmem [resolvable:$true] %s28
      %34 = dma.hbm_to_vmem [thread:$0]  %s4, 16384, %s29, [#allocation3], 256, 256, 16
    $region21: #{tpu_custom_call.1} parent=1 // pred_fallthru
      _
    // Predicated region
    $region22: #{tpu_custom_call.1} parent=1 // pred_check
      _
    $region23: #{tpu_custom_call.1} parent=1 // pred_check_branch
      %36 = sbr.rel (0) target = $region25
    $region24: #{tpu_custom_call.1} parent=1 // pred_region
      _
    $region25: #{tpu_custom_call.1} parent=1 // pred_fallthru
      _
    // Predicated region
    $region26: #{tpu_custom_call.1} parent=1 // pred_check
      _
    $region27: #{tpu_custom_call.1} parent=1 // pred_check_branch
      %38 = sbr.rel (0) target = $region29
    $region28: #{tpu_custom_call.1} parent=1 // pred_region
      _
    $region29: #{tpu_custom_call.1} parent=1 // pred_fallthru
      _
    // Predicated region
    $region30: #{tpu_custom_call.1} parent=1 // pred_check
      _
    $region31: #{tpu_custom_call.1} parent=1 // pred_check_branch
      %40 = sbr.rel (0) target = $region33
    $region32: #{tpu_custom_call.1} parent=1 // pred_region
      _
    $region33: #{tpu_custom_call.1} parent=1 // pred_fallthru
      _
    // Predicated region
    $region34: #{tpu_custom_call.1} parent=1 // pred_check
      _
    $region35: #{tpu_custom_call.1} parent=1 // pred_check_branch
      %42 = sbr.rel (0) target = $region37
    $region36: #{tpu_custom_call.1} parent=1 // pred_region
      %43 = dma.done [#allocation3], 16384
    $region37: #{tpu_custom_call.1} parent=1 // pred_fallthru
      _
    %v45 = vld [vmem:[%s0] sm:$0xff]
    %v46 = vld [vmem:[%s0 + $0x8] sm:$0xff]
    %v47 = vld [vmem:[%s0 + $0x10] sm:$0xff]
    %v48 = vld [vmem:[%s0 + $0x18] sm:$0xff]
    %v49 = vld [vmem:[%s0 + $0x20] sm:$0xff]
    %v50 = vld [vmem:[%s0 + $0x28] sm:$0xff]
    %v51 = vld [vmem:[%s0 + $0x30] sm:$0xff]
    %v52 = vld [vmem:[%s0 + $0x38] sm:$0xff]
    %v53 = vld [vmem:[%s0 + $0x40] sm:$0xff]
    %v54 = vld [vmem:[%s0 + $0x48] sm:$0xff]
    %v55 = vld [vmem:[%s0 + $0x50] sm:$0xff]
    %v56 = vld [vmem:[%s0 + $0x58] sm:$0xff]
    %v57 = vld [vmem:[%s0 + $0x60] sm:$0xff]
    %v58 = vld [vmem:[%s0 + $0x68] sm:$0xff]
    %v59 = vld [vmem:[%s0 + $0x70] sm:$0xff]
    %v60 = vld [vmem:[%s0 + $0x78] sm:$0xff]
    %v61 = vld [vmem:[%s0 + $0x80] sm:$0xff]
    %v62 = vld [vmem:[%s0 + $0x88] sm:$0xff]
    %v63 = vld [vmem:[%s0 + $0x90] sm:$0xff]
    %v64 = vld [vmem:[%s0 + $0x98] sm:$0xff]
    %v65 = vld [vmem:[%s0 + $0xa0] sm:$0xff]
    %v66 = vld [vmem:[%s0 + $0xa8] sm:$0xff]
    %v67 = vld [vmem:[%s0 + $0xb0] sm:$0xff]
    %v68 = vld [vmem:[%s0 + $0xb8] sm:$0xff]
    %v69 = vld [vmem:[%s0 + $0xc0] sm:$0xff]
    %v70 = vld [vmem:[%s0 + $0xc8] sm:$0xff]
    %v71 = vld [vmem:[%s0 + $0xd0] sm:$0xff]
    %v72 = vld [vmem:[%s0 + $0xd8] sm:$0xff]
    %v73 = vld [vmem:[%s0 + $0xe0] sm:$0xff]
    %v74 = vld [vmem:[%s0 + $0xe8] sm:$0xff]
    %v75 = vld [vmem:[%s0 + $0xf0] sm:$0xff]
    %v76 = vld [vmem:[%s0 + $0xf8] sm:$0xff]
    %v77 = vpack.c.bf16 %v46, %v45
    %v78 = vpack.c.bf16 %v48, %v47
    %v79 = vpack.c.bf16 %v50, %v49
    %v80 = vpack.c.bf16 %v52, %v51
    %v81 = vpack.c.bf16 %v54, %v53
    %v82 = vpack.c.bf16 %v56, %v55
    %v83 = vpack.c.bf16 %v58, %v57
    %v84 = vpack.c.bf16 %v60, %v59
    %v85 = vpack.c.bf16 %v62, %v61
    %v86 = vpack.c.bf16 %v64, %v63
    %v87 = vpack.c.bf16 %v66, %v65
    %v88 = vpack.c.bf16 %v68, %v67
    %v89 = vpack.c.bf16 %v70, %v69
    %v90 = vpack.c.bf16 %v72, %v71
    %v91 = vpack.c.bf16 %v74, %v73
    %v92 = vpack.c.bf16 %v76, %v75
    %v93 = vld [vmem:[%s1] sm:$0xff]
    %v94 = vld [vmem:[%s1 + $0x8] sm:$0xff]
    %v95 = vld [vmem:[%s1 + $0x10] sm:$0xff]
    %v96 = vld [vmem:[%s1 + $0x18] sm:$0xff]
    %v97 = vld [vmem:[%s1 + $0x20] sm:$0xff]
    %v98 = vld [vmem:[%s1 + $0x28] sm:$0xff]
    %v99 = vld [vmem:[%s1 + $0x30] sm:$0xff]
    %v100 = vld [vmem:[%s1 + $0x38] sm:$0xff]
    %v109 = vunpack.c.l.b16 %v93
    %v110 = vunpack.c.h.b16 %v93
    %v111 = vunpack.c.l.b16 %v94
    %v112 = vunpack.c.h.b16 %v94
    %v113 = vunpack.c.l.b16 %v95
    %v114 = vunpack.c.h.b16 %v95
    %v115 = vunpack.c.l.b16 %v96
    %v116 = vunpack.c.h.b16 %v96
    %v117 = vunpack.c.l.b16 %v97
    %v118 = vunpack.c.h.b16 %v97
    %v119 = vunpack.c.l.b16 %v98
    %v120 = vunpack.c.h.b16 %v98
    %v121 = vunpack.c.l.b16 %v99
    %v122 = vunpack.c.h.b16 %v99
    %v123 = vunpack.c.l.b16 %v100
    %v124 = vunpack.c.h.b16 %v100
    %v125 = vpack.c.b16 %v113, %v109
    %v126 = vpack.c.b16 %v114, %v110
    %v127 = vpack.c.b16 %v115, %v111
    %v128 = vpack.c.b16 %v116, %v112
    %v129 = vpack.c.b16 %v121, %v117
    %v130 = vpack.c.b16 %v122, %v118
    %v131 = vpack.c.b16 %v123, %v119
    %v132 = vpack.c.b16 %v124, %v120
    %vm141 = vcmask 261120
    %v143 = vsel %vm141, %v77, 0
    %v146 = vsel %vm141, %v78, 0
    %v149 = vsel %vm141, %v79, 0
    %v152 = vsel %vm141, %v80, 0
    %v155 = vsel %vm141, %v81, 0
    %v158 = vsel %vm141, %v82, 0
    %v161 = vsel %vm141, %v83, 0
    %v164 = vsel %vm141, %v84, 0
    %v167 = vsel %vm141, %v85, 0
    %v170 = vsel %vm141, %v86, 0
    %v173 = vsel %vm141, %v87, 0
    %v176 = vsel %vm141, %v88, 0
    %v179 = vsel %vm141, %v89, 0
    %v182 = vsel %vm141, %v90, 0
    %v185 = vsel %vm141, %v91, 0
    %v188 = vsel %vm141, %v92, 0
    %190 = vmatprep.subr.bf16.mxu0 %v126
    %191 = vmatpush1.bf16.msra.mxu0 %v125
    %192 = vmatprep.subr.bf16.mxu0 %v130
    %193 = vmatpush1.bf16.msra.mxu0 %v129
    %194 = vmatprep.subr.bf16.mxu0 0
    %195 = vmatpush1.bf16.msra.mxu0 0
    %196 = vmatprep.subr.bf16.mxu0 0
    %197 = vmatpush1.bf16.msra.mxu0 0
    %198 = vmatprep.subr.bf16.mxu0 0
    %199 = vmatpush1.bf16.msra.mxu0 0
    %200 = vmatprep.subr.bf16.mxu0 0
    %201 = vmatpush1.bf16.msra.mxu0 0
    %202 = vmatprep.subr.bf16.mxu0 0
    %203 = vmatpush1.bf16.msra.mxu0 0
    %204 = vmatprep.subr.bf16.mxu0 0
    %205 = vmatpush1.bf16.msra.mxu0 0
    %206 = vmatprep.subr.bf16.mxu0 0
    %207 = vmatpush1.bf16.msra.mxu0 0
    %208 = vmatprep.subr.bf16.mxu0 0
    %209 = vmatpush1.bf16.msra.mxu0 0
    %210 = vmatprep.subr.bf16.mxu0 0
    %211 = vmatpush1.bf16.msra.mxu0 0
    %212 = vmatprep.subr.bf16.mxu0 0
    %213 = vmatpush1.bf16.msra.mxu0 0
    %214 = vmatprep.subr.bf16.mxu0 0
    %215 = vmatpush1.bf16.msra.mxu0 0
    %216 = vmatprep.subr.bf16.mxu0 0
    %217 = vmatpush1.bf16.msra.mxu0 0
    %218 = vmatprep.subr.bf16.mxu0 0
    %219 = vmatpush1.bf16.msra.mxu0 0
    %220 = vmatprep.subr.bf16.mxu0 0
    %221 = vmatpush1.bf16.msra.mxu0 0
    %222 = vmatprep.mubr.bf16.mxu0 0
    %223 = vmatmul.mubr.bf16.gmra.mrb[0].mxu0 %v143
    %v224 = vpop.f32.mrb[0].mxu0
    %v225 = vadd.f32 0.0, %v224
    %v226 = vpop.f32.mrb[0].mxu0
    %v227 = vadd.f32 0.0, %v226
    %v228 = vpop.f32.mrb[0].mxu0
    %v229 = vadd.f32 0.0, %v228
    %v230 = vpop.f32.mrb[0].mxu0
    %v231 = vadd.f32 0.0, %v230
    %232 = vmatprep.mubr.bf16.mxu0 0
    %233 = vmatmul.mubr.bf16.gmra.mrb[0].mxu0 %v146
    %v234 = vpop.f32.mrb[0].mxu0
    %v235 = vadd.f32 0.0, %v234
    %v236 = vpop.f32.mrb[0].mxu0
    %v237 = vadd.f32 0.0, %v236
    %v238 = vpop.f32.mrb[0].mxu0
    %v239 = vadd.f32 0.0, %v238
    %v240 = vpop.f32.mrb[0].mxu0
    %v241 = vadd.f32 0.0, %v240
    %242 = vmatprep.mubr.bf16.mxu0 0
    %243 = vmatmul.mubr.bf16.gmra.mrb[0].mxu0 %v149
    %v244 = vpop.f32.mrb[0].mxu0
    %v245 = vadd.f32 0.0, %v244
    %v246 = vpop.f32.mrb[0].mxu0
    %v247 = vadd.f32 0.0, %v246
    %v248 = vpop.f32.mrb[0].mxu0
    %v249 = vadd.f32 0.0, %v248
    %v250 = vpop.f32.mrb[0].mxu0
    %v251 = vadd.f32 0.0, %v250
    %252 = vmatprep.mubr.bf16.mxu0 0
    %253 = vmatmul.mubr.bf16.gmra.mrb[0].mxu0 %v152
    %v254 = vpop.f32.mrb[0].mxu0
    %v255 = vadd.f32 0.0, %v254
    %v256 = vpop.f32.mrb[0].mxu0
    %v257 = vadd.f32 0.0, %v256
    %v258 = vpop.f32.mrb[0].mxu0
    %v259 = vadd.f32 0.0, %v258
    %v260 = vpop.f32.mrb[0].mxu0
    %v261 = vadd.f32 0.0, %v260
    %262 = vmatprep.mubr.bf16.mxu0 0
    %263 = vmatmul.mubr.bf16.gmra.mrb[0].mxu0 %v155
    %v264 = vpop.f32.mrb[0].mxu0
    %v265 = vadd.f32 0.0, %v264
    %v266 = vpop.f32.mrb[0].mxu0
    %v267 = vadd.f32 0.0, %v266
    %v268 = vpop.f32.mrb[0].mxu0
    %v269 = vadd.f32 0.0, %v268
    %v270 = vpop.f32.mrb[0].mxu0
    %v271 = vadd.f32 0.0, %v270
    %272 = vmatprep.mubr.bf16.mxu0 0
    %273 = vmatmul.mubr.bf16.gmra.mrb[0].mxu0 %v158
    %v274 = vpop.f32.mrb[0].mxu0
    %v275 = vadd.f32 0.0, %v274
    %v276 = vpop.f32.mrb[0].mxu0
    %v277 = vadd.f32 0.0, %v276
    %v278 = vpop.f32.mrb[0].mxu0
    %v279 = vadd.f32 0.0, %v278
    %v280 = vpop.f32.mrb[0].mxu0
    %v281 = vadd.f32 0.0, %v280
    %282 = vmatprep.mubr.bf16.mxu0 0
    %283 = vmatmul.mubr.bf16.gmra.mrb[0].mxu0 %v161
    %v284 = vpop.f32.mrb[0].mxu0
    %v285 = vadd.f32 0.0, %v284
    %v286 = vpop.f32.mrb[0].mxu0
    %v287 = vadd.f32 0.0, %v286
    %v288 = vpop.f32.mrb[0].mxu0
    %v289 = vadd.f32 0.0, %v288
    %v290 = vpop.f32.mrb[0].mxu0
    %v291 = vadd.f32 0.0, %v290
    %292 = vmatprep.mubr.bf16.mxu0 0
    %293 = vmatmul.mubr.bf16.gmra.mrb[0].mxu0 %v164
    %v294 = vpop.f32.mrb[0].mxu0
    %v295 = vadd.f32 0.0, %v294
    %v296 = vpop.f32.mrb[0].mxu0
    %v297 = vadd.f32 0.0, %v296
    %v298 = vpop.f32.mrb[0].mxu0
    %v299 = vadd.f32 0.0, %v298
    %v300 = vpop.f32.mrb[0].mxu0
    %v301 = vadd.f32 0.0, %v300
    %302 = vmatprep.mubr.bf16.mxu0 0
    %303 = vmatmul.mubr.bf16.gmra.mrb[0].mxu0 %v167
    %v304 = vpop.f32.mrb[0].mxu0
    %v305 = vadd.f32 0.0, %v304
    %v306 = vpop.f32.mrb[0].mxu0
    %v307 = vadd.f32 0.0, %v306
    %v308 = vpop.f32.mrb[0].mxu0
    %v309 = vadd.f32 0.0, %v308
    %v310 = vpop.f32.mrb[0].mxu0
    %v311 = vadd.f32 0.0, %v310
    %312 = vmatprep.mubr.bf16.mxu0 0
    %313 = vmatmul.mubr.bf16.gmra.mrb[0].mxu0 %v170
    %v314 = vpop.f32.mrb[0].mxu0
    %v315 = vadd.f32 0.0, %v314
    %v316 = vpop.f32.mrb[0].mxu0
    %v317 = vadd.f32 0.0, %v316
    %v318 = vpop.f32.mrb[0].mxu0
    %v319 = vadd.f32 0.0, %v318
    %v320 = vpop.f32.mrb[0].mxu0
    %v321 = vadd.f32 0.0, %v320
    %322 = vmatprep.mubr.bf16.mxu0 0
    %323 = vmatmul.mubr.bf16.gmra.mrb[0].mxu0 %v173
    %v324 = vpop.f32.mrb[0].mxu0
    %v325 = vadd.f32 0.0, %v324
    %v326 = vpop.f32.mrb[0].mxu0
    %v327 = vadd.f32 0.0, %v326
    %v328 = vpop.f32.mrb[0].mxu0
    %v329 = vadd.f32 0.0, %v328
    %v330 = vpop.f32.mrb[0].mxu0
    %v331 = vadd.f32 0.0, %v330
    %332 = vmatprep.mubr.bf16.mxu0 0
    %333 = vmatmul.mubr.bf16.gmra.mrb[0].mxu0 %v176
    %v334 = vpop.f32.mrb[0].mxu0
    %v335 = vadd.f32 0.0, %v334
    %v336 = vpop.f32.mrb[0].mxu0
    %v337 = vadd.f32 0.0, %v336
    %v338 = vpop.f32.mrb[0].mxu0
    %v339 = vadd.f32 0.0, %v338
    %v340 = vpop.f32.mrb[0].mxu0
    %v341 = vadd.f32 0.0, %v340
    %342 = vmatprep.mubr.bf16.mxu0 0
    %343 = vmatmul.mubr.bf16.gmra.mrb[0].mxu0 %v179
    %v344 = vpop.f32.mrb[0].mxu0
    %v345 = vadd.f32 0.0, %v344
    %v346 = vpop.f32.mrb[0].mxu0
    %v347 = vadd.f32 0.0, %v346
    %v348 = vpop.f32.mrb[0].mxu0
    %v349 = vadd.f32 0.0, %v348
    %v350 = vpop.f32.mrb[0].mxu0
    %v351 = vadd.f32 0.0, %v350
    %352 = vmatprep.mubr.bf16.mxu0 0
    %353 = vmatmul.mubr.bf16.gmra.mrb[0].mxu0 %v182
    %v354 = vpop.f32.mrb[0].mxu0
    %v355 = vadd.f32 0.0, %v354
    %v356 = vpop.f32.mrb[0].mxu0
    %v357 = vadd.f32 0.0, %v356
    %v358 = vpop.f32.mrb[0].mxu0
    %v359 = vadd.f32 0.0, %v358
    %v360 = vpop.f32.mrb[0].mxu0
    %v361 = vadd.f32 0.0, %v360
    %362 = vmatprep.mubr.bf16.mxu0 0
    %363 = vmatmul.mubr.bf16.gmra.mrb[0].mxu0 %v185
    %v364 = vpop.f32.mrb[0].mxu0
    %v365 = vadd.f32 0.0, %v364
    %v366 = vpop.f32.mrb[0].mxu0
    %v367 = vadd.f32 0.0, %v366
    %v368 = vpop.f32.mrb[0].mxu0
    %v369 = vadd.f32 0.0, %v368
    %v370 = vpop.f32.mrb[0].mxu0
    %v371 = vadd.f32 0.0, %v370
    %372 = vmatprep.mubr.bf16.mxu0 0
    %373 = vmatmul.mubr.bf16.gmra.mrb[0].mxu0 %v188
    %v374 = vpop.f32.mrb[0].mxu0
    %v375 = vadd.f32 0.0, %v374
    %v376 = vpop.f32.mrb[0].mxu0
    %v377 = vadd.f32 0.0, %v376
    %v378 = vpop.f32.mrb[0].mxu0
    %v379 = vadd.f32 0.0, %v378
    %v380 = vpop.f32.mrb[0].mxu0
    %v381 = vadd.f32 0.0, %v380
    %382 = vdwg.mxu0
    %383 = vmatprep.subr.bf16.mxu0 %v128
    %384 = vmatpush1.bf16.msra.mxu0 %v127
    %385 = vmatprep.subr.bf16.mxu0 %v132
    %386 = vmatpush1.bf16.msra.mxu0 %v131
    %387 = vmatprep.subr.bf16.mxu0 0
    %388 = vmatpush1.bf16.msra.mxu0 0
    %389 = vmatprep.subr.bf16.mxu0 0
    %390 = vmatpush1.bf16.msra.mxu0 0
    %391 = vmatprep.subr.bf16.mxu0 0
    %392 = vmatpush1.bf16.msra.mxu0 0
    %393 = vmatprep.subr.bf16.mxu0 0
    %394 = vmatpush1.bf16.msra.mxu0 0
    %395 = vmatprep.subr.bf16.mxu0 0
    %396 = vmatpush1.bf16.msra.mxu0 0
    %397 = vmatprep.subr.bf16.mxu0 0
    %398 = vmatpush1.bf16.msra.mxu0 0
    %399 = vmatprep.subr.bf16.mxu0 0
    %400 = vmatpush1.bf16.msra.mxu0 0
    %401 = vmatprep.subr.bf16.mxu0 0
    %402 = vmatpush1.bf16.msra.mxu0 0
    %403 = vmatprep.subr.bf16.mxu0 0
    %404 = vmatpush1.bf16.msra.mxu0 0
    %405 = vmatprep.subr.bf16.mxu0 0
    %406 = vmatpush1.bf16.msra.mxu0 0
    %407 = vmatprep.subr.bf16.mxu0 0
    %408 = vmatpush1.bf16.msra.mxu0 0
    %409 = vmatprep.subr.bf16.mxu0 0
    %410 = vmatpush1.bf16.msra.mxu0 0
    %411 = vmatprep.subr.bf16.mxu0 0
    %412 = vmatpush1.bf16.msra.mxu0 0
    %413 = vmatprep.subr.bf16.mxu0 0
    %414 = vmatpush1.bf16.msra.mxu0 0
    %415 = vmatprep.mubr.bf16.mxu0 0
    %416 = vmatmul.mubr.bf16.gmra.mrb[0].mxu0 %v143
    %v417 = vpop.f32.mrb[0].mxu0
    %v418 = vadd.f32 0.0, %v417
    %v419 = vpop.f32.mrb[0].mxu0
    %v420 = vadd.f32 0.0, %v419
    %v421 = vpop.f32.mrb[0].mxu0
    %v422 = vadd.f32 0.0, %v421
    %v423 = vpop.f32.mrb[0].mxu0
    %v424 = vadd.f32 0.0, %v423
    %425 = vmatprep.mubr.bf16.mxu0 0
    %426 = vmatmul.mubr.bf16.gmra.mrb[0].mxu0 %v146
    %v427 = vpop.f32.mrb[0].mxu0
    %v428 = vadd.f32 0.0, %v427
    %v429 = vpop.f32.mrb[0].mxu0
    %v430 = vadd.f32 0.0, %v429
    %v431 = vpop.f32.mrb[0].mxu0
    %v432 = vadd.f32 0.0, %v431
    %v433 = vpop.f32.mrb[0].mxu0
    %v434 = vadd.f32 0.0, %v433
    %435 = vmatprep.mubr.bf16.mxu0 0
    %436 = vmatmul.mubr.bf16.gmra.mrb[0].mxu0 %v149
    %v437 = vpop.f32.mrb[0].mxu0
    %v438 = vadd.f32 0.0, %v437
    %v439 = vpop.f32.mrb[0].mxu0
    %v440 = vadd.f32 0.0, %v439
    %v441 = vpop.f32.mrb[0].mxu0
    %v442 = vadd.f32 0.0, %v441
    %v443 = vpop.f32.mrb[0].mxu0
    %v444 = vadd.f32 0.0, %v443
    %445 = vmatprep.mubr.bf16.mxu0 0
    %446 = vmatmul.mubr.bf16.gmra.mrb[0].mxu0 %v152
    %v447 = vpop.f32.mrb[0].mxu0
    %v448 = vadd.f32 0.0, %v447
    %v449 = vpop.f32.mrb[0].mxu0
    %v450 = vadd.f32 0.0, %v449
    %v451 = vpop.f32.mrb[0].mxu0
    %v452 = vadd.f32 0.0, %v451
    %v453 = vpop.f32.mrb[0].mxu0
    %v454 = vadd.f32 0.0, %v453
    %455 = vmatprep.mubr.bf16.mxu0 0
    %456 = vmatmul.mubr.bf16.gmra.mrb[0].mxu0 %v155
    %v457 = vpop.f32.mrb[0].mxu0
    %v458 = vadd.f32 0.0, %v457
    %v459 = vpop.f32.mrb[0].mxu0
    %v460 = vadd.f32 0.0, %v459
    %v461 = vpop.f32.mrb[0].mxu0
    %v462 = vadd.f32 0.0, %v461
    %v463 = vpop.f32.mrb[0].mxu0
    %v464 = vadd.f32 0.0, %v463
    %465 = vmatprep.mubr.bf16.mxu0 0
    %466 = vmatmul.mubr.bf16.gmra.mrb[0].mxu0 %v158
    %v467 = vpop.f32.mrb[0].mxu0
    %v468 = vadd.f32 0.0, %v467
    %v469 = vpop.f32.mrb[0].mxu0
    %v470 = vadd.f32 0.0, %v469
    %v471 = vpop.f32.mrb[0].mxu0
    %v472 = vadd.f32 0.0, %v471
    %v473 = vpop.f32.mrb[0].mxu0
    %v474 = vadd.f32 0.0, %v473
    %475 = vmatprep.mubr.bf16.mxu0 0
    %476 = vmatmul.mubr.bf16.gmra.mrb[0].mxu0 %v161
    %v477 = vpop.f32.mrb[0].mxu0
    %v478 = vadd.f32 0.0, %v477
    %v479 = vpop.f32.mrb[0].mxu0
    %v480 = vadd.f32 0.0, %v479
    %v481 = vpop.f32.mrb[0].mxu0
    %v482 = vadd.f32 0.0, %v481
    %v483 = vpop.f32.mrb[0].mxu0
    %v484 = vadd.f32 0.0, %v483
    %485 = vmatprep.mubr.bf16.mxu0 0
    %486 = vmatmul.mubr.bf16.gmra.mrb[0].mxu0 %v164
    %v487 = vpop.f32.mrb[0].mxu0
    %v488 = vadd.f32 0.0, %v487
    %v489 = vpop.f32.mrb[0].mxu0
    %v490 = vadd.f32 0.0, %v489
    %v491 = vpop.f32.mrb[0].mxu0
    %v492 = vadd.f32 0.0, %v491
    %v493 = vpop.f32.mrb[0].mxu0
    %v494 = vadd.f32 0.0, %v493
    %495 = vmatprep.mubr.bf16.mxu0 0
    %496 = vmatmul.mubr.bf16.gmra.mrb[0].mxu0 %v167
    %v497 = vpop.f32.mrb[0].mxu0
    %v498 = vadd.f32 0.0, %v497
    %v499 = vpop.f32.mrb[0].mxu0
    %v500 = vadd.f32 0.0, %v499
    %v501 = vpop.f32.mrb[0].mxu0
    %v502 = vadd.f32 0.0, %v501
    %v503 = vpop.f32.mrb[0].mxu0
    %v504 = vadd.f32 0.0, %v503
    %505 = vmatprep.mubr.bf16.mxu0 0
    %506 = vmatmul.mubr.bf16.gmra.mrb[0].mxu0 %v170
    %v507 = vpop.f32.mrb[0].mxu0
    %v508 = vadd.f32 0.0, %v507
    %v509 = vpop.f32.mrb[0].mxu0
    %v510 = vadd.f32 0.0, %v509
    %v511 = vpop.f32.mrb[0].mxu0
    %v512 = vadd.f32 0.0, %v511
    %v513 = vpop.f32.mrb[0].mxu0
    %v514 = vadd.f32 0.0, %v513
    %515 = vmatprep.mubr.bf16.mxu0 0
    %516 = vmatmul.mubr.bf16.gmra.mrb[0].mxu0 %v173
    %v517 = vpop.f32.mrb[0].mxu0
    %v518 = vadd.f32 0.0, %v517
    %v519 = vpop.f32.mrb[0].mxu0
    %v520 = vadd.f32 0.0, %v519
    %v521 = vpop.f32.mrb[0].mxu0
    %v522 = vadd.f32 0.0, %v521
    %v523 = vpop.f32.mrb[0].mxu0
    %v524 = vadd.f32 0.0, %v523
    %525 = vmatprep.mubr.bf16.mxu0 0
    %526 = vmatmul.mubr.bf16.gmra.mrb[0].mxu0 %v176
    %v527 = vpop.f32.mrb[0].mxu0
    %v528 = vadd.f32 0.0, %v527
    %v529 = vpop.f32.mrb[0].mxu0
    %v530 = vadd.f32 0.0, %v529
    %v531 = vpop.f32.mrb[0].mxu0
    %v532 = vadd.f32 0.0, %v531
    %v533 = vpop.f32.mrb[0].mxu0
    %v534 = vadd.f32 0.0, %v533
    %535 = vmatprep.mubr.bf16.mxu0 0
    %536 = vmatmul.mubr.bf16.gmra.mrb[0].mxu0 %v179
    %v537 = vpop.f32.mrb[0].mxu0
    %v538 = vadd.f32 0.0, %v537
    %v539 = vpop.f32.mrb[0].mxu0
    %v540 = vadd.f32 0.0, %v539
    %v541 = vpop.f32.mrb[0].mxu0
    %v542 = vadd.f32 0.0, %v541
    %v543 = vpop.f32.mrb[0].mxu0
    %v544 = vadd.f32 0.0, %v543
    %545 = vmatprep.mubr.bf16.mxu0 0
    %546 = vmatmul.mubr.bf16.gmra.mrb[0].mxu0 %v182
    %v547 = vpop.f32.mrb[0].mxu0
    %v548 = vadd.f32 0.0, %v547
    %v549 = vpop.f32.mrb[0].mxu0
    %v550 = vadd.f32 0.0, %v549
    %v551 = vpop.f32.mrb[0].mxu0
    %v552 = vadd.f32 0.0, %v551
    %v553 = vpop.f32.mrb[0].mxu0
    %v554 = vadd.f32 0.0, %v553
    %555 = vmatprep.mubr.bf16.mxu0 0
    %556 = vmatmul.mubr.bf16.gmra.mrb[0].mxu0 %v185
    %v557 = vpop.f32.mrb[0].mxu0
    %v558 = vadd.f32 0.0, %v557
    %v559 = vpop.f32.mrb[0].mxu0
    %v560 = vadd.f32 0.0, %v559
    %v561 = vpop.f32.mrb[0].mxu0
    %v562 = vadd.f32 0.0, %v561
    %v563 = vpop.f32.mrb[0].mxu0
    %v564 = vadd.f32 0.0, %v563
    %565 = vmatprep.mubr.bf16.mxu0 0
    %566 = vmatmul.mubr.bf16.gmra.mrb[0].mxu0 %v188
    %v567 = vpop.f32.mrb[0].mxu0
    %v568 = vadd.f32 0.0, %v567
    %v569 = vpop.f32.mrb[0].mxu0
    %v570 = vadd.f32 0.0, %v569
    %v571 = vpop.f32.mrb[0].mxu0
    %v572 = vadd.f32 0.0, %v571
    %v573 = vpop.f32.mrb[0].mxu0
    %v574 = vadd.f32 0.0, %v573
    %575 = vdwg.mxu0
    %v576 = vld [vmem:[%s2] sm:$0xf]
    %v577 = vld [vmem:[%s3] sm:$0xf]
    %v578 = vadd.f32 %v225, %v229
    %v579 = vadd.f32 %v578, %v235
    %v580 = vadd.f32 %v579, %v239
    %v581 = vadd.f32 %v580, %v245
    %v582 = vadd.f32 %v581, %v249
    %v583 = vadd.f32 %v582, %v255
    %v584 = vadd.f32 %v583, %v259
    %v585 = vadd.f32 %v584, %v265
    %v586 = vadd.f32 %v585, %v269
    %v587 = vadd.f32 %v586, %v275
    %v588 = vadd.f32 %v587, %v279
    %v589 = vadd.f32 %v588, %v285
    %v590 = vadd.f32 %v589, %v289
    %v591 = vadd.f32 %v590, %v295
    %v592 = vadd.f32 %v591, %v299
    %v593 = vadd.f32 %v592, %v305
    %v594 = vadd.f32 %v593, %v309
    %v595 = vadd.f32 %v594, %v315
    %v596 = vadd.f32 %v595, %v319
    %v597 = vadd.f32 %v596, %v325
    %v598 = vadd.f32 %v597, %v329
    %v599 = vadd.f32 %v598, %v335
    %v600 = vadd.f32 %v599, %v339
    %v601 = vadd.f32 %v600, %v345
    %v602 = vadd.f32 %v601, %v349
    %v603 = vadd.f32 %v602, %v355
    %v604 = vadd.f32 %v603, %v359
    %v605 = vadd.f32 %v604, %v365
    %v606 = vadd.f32 %v605, %v369
    %v607 = vadd.f32 %v606, %v375
    %v608 = vadd.f32 %v607, %v379
    %v609 = vrot.slane %v608, 4
    %v610 = vadd.f32 %v608, %v609
    %v611 = vrot.slane %v610, 2
    %v612 = vadd.f32 %v610, %v611
    %v613 = vrot.slane %v612, 1
    %v614 = vadd.f32 %v612, %v613
    %v615 = vadd.f32 %v227, %v231
    %v616 = vadd.f32 %v615, %v237
    %v617 = vadd.f32 %v616, %v241
    %v618 = vadd.f32 %v617, %v247
    %v619 = vadd.f32 %v618, %v251
    %v620 = vadd.f32 %v619, %v257
    %v621 = vadd.f32 %v620, %v261
    %v622 = vadd.f32 %v621, %v267
    %v623 = vadd.f32 %v622, %v271
    %v624 = vadd.f32 %v623, %v277
    %v625 = vadd.f32 %v624, %v281
    %v626 = vadd.f32 %v625, %v287
    %v627 = vadd.f32 %v626, %v291
    %v628 = vadd.f32 %v627, %v297
    %v629 = vadd.f32 %v628, %v301
    %v630 = vadd.f32 %v629, %v307
    %v631 = vadd.f32 %v630, %v311
    %v632 = vadd.f32 %v631, %v317
    %v633 = vadd.f32 %v632, %v321
    %v634 = vadd.f32 %v633, %v327
    %v635 = vadd.f32 %v634, %v331
    %v636 = vadd.f32 %v635, %v337
    %v637 = vadd.f32 %v636, %v341
    %v638 = vadd.f32 %v637, %v347
    %v639 = vadd.f32 %v638, %v351
    %v640 = vadd.f32 %v639, %v357
    %v641 = vadd.f32 %v640, %v361
    %v642 = vadd.f32 %v641, %v367
    %v643 = vadd.f32 %v642, %v371
    %v644 = vadd.f32 %v643, %v377
    %v645 = vadd.f32 %v644, %v381
    %v646 = vrot.slane %v645, 4
    %v647 = vadd.f32 %v645, %v646
    %v648 = vrot.slane %v647, 2
    %v649 = vadd.f32 %v647, %v648
    %v650 = vrot.slane %v649, 1
    %v651 = vadd.f32 %v649, %v650
    %v652 = vadd.f32 %v418, %v422
    %v653 = vadd.f32 %v652, %v428
    %v654 = vadd.f32 %v653, %v432
    %v655 = vadd.f32 %v654, %v438
    %v656 = vadd.f32 %v655, %v442
    %v657 = vadd.f32 %v656, %v448
    %v658 = vadd.f32 %v657, %v452
    %v659 = vadd.f32 %v658, %v458
    %v660 = vadd.f32 %v659, %v462
    %v661 = vadd.f32 %v660, %v468
    %v662 = vadd.f32 %v661, %v472
    %v663 = vadd.f32 %v662, %v478
    %v664 = vadd.f32 %v663, %v482
    %v665 = vadd.f32 %v664, %v488
    %v666 = vadd.f32 %v665, %v492
    %v667 = vadd.f32 %v666, %v498
    %v668 = vadd.f32 %v667, %v502
    %v669 = vadd.f32 %v668, %v508
    %v670 = vadd.f32 %v669, %v512
    %v671 = vadd.f32 %v670, %v518
    %v672 = vadd.f32 %v671, %v522
    %v673 = vadd.f32 %v672, %v528
    %v674 = vadd.f32 %v673, %v532
    %v675 = vadd.f32 %v674, %v538
    %v676 = vadd.f32 %v675, %v542
    %v677 = vadd.f32 %v676, %v548
    %v678 = vadd.f32 %v677, %v552
    %v679 = vadd.f32 %v678, %v558
    %v680 = vadd.f32 %v679, %v562
    %v681 = vadd.f32 %v680, %v568
    %v682 = vadd.f32 %v681, %v572
    %v683 = vrot.slane %v682, 4
    %v684 = vadd.f32 %v682, %v683
    %v685 = vrot.slane %v684, 2
    %v686 = vadd.f32 %v684, %v685
    %v687 = vrot.slane %v686, 1
    %v688 = vadd.f32 %v686, %v687
    %v689 = vadd.f32 %v420, %v424
    %v690 = vadd.f32 %v689, %v430
    %v691 = vadd.f32 %v690, %v434
    %v692 = vadd.f32 %v691, %v440
    %v693 = vadd.f32 %v692, %v444
    %v694 = vadd.f32 %v693, %v450
    %v695 = vadd.f32 %v694, %v454
    %v696 = vadd.f32 %v695, %v460
    %v697 = vadd.f32 %v696, %v464
    %v698 = vadd.f32 %v697, %v470
    %v699 = vadd.f32 %v698, %v474
    %v700 = vadd.f32 %v699, %v480
    %v701 = vadd.f32 %v700, %v484
    %v702 = vadd.f32 %v701, %v490
    %v703 = vadd.f32 %v702, %v494
    %v704 = vadd.f32 %v703, %v500
    %v705 = vadd.f32 %v704, %v504
    %v706 = vadd.f32 %v705, %v510
    %v707 = vadd.f32 %v706, %v514
    %v708 = vadd.f32 %v707, %v520
    %v709 = vadd.f32 %v708, %v524
    %v710 = vadd.f32 %v709, %v530
    %v711 = vadd.f32 %v710, %v534
    %v712 = vadd.f32 %v711, %v540
    %v713 = vadd.f32 %v712, %v544
    %v714 = vadd.f32 %v713, %v550
    %v715 = vadd.f32 %v714, %v554
    %v716 = vadd.f32 %v715, %v560
    %v717 = vadd.f32 %v716, %v564
    %v718 = vadd.f32 %v717, %v570
    %v719 = vadd.f32 %v718, %v574
    %v720 = vrot.slane %v719, 4
    %v721 = vadd.f32 %v719, %v720
    %v722 = vrot.slane %v721, 2
    %v723 = vadd.f32 %v721, %v722
    %v724 = vrot.slane %v723, 1
    %v725 = vadd.f32 %v723, %v724
    %v726 = vmul.f32 %v614, 0.00390625
    %v727 = vmul.f32 %v651, 0.00390625
    %v728 = vmul.f32 %v688, 0.00390625
    %v729 = vmul.f32 %v725, 0.00390625
    %v730 = vsub.f32 %v225, %v726
    %v731 = vsub.f32 %v227, %v727
    %v732 = vsub.f32 %v418, %v728
    %v733 = vsub.f32 %v420, %v729
    %v734 = vsub.f32 %v229, %v726
    %v735 = vsub.f32 %v231, %v727
    %v736 = vsub.f32 %v422, %v728
    %v737 = vsub.f32 %v424, %v729
    %v738 = vsub.f32 %v235, %v726
    %v739 = vsub.f32 %v237, %v727
    %v740 = vsub.f32 %v428, %v728
    %v741 = vsub.f32 %v430, %v729
    %v742 = vsub.f32 %v239, %v726
    %v743 = vsub.f32 %v241, %v727
    %v744 = vsub.f32 %v432, %v728
    %v745 = vsub.f32 %v434, %v729
    %v746 = vsub.f32 %v245, %v726
    %v747 = vsub.f32 %v247, %v727
    %v748 = vsub.f32 %v438, %v728
    %v749 = vsub.f32 %v440, %v729
    %v750 = vsub.f32 %v249, %v726
    %v751 = vsub.f32 %v251, %v727
    %v752 = vsub.f32 %v442, %v728
    %v753 = vsub.f32 %v444, %v729
    %v754 = vsub.f32 %v255, %v726
    %v755 = vsub.f32 %v257, %v727
    %v756 = vsub.f32 %v448, %v728
    %v757 = vsub.f32 %v450, %v729
    %v758 = vsub.f32 %v259, %v726
    %v759 = vsub.f32 %v261, %v727
    %v760 = vsub.f32 %v452, %v728
    %v761 = vsub.f32 %v454, %v729
    %v762 = vsub.f32 %v265, %v726
    %v763 = vsub.f32 %v267, %v727
    %v764 = vsub.f32 %v458, %v728
    %v765 = vsub.f32 %v460, %v729
    %v766 = vsub.f32 %v269, %v726
    %v767 = vsub.f32 %v271, %v727
    %v768 = vsub.f32 %v462, %v728
    %v769 = vsub.f32 %v464, %v729
    %v770 = vsub.f32 %v275, %v726
    %v771 = vsub.f32 %v277, %v727
    %v772 = vsub.f32 %v468, %v728
    %v773 = vsub.f32 %v470, %v729
    %v774 = vsub.f32 %v279, %v726
    %v775 = vsub.f32 %v281, %v727
    %v776 = vsub.f32 %v472, %v728
    %v777 = vsub.f32 %v474, %v729
    %v778 = vsub.f32 %v285, %v726
    %v779 = vsub.f32 %v287, %v727
    %v780 = vsub.f32 %v478, %v728
    %v781 = vsub.f32 %v480, %v729
    %v782 = vsub.f32 %v289, %v726
    %v783 = vsub.f32 %v291, %v727
    %v784 = vsub.f32 %v482, %v728
    %v785 = vsub.f32 %v484, %v729
    %v786 = vsub.f32 %v295, %v726
    %v787 = vsub.f32 %v297, %v727
    %v788 = vsub.f32 %v488, %v728
    %v789 = vsub.f32 %v490, %v729
    %v790 = vsub.f32 %v299, %v726
    %v791 = vsub.f32 %v301, %v727
    %v792 = vsub.f32 %v492, %v728
    %v793 = vsub.f32 %v494, %v729
    %v794 = vsub.f32 %v305, %v726
    %v795 = vsub.f32 %v307, %v727
    %v796 = vsub.f32 %v498, %v728
    %v797 = vsub.f32 %v500, %v729
    %v798 = vsub.f32 %v309, %v726
    %v799 = vsub.f32 %v311, %v727
    %v800 = vsub.f32 %v502, %v728
    %v801 = vsub.f32 %v504, %v729
    %v802 = vsub.f32 %v315, %v726
    %v803 = vsub.f32 %v317, %v727
    %v804 = vsub.f32 %v508, %v728
    %v805 = vsub.f32 %v510, %v729
    %v806 = vsub.f32 %v319, %v726
    %v807 = vsub.f32 %v321, %v727
    %v808 = vsub.f32 %v512, %v728
    %v809 = vsub.f32 %v514, %v729
    %v810 = vsub.f32 %v325, %v726
    %v811 = vsub.f32 %v327, %v727
    %v812 = vsub.f32 %v518, %v728
    %v813 = vsub.f32 %v520, %v729
    %v814 = vsub.f32 %v329, %v726
    %v815 = vsub.f32 %v331, %v727
    %v816 = vsub.f32 %v522, %v728
    %v817 = vsub.f32 %v524, %v729
    %v818 = vsub.f32 %v335, %v726
    %v819 = vsub.f32 %v337, %v727
    %v820 = vsub.f32 %v528, %v728
    %v821 = vsub.f32 %v530, %v729
    %v822 = vsub.f32 %v339, %v726
    %v823 = vsub.f32 %v341, %v727
    %v824 = vsub.f32 %v532, %v728
    %v825 = vsub.f32 %v534, %v729
    %v826 = vsub.f32 %v345, %v726
    %v827 = vsub.f32 %v347, %v727
    %v828 = vsub.f32 %v538, %v728
    %v829 = vsub.f32 %v540, %v729
    %v830 = vsub.f32 %v349, %v726
    %v831 = vsub.f32 %v351, %v727
    %v832 = vsub.f32 %v542, %v728
    %v833 = vsub.f32 %v544, %v729
    %v834 = vsub.f32 %v355, %v726
    %v835 = vsub.f32 %v357, %v727
    %v836 = vsub.f32 %v548, %v728
    %v837 = vsub.f32 %v550, %v729
    %v838 = vsub.f32 %v359, %v726
    %v839 = vsub.f32 %v361, %v727
    %v840 = vsub.f32 %v552, %v728
    %v841 = vsub.f32 %v554, %v729
    %v842 = vsub.f32 %v365, %v726
    %v843 = vsub.f32 %v367, %v727
    %v844 = vsub.f32 %v558, %v728
    %v845 = vsub.f32 %v560, %v729
    %v846 = vsub.f32 %v369, %v726
    %v847 = vsub.f32 %v371, %v727
    %v848 = vsub.f32 %v562, %v728
    %v849 = vsub.f32 %v564, %v729
    %v850 = vsub.f32 %v375, %v726
    %v851 = vsub.f32 %v377, %v727
    %v852 = vsub.f32 %v568, %v728
    %v853 = vsub.f32 %v570, %v729
    %v854 = vsub.f32 %v379, %v726
    %v855 = vsub.f32 %v381, %v727
    %v856 = vsub.f32 %v572, %v728
    %v857 = vsub.f32 %v574, %v729
    %v858 = vmul.f32 %v730, %v730
    %v859 = vmul.f32 %v731, %v731
    %v860 = vmul.f32 %v732, %v732
    %v861 = vmul.f32 %v733, %v733
    %v862 = vmul.f32 %v734, %v734
    %v863 = vmul.f32 %v735, %v735
    %v864 = vmul.f32 %v736, %v736
    %v865 = vmul.f32 %v737, %v737
    %v866 = vmul.f32 %v738, %v738
    %v867 = vmul.f32 %v739, %v739
    %v868 = vmul.f32 %v740, %v740
    %v869 = vmul.f32 %v741, %v741
    %v870 = vmul.f32 %v742, %v742
    %v871 = vmul.f32 %v743, %v743
    %v872 = vmul.f32 %v744, %v744
    %v873 = vmul.f32 %v745, %v745
    %v874 = vmul.f32 %v746, %v746
    %v875 = vmul.f32 %v747, %v747
    %v876 = vmul.f32 %v748, %v748
    %v877 = vmul.f32 %v749, %v749
    %v878 = vmul.f32 %v750, %v750
    %v879 = vmul.f32 %v751, %v751
    %v880 = vmul.f32 %v752, %v752
    %v881 = vmul.f32 %v753, %v753
    %v882 = vmul.f32 %v754, %v754
    %v883 = vmul.f32 %v755, %v755
    %v884 = vmul.f32 %v756, %v756
    %v885 = vmul.f32 %v757, %v757
    %v886 = vmul.f32 %v758, %v758
    %v887 = vmul.f32 %v759, %v759
    %v888 = vmul.f32 %v760, %v760
    %v889 = vmul.f32 %v761, %v761
    %v890 = vmul.f32 %v762, %v762
    %v891 = vmul.f32 %v763, %v763
    %v892 = vmul.f32 %v764, %v764
    %v893 = vmul.f32 %v765, %v765
    %v894 = vmul.f32 %v766, %v766
    %v895 = vmul.f32 %v767, %v767
    %v896 = vmul.f32 %v768, %v768
    %v897 = vmul.f32 %v769, %v769
    %v898 = vmul.f32 %v770, %v770
    %v899 = vmul.f32 %v771, %v771
    %v900 = vmul.f32 %v772, %v772
    %v901 = vmul.f32 %v773, %v773
    %v902 = vmul.f32 %v774, %v774
    %v903 = vmul.f32 %v775, %v775
    %v904 = vmul.f32 %v776, %v776
    %v905 = vmul.f32 %v777, %v777
    %v906 = vmul.f32 %v778, %v778
    %v907 = vmul.f32 %v779, %v779
    %v908 = vmul.f32 %v780, %v780
    %v909 = vmul.f32 %v781, %v781
    %v910 = vmul.f32 %v782, %v782
    %v911 = vmul.f32 %v783, %v783
    %v912 = vmul.f32 %v784, %v784
    %v913 = vmul.f32 %v785, %v785
    %v914 = vmul.f32 %v786, %v786
    %v915 = vmul.f32 %v787, %v787
    %v916 = vmul.f32 %v788, %v788
    %v917 = vmul.f32 %v789, %v789
    %v918 = vmul.f32 %v790, %v790
    %v919 = vmul.f32 %v791, %v791
    %v920 = vmul.f32 %v792, %v792
    %v921 = vmul.f32 %v793, %v793
    %v922 = vmul.f32 %v794, %v794
    %v923 = vmul.f32 %v795, %v795
    %v924 = vmul.f32 %v796, %v796
    %v925 = vmul.f32 %v797, %v797
    %v926 = vmul.f32 %v798, %v798
    %v927 = vmul.f32 %v799, %v799
    %v928 = vmul.f32 %v800, %v800
    %v929 = vmul.f32 %v801, %v801
    %v930 = vmul.f32 %v802, %v802
    %v931 = vmul.f32 %v803, %v803
    %v932 = vmul.f32 %v804, %v804
    %v933 = vmul.f32 %v805, %v805
    %v934 = vmul.f32 %v806, %v806
    %v935 = vmul.f32 %v807, %v807
    %v936 = vmul.f32 %v808, %v808
    %v937 = vmul.f32 %v809, %v809
    %v938 = vmul.f32 %v810, %v810
    %v939 = vmul.f32 %v811, %v811
    %v940 = vmul.f32 %v812, %v812
    %v941 = vmul.f32 %v813, %v813
    %v942 = vmul.f32 %v814, %v814
    %v943 = vmul.f32 %v815, %v815
    %v944 = vmul.f32 %v816, %v816
    %v945 = vmul.f32 %v817, %v817
    %v946 = vmul.f32 %v818, %v818
    %v947 = vmul.f32 %v819, %v819
    %v948 = vmul.f32 %v820, %v820
    %v949 = vmul.f32 %v821, %v821
    %v950 = vmul.f32 %v822, %v822
    %v951 = vmul.f32 %v823, %v823
    %v952 = vmul.f32 %v824, %v824
    %v953 = vmul.f32 %v825, %v825
    %v954 = vmul.f32 %v826, %v826
    %v955 = vmul.f32 %v827, %v827
    %v956 = vmul.f32 %v828, %v828
    %v957 = vmul.f32 %v829, %v829
    %v958 = vmul.f32 %v830, %v830
    %v959 = vmul.f32 %v831, %v831
    %v960 = vmul.f32 %v832, %v832
    %v961 = vmul.f32 %v833, %v833
    %v962 = vmul.f32 %v834, %v834
    %v963 = vmul.f32 %v835, %v835
    %v964 = vmul.f32 %v836, %v836
    %v965 = vmul.f32 %v837, %v837
    %v966 = vmul.f32 %v838, %v838
    %v967 = vmul.f32 %v839, %v839
    %v968 = vmul.f32 %v840, %v840
    %v969 = vmul.f32 %v841, %v841
    %v970 = vmul.f32 %v842, %v842
    %v971 = vmul.f32 %v843, %v843
    %v972 = vmul.f32 %v844, %v844
    %v973 = vmul.f32 %v845, %v845
    %v974 = vmul.f32 %v846, %v846
    %v975 = vmul.f32 %v847, %v847
    %v976 = vmul.f32 %v848, %v848
    %v977 = vmul.f32 %v849, %v849
    %v978 = vmul.f32 %v850, %v850
    %v979 = vmul.f32 %v851, %v851
    %v980 = vmul.f32 %v852, %v852
    %v981 = vmul.f32 %v853, %v853
    %v982 = vmul.f32 %v854, %v854
    %v983 = vmul.f32 %v855, %v855
    %v984 = vmul.f32 %v856, %v856
    %v985 = vmul.f32 %v857, %v857
    %v986 = vadd.f32 %v858, %v862
    %v987 = vadd.f32 %v986, %v866
    %v988 = vadd.f32 %v987, %v870
    %v989 = vadd.f32 %v988, %v874
    %v990 = vadd.f32 %v989, %v878
    %v991 = vadd.f32 %v990, %v882
    %v992 = vadd.f32 %v991, %v886
    %v993 = vadd.f32 %v992, %v890
    %v994 = vadd.f32 %v993, %v894
    %v995 = vadd.f32 %v994, %v898
    %v996 = vadd.f32 %v995, %v902
    %v997 = vadd.f32 %v996, %v906
    %v998 = vadd.f32 %v997, %v910
    %v999 = vadd.f32 %v998, %v914
    %v1000 = vadd.f32 %v999, %v918
    %v1001 = vadd.f32 %v1000, %v922
    %v1002 = vadd.f32 %v1001, %v926
    %v1003 = vadd.f32 %v1002, %v930
    %v1004 = vadd.f32 %v1003, %v934
    %v1005 = vadd.f32 %v1004, %v938
    %v1006 = vadd.f32 %v1005, %v942
    %v1007 = vadd.f32 %v1006, %v946
    %v1008 = vadd.f32 %v1007, %v950
    %v1009 = vadd.f32 %v1008, %v954
    %v1010 = vadd.f32 %v1009, %v958
    %v1011 = vadd.f32 %v1010, %v962
    %v1012 = vadd.f32 %v1011, %v966
    %v1013 = vadd.f32 %v1012, %v970
    %v1014 = vadd.f32 %v1013, %v974
    %v1015 = vadd.f32 %v1014, %v978
    %v1016 = vadd.f32 %v1015, %v982
    %v1017 = vrot.slane %v1016, 4
    %v1018 = vadd.f32 %v1016, %v1017
    %v1019 = vrot.slane %v1018, 2
    %v1020 = vadd.f32 %v1018, %v1019
    %v1021 = vrot.slane %v1020, 1
    %v1022 = vadd.f32 %v1020, %v1021
    %v1023 = vadd.f32 %v859, %v863
    %v1024 = vadd.f32 %v1023, %v867
    %v1025 = vadd.f32 %v1024, %v871
    %v1026 = vadd.f32 %v1025, %v875
    %v1027 = vadd.f32 %v1026, %v879
    %v1028 = vadd.f32 %v1027, %v883
    %v1029 = vadd.f32 %v1028, %v887
    %v1030 = vadd.f32 %v1029, %v891
    %v1031 = vadd.f32 %v1030, %v895
    %v1032 = vadd.f32 %v1031, %v899
    %v1033 = vadd.f32 %v1032, %v903
    %v1034 = vadd.f32 %v1033, %v907
    %v1035 = vadd.f32 %v1034, %v911
    %v1036 = vadd.f32 %v1035, %v915
    %v1037 = vadd.f32 %v1036, %v919
    %v1038 = vadd.f32 %v1037, %v923
    %v1039 = vadd.f32 %v1038, %v927
    %v1040 = vadd.f32 %v1039, %v931
    %v1041 = vadd.f32 %v1040, %v935
    %v1042 = vadd.f32 %v1041, %v939
    %v1043 = vadd.f32 %v1042, %v943
    %v1044 = vadd.f32 %v1043, %v947
    %v1045 = vadd.f32 %v1044, %v951
    %v1046 = vadd.f32 %v1045, %v955
    %v1047 = vadd.f32 %v1046, %v959
    %v1048 = vadd.f32 %v1047, %v963
    %v1049 = vadd.f32 %v1048, %v967
    %v1050 = vadd.f32 %v1049, %v971
    %v1051 = vadd.f32 %v1050, %v975
    %v1052 = vadd.f32 %v1051, %v979
    %v1053 = vadd.f32 %v1052, %v983
    %v1054 = vrot.slane %v1053, 4
    %v1055 = vadd.f32 %v1053, %v1054
    %v1056 = vrot.slane %v1055, 2
    %v1057 = vadd.f32 %v1055, %v1056
    %v1058 = vrot.slane %v1057, 1
    %v1059 = vadd.f32 %v1057, %v1058
    %v1060 = vadd.f32 %v860, %v864
    %v1061 = vadd.f32 %v1060, %v868
    %v1062 = vadd.f32 %v1061, %v872
    %v1063 = vadd.f32 %v1062, %v876
    %v1064 = vadd.f32 %v1063, %v880
    %v1065 = vadd.f32 %v1064, %v884
    %v1066 = vadd.f32 %v1065, %v888
    %v1067 = vadd.f32 %v1066, %v892
    %v1068 = vadd.f32 %v1067, %v896
    %v1069 = vadd.f32 %v1068, %v900
    %v1070 = vadd.f32 %v1069, %v904
    %v1071 = vadd.f32 %v1070, %v908
    %v1072 = vadd.f32 %v1071, %v912
    %v1073 = vadd.f32 %v1072, %v916
    %v1074 = vadd.f32 %v1073, %v920
    %v1075 = vadd.f32 %v1074, %v924
    %v1076 = vadd.f32 %v1075, %v928
    %v1077 = vadd.f32 %v1076, %v932
    %v1078 = vadd.f32 %v1077, %v936
    %v1079 = vadd.f32 %v1078, %v940
    %v1080 = vadd.f32 %v1079, %v944
    %v1081 = vadd.f32 %v1080, %v948
    %v1082 = vadd.f32 %v1081, %v952
    %v1083 = vadd.f32 %v1082, %v956
    %v1084 = vadd.f32 %v1083, %v960
    %v1085 = vadd.f32 %v1084, %v964
    %v1086 = vadd.f32 %v1085, %v968
    %v1087 = vadd.f32 %v1086, %v972
    %v1088 = vadd.f32 %v1087, %v976
    %v1089 = vadd.f32 %v1088, %v980
    %v1090 = vadd.f32 %v1089, %v984
    %v1091 = vrot.slane %v1090, 4
    %v1092 = vadd.f32 %v1090, %v1091
    %v1093 = vrot.slane %v1092, 2
    %v1094 = vadd.f32 %v1092, %v1093
    %v1095 = vrot.slane %v1094, 1
    %v1096 = vadd.f32 %v1094, %v1095
    %v1097 = vadd.f32 %v861, %v865
    %v1098 = vadd.f32 %v1097, %v869
    %v1099 = vadd.f32 %v1098, %v873
    %v1100 = vadd.f32 %v1099, %v877
    %v1101 = vadd.f32 %v1100, %v881
    %v1102 = vadd.f32 %v1101, %v885
    %v1103 = vadd.f32 %v1102, %v889
    %v1104 = vadd.f32 %v1103, %v893
    %v1105 = vadd.f32 %v1104, %v897
    %v1106 = vadd.f32 %v1105, %v901
    %v1107 = vadd.f32 %v1106, %v905
    %v1108 = vadd.f32 %v1107, %v909
    %v1109 = vadd.f32 %v1108, %v913
    %v1110 = vadd.f32 %v1109, %v917
    %v1111 = vadd.f32 %v1110, %v921
    %v1112 = vadd.f32 %v1111, %v925
    %v1113 = vadd.f32 %v1112, %v929
    %v1114 = vadd.f32 %v1113, %v933
    %v1115 = vadd.f32 %v1114, %v937
    %v1116 = vadd.f32 %v1115, %v941
    %v1117 = vadd.f32 %v1116, %v945
    %v1118 = vadd.f32 %v1117, %v949
    %v1119 = vadd.f32 %v1118, %v953
    %v1120 = vadd.f32 %v1119, %v957
    %v1121 = vadd.f32 %v1120, %v961
    %v1122 = vadd.f32 %v1121, %v965
    %v1123 = vadd.f32 %v1122, %v969
    %v1124 = vadd.f32 %v1123, %v973
    %v1125 = vadd.f32 %v1124, %v977
    %v1126 = vadd.f32 %v1125, %v981
    %v1127 = vadd.f32 %v1126, %v985
    %v1128 = vrot.slane %v1127, 4
    %v1129 = vadd.f32 %v1127, %v1128
    %v1130 = vrot.slane %v1129, 2
    %v1131 = vadd.f32 %v1129, %v1130
    %v1132 = vrot.slane %v1131, 1
    %v1133 = vadd.f32 %v1131, %v1132
    %v1134 = vmul.f32 %v1022, 0.00390625
    %v1135 = vmul.f32 %v1059, 0.00390625
    %v1136 = vmul.f32 %v1096, 0.00390625
    %v1137 = vmul.f32 %v1133, 0.00390625
    %v1138 = vadd.f32 %v1134, 1e-05
    %v1139 = vadd.f32 %v1135, 1e-05
    %v1140 = vadd.f32 %v1136, 1e-05
    %v1141 = vadd.f32 %v1137, 1e-05
    %v1142 = vrsqrt.pop %v1138
    %v1143 = vrsqrt.pop %v1139
    %v1144 = vrsqrt.pop %v1140
    %v1145 = vrsqrt.pop %v1141
    %v1150 = vcombine.low %v1142, %v1143
    %v1151 = vcombine.low %v1144, %v1145
    %v1153 = vunpack.c.l.s4 1966171168
    %v1154 = vunpack.c.0.s8 %v1153
    %v1155 = vlaneseq
    %v1156 = vshrl.u32 %v1155, 7
    %v1157 = vsub.s32 %v1154, %v1156
    %v1158 = vrot.slane %v1150, %v1157
    %v1160 = vunpack.c.l.s4 1966171168
    %v1161 = vunpack.c.0.s8 %v1160
    %v1162 = vlaneseq
    %v1163 = vshrl.u32 %v1162, 7
    %v1164 = vsub.s32 %v1161, %v1163
    %v1165 = vrot.slane %v1151, %v1164
    %v1166 = vcombine.low %v1158, %v1165
    %v1168 = vunpack.c.l.s4 1966171168
    %v1169 = vunpack.c.0.s8 %v1168
    %v1170 = vlaneseq
    %v1171 = vshrl.u32 %v1170, 7
    %v1172 = vsub.s32 %v1169, %v1171
    %v1173 = vrot.slane %v1166, %v1172
    %v1175 = vmul.f32 %v576, %v1173
    %v1177 = vlaneseq
    %v1178 = vshrl.u32 %v1177, 7
    %v1179 = vsub.s32 0, %v1178
    %v1180 = vrot.slane %v1175, %v1179
    %v1181 = vlaneseq
    %v1182 = vshrl.u32 %v1181, 7
    %v1183 = vsub.s32 1, %v1182
    %v1184 = vrot.slane %v1175, %v1183
    %v1185 = vlaneseq
    %v1186 = vshrl.u32 %v1185, 7
    %v1187 = vsub.s32 2, %v1186
    %v1188 = vrot.slane %v1175, %v1187
    %v1189 = vlaneseq
    %v1190 = vshrl.u32 %v1189, 7
    %v1191 = vsub.s32 3, %v1190
    %v1192 = vrot.slane %v1175, %v1191
    %v1197 = vmul.f32 %v730, %v1180
    %v1198 = vmul.f32 %v731, %v1184
    %v1199 = vmul.f32 %v732, %v1188
    %v1200 = vmul.f32 %v733, %v1192
    %v1201 = vmul.f32 %v734, %v1180
    %v1202 = vmul.f32 %v735, %v1184
    %v1203 = vmul.f32 %v736, %v1188
    %v1204 = vmul.f32 %v737, %v1192
    %v1205 = vmul.f32 %v738, %v1180
    %v1206 = vmul.f32 %v739, %v1184
    %v1207 = vmul.f32 %v740, %v1188
    %v1208 = vmul.f32 %v741, %v1192
    %v1209 = vmul.f32 %v742, %v1180
    %v1210 = vmul.f32 %v743, %v1184
    %v1211 = vmul.f32 %v744, %v1188
    %v1212 = vmul.f32 %v745, %v1192
    %v1213 = vmul.f32 %v746, %v1180
    %v1214 = vmul.f32 %v747, %v1184
    %v1215 = vmul.f32 %v748, %v1188
    %v1216 = vmul.f32 %v749, %v1192
    %v1217 = vmul.f32 %v750, %v1180
    %v1218 = vmul.f32 %v751, %v1184
    %v1219 = vmul.f32 %v752, %v1188
    %v1220 = vmul.f32 %v753, %v1192
    %v1221 = vmul.f32 %v754, %v1180
    %v1222 = vmul.f32 %v755, %v1184
    %v1223 = vmul.f32 %v756, %v1188
    %v1224 = vmul.f32 %v757, %v1192
    %v1225 = vmul.f32 %v758, %v1180
    %v1226 = vmul.f32 %v759, %v1184
    %v1227 = vmul.f32 %v760, %v1188
    %v1228 = vmul.f32 %v761, %v1192
    %v1229 = vmul.f32 %v762, %v1180
    %v1230 = vmul.f32 %v763, %v1184
    %v1231 = vmul.f32 %v764, %v1188
    %v1232 = vmul.f32 %v765, %v1192
    %v1233 = vmul.f32 %v766, %v1180
    %v1234 = vmul.f32 %v767, %v1184
    %v1235 = vmul.f32 %v768, %v1188
    %v1236 = vmul.f32 %v769, %v1192
    %v1237 = vmul.f32 %v770, %v1180
    %v1238 = vmul.f32 %v771, %v1184
    %v1239 = vmul.f32 %v772, %v1188
    %v1240 = vmul.f32 %v773, %v1192
    %v1241 = vmul.f32 %v774, %v1180
    %v1242 = vmul.f32 %v775, %v1184
    %v1243 = vmul.f32 %v776, %v1188
    %v1244 = vmul.f32 %v777, %v1192
    %v1245 = vmul.f32 %v778, %v1180
    %v1246 = vmul.f32 %v779, %v1184
    %v1247 = vmul.f32 %v780, %v1188
    %v1248 = vmul.f32 %v781, %v1192
    %v1249 = vmul.f32 %v782, %v1180
    %v1250 = vmul.f32 %v783, %v1184
    %v1251 = vmul.f32 %v784, %v1188
    %v1252 = vmul.f32 %v785, %v1192
    %v1253 = vmul.f32 %v786, %v1180
    %v1254 = vmul.f32 %v787, %v1184
    %v1255 = vmul.f32 %v788, %v1188
    %v1256 = vmul.f32 %v789, %v1192
    %v1257 = vmul.f32 %v790, %v1180
    %v1258 = vmul.f32 %v791, %v1184
    %v1259 = vmul.f32 %v792, %v1188
    %v1260 = vmul.f32 %v793, %v1192
    %v1261 = vmul.f32 %v794, %v1180
    %v1262 = vmul.f32 %v795, %v1184
    %v1263 = vmul.f32 %v796, %v1188
    %v1264 = vmul.f32 %v797, %v1192
    %v1265 = vmul.f32 %v798, %v1180
    %v1266 = vmul.f32 %v799, %v1184
    %v1267 = vmul.f32 %v800, %v1188
    %v1268 = vmul.f32 %v801, %v1192
    %v1269 = vmul.f32 %v802, %v1180
    %v1270 = vmul.f32 %v803, %v1184
    %v1271 = vmul.f32 %v804, %v1188
    %v1272 = vmul.f32 %v805, %v1192
    %v1273 = vmul.f32 %v806, %v1180
    %v1274 = vmul.f32 %v807, %v1184
    %v1275 = vmul.f32 %v808, %v1188
    %v1276 = vmul.f32 %v809, %v1192
    %v1277 = vmul.f32 %v810, %v1180
    %v1278 = vmul.f32 %v811, %v1184
    %v1279 = vmul.f32 %v812, %v1188
    %v1280 = vmul.f32 %v813, %v1192
    %v1281 = vmul.f32 %v814, %v1180
    %v1282 = vmul.f32 %v815, %v1184
    %v1283 = vmul.f32 %v816, %v1188
    %v1284 = vmul.f32 %v817, %v1192
    %v1285 = vmul.f32 %v818, %v1180
    %v1286 = vmul.f32 %v819, %v1184
    %v1287 = vmul.f32 %v820, %v1188
    %v1288 = vmul.f32 %v821, %v1192
    %v1289 = vmul.f32 %v822, %v1180
    %v1290 = vmul.f32 %v823, %v1184
    %v1291 = vmul.f32 %v824, %v1188
    %v1292 = vmul.f32 %v825, %v1192
    %v1293 = vmul.f32 %v826, %v1180
    %v1294 = vmul.f32 %v827, %v1184
    %v1295 = vmul.f32 %v828, %v1188
    %v1296 = vmul.f32 %v829, %v1192
    %v1297 = vmul.f32 %v830, %v1180
    %v1298 = vmul.f32 %v831, %v1184
    %v1299 = vmul.f32 %v832, %v1188
    %v1300 = vmul.f32 %v833, %v1192
    %v1301 = vmul.f32 %v834, %v1180
    %v1302 = vmul.f32 %v835, %v1184
    %v1303 = vmul.f32 %v836, %v1188
    %v1304 = vmul.f32 %v837, %v1192
    %v1305 = vmul.f32 %v838, %v1180
    %v1306 = vmul.f32 %v839, %v1184
    %v1307 = vmul.f32 %v840, %v1188
    %v1308 = vmul.f32 %v841, %v1192
    %v1309 = vmul.f32 %v842, %v1180
    %v1310 = vmul.f32 %v843, %v1184
    %v1311 = vmul.f32 %v844, %v1188
    %v1312 = vmul.f32 %v845, %v1192
    %v1313 = vmul.f32 %v846, %v1180
    %v1314 = vmul.f32 %v847, %v1184
    %v1315 = vmul.f32 %v848, %v1188
    %v1316 = vmul.f32 %v849, %v1192
    %v1317 = vmul.f32 %v850, %v1180
    %v1318 = vmul.f32 %v851, %v1184
    %v1319 = vmul.f32 %v852, %v1188
    %v1320 = vmul.f32 %v853, %v1192
    %v1321 = vmul.f32 %v854, %v1180
    %v1322 = vmul.f32 %v855, %v1184
    %v1323 = vmul.f32 %v856, %v1188
    %v1324 = vmul.f32 %v857, %v1192
    %v1326 = vlaneseq
    %v1327 = vshrl.u32 %v1326, 7
    %v1328 = vsub.s32 0, %v1327
    %v1329 = vrot.slane %v577, %v1328
    %v1330 = vlaneseq
    %v1331 = vshrl.u32 %v1330, 7
    %v1332 = vsub.s32 1, %v1331
    %v1333 = vrot.slane %v577, %v1332
    %v1334 = vlaneseq
    %v1335 = vshrl.u32 %v1334, 7
    %v1336 = vsub.s32 2, %v1335
    %v1337 = vrot.slane %v577, %v1336
    %v1338 = vlaneseq
    %v1339 = vshrl.u32 %v1338, 7
    %v1340 = vsub.s32 3, %v1339
    %v1341 = vrot.slane %v577, %v1340
    %v1346 = vadd.f32 %v1197, %v1329
    %v1347 = vadd.f32 %v1198, %v1333
    %v1348 = vadd.f32 %v1199, %v1337
    %v1349 = vadd.f32 %v1200, %v1341
    %v1350 = vadd.f32 %v1201, %v1329
    %v1351 = vadd.f32 %v1202, %v1333
    %v1352 = vadd.f32 %v1203, %v1337
    %v1353 = vadd.f32 %v1204, %v1341
    %v1354 = vadd.f32 %v1205, %v1329
    %v1355 = vadd.f32 %v1206, %v1333
    %v1356 = vadd.f32 %v1207, %v1337
    %v1357 = vadd.f32 %v1208, %v1341
    %v1358 = vadd.f32 %v1209, %v1329
    %v1359 = vadd.f32 %v1210, %v1333
    %v1360 = vadd.f32 %v1211, %v1337
    %v1361 = vadd.f32 %v1212, %v1341
    %v1362 = vadd.f32 %v1213, %v1329
    %v1363 = vadd.f32 %v1214, %v1333
    %v1364 = vadd.f32 %v1215, %v1337
    %v1365 = vadd.f32 %v1216, %v1341
    %v1366 = vadd.f32 %v1217, %v1329
    %v1367 = vadd.f32 %v1218, %v1333
    %v1368 = vadd.f32 %v1219, %v1337
    %v1369 = vadd.f32 %v1220, %v1341
    %v1370 = vadd.f32 %v1221, %v1329
    %v1371 = vadd.f32 %v1222, %v1333
    %v1372 = vadd.f32 %v1223, %v1337
    %v1373 = vadd.f32 %v1224, %v1341
    %v1374 = vadd.f32 %v1225, %v1329
    %v1375 = vadd.f32 %v1226, %v1333
    %v1376 = vadd.f32 %v1227, %v1337
    %v1377 = vadd.f32 %v1228, %v1341
    %v1378 = vadd.f32 %v1229, %v1329
    %v1379 = vadd.f32 %v1230, %v1333
    %v1380 = vadd.f32 %v1231, %v1337
    %v1381 = vadd.f32 %v1232, %v1341
    %v1382 = vadd.f32 %v1233, %v1329
    %v1383 = vadd.f32 %v1234, %v1333
    %v1384 = vadd.f32 %v1235, %v1337
    %v1385 = vadd.f32 %v1236, %v1341
    %v1386 = vadd.f32 %v1237, %v1329
    %v1387 = vadd.f32 %v1238, %v1333
    %v1388 = vadd.f32 %v1239, %v1337
    %v1389 = vadd.f32 %v1240, %v1341
    %v1390 = vadd.f32 %v1241, %v1329
    %v1391 = vadd.f32 %v1242, %v1333
    %v1392 = vadd.f32 %v1243, %v1337
    %v1393 = vadd.f32 %v1244, %v1341
    %v1394 = vadd.f32 %v1245, %v1329
    %v1395 = vadd.f32 %v1246, %v1333
    %v1396 = vadd.f32 %v1247, %v1337
    %v1397 = vadd.f32 %v1248, %v1341
    %v1398 = vadd.f32 %v1249, %v1329
    %v1399 = vadd.f32 %v1250, %v1333
    %v1400 = vadd.f32 %v1251, %v1337
    %v1401 = vadd.f32 %v1252, %v1341
    %v1402 = vadd.f32 %v1253, %v1329
    %v1403 = vadd.f32 %v1254, %v1333
    %v1404 = vadd.f32 %v1255, %v1337
    %v1405 = vadd.f32 %v1256, %v1341
    %v1406 = vadd.f32 %v1257, %v1329
    %v1407 = vadd.f32 %v1258, %v1333
    %v1408 = vadd.f32 %v1259, %v1337
    %v1409 = vadd.f32 %v1260, %v1341
    %v1410 = vadd.f32 %v1261, %v1329
    %v1411 = vadd.f32 %v1262, %v1333
    %v1412 = vadd.f32 %v1263, %v1337
    %v1413 = vadd.f32 %v1264, %v1341
    %v1414 = vadd.f32 %v1265, %v1329
    %v1415 = vadd.f32 %v1266, %v1333
    %v1416 = vadd.f32 %v1267, %v1337
    %v1417 = vadd.f32 %v1268, %v1341
    %v1418 = vadd.f32 %v1269, %v1329
    %v1419 = vadd.f32 %v1270, %v1333
    %v1420 = vadd.f32 %v1271, %v1337
    %v1421 = vadd.f32 %v1272, %v1341
    %v1422 = vadd.f32 %v1273, %v1329
    %v1423 = vadd.f32 %v1274, %v1333
    %v1424 = vadd.f32 %v1275, %v1337
    %v1425 = vadd.f32 %v1276, %v1341
    %v1426 = vadd.f32 %v1277, %v1329
    %v1427 = vadd.f32 %v1278, %v1333
    %v1428 = vadd.f32 %v1279, %v1337
    %v1429 = vadd.f32 %v1280, %v1341
    %v1430 = vadd.f32 %v1281, %v1329
    %v1431 = vadd.f32 %v1282, %v1333
    %v1432 = vadd.f32 %v1283, %v1337
    %v1433 = vadd.f32 %v1284, %v1341
    %v1434 = vadd.f32 %v1285, %v1329
    %v1435 = vadd.f32 %v1286, %v1333
    %v1436 = vadd.f32 %v1287, %v1337
    %v1437 = vadd.f32 %v1288, %v1341
    %v1438 = vadd.f32 %v1289, %v1329
    %v1439 = vadd.f32 %v1290, %v1333
    %v1440 = vadd.f32 %v1291, %v1337
    %v1441 = vadd.f32 %v1292, %v1341
    %v1442 = vadd.f32 %v1293, %v1329
    %v1443 = vadd.f32 %v1294, %v1333
    %v1444 = vadd.f32 %v1295, %v1337
    %v1445 = vadd.f32 %v1296, %v1341
    %v1446 = vadd.f32 %v1297, %v1329
    %v1447 = vadd.f32 %v1298, %v1333
    %v1448 = vadd.f32 %v1299, %v1337
    %v1449 = vadd.f32 %v1300, %v1341
    %v1450 = vadd.f32 %v1301, %v1329
    %v1451 = vadd.f32 %v1302, %v1333
    %v1452 = vadd.f32 %v1303, %v1337
    %v1453 = vadd.f32 %v1304, %v1341
    %v1454 = vadd.f32 %v1305, %v1329
    %v1455 = vadd.f32 %v1306, %v1333
    %v1456 = vadd.f32 %v1307, %v1337
    %v1457 = vadd.f32 %v1308, %v1341
    %v1458 = vadd.f32 %v1309, %v1329
    %v1459 = vadd.f32 %v1310, %v1333
    %v1460 = vadd.f32 %v1311, %v1337
    %v1461 = vadd.f32 %v1312, %v1341
    %v1462 = vadd.f32 %v1313, %v1329
    %v1463 = vadd.f32 %v1314, %v1333
    %v1464 = vadd.f32 %v1315, %v1337
    %v1465 = vadd.f32 %v1316, %v1341
    %v1466 = vadd.f32 %v1317, %v1329
    %v1467 = vadd.f32 %v1318, %v1333
    %v1468 = vadd.f32 %v1319, %v1337
    %v1469 = vadd.f32 %v1320, %v1341
    %v1470 = vadd.f32 %v1321, %v1329
    %v1471 = vadd.f32 %v1322, %v1333
    %v1472 = vadd.f32 %v1323, %v1337
    %v1473 = vadd.f32 %v1324, %v1341
    %v1474 = vmax.f32 %v1346, 0.0
    %v1475 = vmax.f32 %v1347, 0.0
    %v1476 = vmax.f32 %v1348, 0.0
    %v1477 = vmax.f32 %v1349, 0.0
    %v1478 = vmax.f32 %v1350, 0.0
    %v1479 = vmax.f32 %v1351, 0.0
    %v1480 = vmax.f32 %v1352, 0.0
    %v1481 = vmax.f32 %v1353, 0.0
    %v1482 = vmax.f32 %v1354, 0.0
    %v1483 = vmax.f32 %v1355, 0.0
    %v1484 = vmax.f32 %v1356, 0.0
    %v1485 = vmax.f32 %v1357, 0.0
    %v1486 = vmax.f32 %v1358, 0.0
    %v1487 = vmax.f32 %v1359, 0.0
    %v1488 = vmax.f32 %v1360, 0.0
    %v1489 = vmax.f32 %v1361, 0.0
    %v1490 = vmax.f32 %v1362, 0.0
    %v1491 = vmax.f32 %v1363, 0.0
    %v1492 = vmax.f32 %v1364, 0.0
    %v1493 = vmax.f32 %v1365, 0.0
    %v1494 = vmax.f32 %v1366, 0.0
    %v1495 = vmax.f32 %v1367, 0.0
    %v1496 = vmax.f32 %v1368, 0.0
    %v1497 = vmax.f32 %v1369, 0.0
    %v1498 = vmax.f32 %v1370, 0.0
    %v1499 = vmax.f32 %v1371, 0.0
    %v1500 = vmax.f32 %v1372, 0.0
    %v1501 = vmax.f32 %v1373, 0.0
    %v1502 = vmax.f32 %v1374, 0.0
    %v1503 = vmax.f32 %v1375, 0.0
    %v1504 = vmax.f32 %v1376, 0.0
    %v1505 = vmax.f32 %v1377, 0.0
    %v1506 = vmax.f32 %v1378, 0.0
    %v1507 = vmax.f32 %v1379, 0.0
    %v1508 = vmax.f32 %v1380, 0.0
    %v1509 = vmax.f32 %v1381, 0.0
    %v1510 = vmax.f32 %v1382, 0.0
    %v1511 = vmax.f32 %v1383, 0.0
    %v1512 = vmax.f32 %v1384, 0.0
    %v1513 = vmax.f32 %v1385, 0.0
    %v1514 = vmax.f32 %v1386, 0.0
    %v1515 = vmax.f32 %v1387, 0.0
    %v1516 = vmax.f32 %v1388, 0.0
    %v1517 = vmax.f32 %v1389, 0.0
    %v1518 = vmax.f32 %v1390, 0.0
    %v1519 = vmax.f32 %v1391, 0.0
    %v1520 = vmax.f32 %v1392, 0.0
    %v1521 = vmax.f32 %v1393, 0.0
    %v1522 = vmax.f32 %v1394, 0.0
    %v1523 = vmax.f32 %v1395, 0.0
    %v1524 = vmax.f32 %v1396, 0.0
    %v1525 = vmax.f32 %v1397, 0.0
    %v1526 = vmax.f32 %v1398, 0.0
    %v1527 = vmax.f32 %v1399, 0.0
    %v1528 = vmax.f32 %v1400, 0.0
    %v1529 = vmax.f32 %v1401, 0.0
    %v1530 = vmax.f32 %v1402, 0.0
    %v1531 = vmax.f32 %v1403, 0.0
    %v1532 = vmax.f32 %v1404, 0.0
    %v1533 = vmax.f32 %v1405, 0.0
    %v1534 = vmax.f32 %v1406, 0.0
    %v1535 = vmax.f32 %v1407, 0.0
    %v1536 = vmax.f32 %v1408, 0.0
    %v1537 = vmax.f32 %v1409, 0.0
    %v1538 = vmax.f32 %v1410, 0.0
    %v1539 = vmax.f32 %v1411, 0.0
    %v1540 = vmax.f32 %v1412, 0.0
    %v1541 = vmax.f32 %v1413, 0.0
    %v1542 = vmax.f32 %v1414, 0.0
    %v1543 = vmax.f32 %v1415, 0.0
    %v1544 = vmax.f32 %v1416, 0.0
    %v1545 = vmax.f32 %v1417, 0.0
    %v1546 = vmax.f32 %v1418, 0.0
    %v1547 = vmax.f32 %v1419, 0.0
    %v1548 = vmax.f32 %v1420, 0.0
    %v1549 = vmax.f32 %v1421, 0.0
    %v1550 = vmax.f32 %v1422, 0.0
    %v1551 = vmax.f32 %v1423, 0.0
    %v1552 = vmax.f32 %v1424, 0.0
    %v1553 = vmax.f32 %v1425, 0.0
    %v1554 = vmax.f32 %v1426, 0.0
    %v1555 = vmax.f32 %v1427, 0.0
    %v1556 = vmax.f32 %v1428, 0.0
    %v1557 = vmax.f32 %v1429, 0.0
    %v1558 = vmax.f32 %v1430, 0.0
    %v1559 = vmax.f32 %v1431, 0.0
    %v1560 = vmax.f32 %v1432, 0.0
    %v1561 = vmax.f32 %v1433, 0.0
    %v1562 = vmax.f32 %v1434, 0.0
    %v1563 = vmax.f32 %v1435, 0.0
    %v1564 = vmax.f32 %v1436, 0.0
    %v1565 = vmax.f32 %v1437, 0.0
    %v1566 = vmax.f32 %v1438, 0.0
    %v1567 = vmax.f32 %v1439, 0.0
    %v1568 = vmax.f32 %v1440, 0.0
    %v1569 = vmax.f32 %v1441, 0.0
    %v1570 = vmax.f32 %v1442, 0.0
    %v1571 = vmax.f32 %v1443, 0.0
    %v1572 = vmax.f32 %v1444, 0.0
    %v1573 = vmax.f32 %v1445, 0.0
    %v1574 = vmax.f32 %v1446, 0.0
    %v1575 = vmax.f32 %v1447, 0.0
    %v1576 = vmax.f32 %v1448, 0.0
    %v1577 = vmax.f32 %v1449, 0.0
    %v1578 = vmax.f32 %v1450, 0.0
    %v1579 = vmax.f32 %v1451, 0.0
    %v1580 = vmax.f32 %v1452, 0.0
    %v1581 = vmax.f32 %v1453, 0.0
    %v1582 = vmax.f32 %v1454, 0.0
    %v1583 = vmax.f32 %v1455, 0.0
    %v1584 = vmax.f32 %v1456, 0.0
    %v1585 = vmax.f32 %v1457, 0.0
    %v1586 = vmax.f32 %v1458, 0.0
    %v1587 = vmax.f32 %v1459, 0.0
    %v1588 = vmax.f32 %v1460, 0.0
    %v1589 = vmax.f32 %v1461, 0.0
    %v1590 = vmax.f32 %v1462, 0.0
    %v1591 = vmax.f32 %v1463, 0.0
    %v1592 = vmax.f32 %v1464, 0.0
    %v1593 = vmax.f32 %v1465, 0.0
    %v1594 = vmax.f32 %v1466, 0.0
    %v1595 = vmax.f32 %v1467, 0.0
    %v1596 = vmax.f32 %v1468, 0.0
    %v1597 = vmax.f32 %v1469, 0.0
    %v1598 = vmax.f32 %v1470, 0.0
    %v1599 = vmax.f32 %v1471, 0.0
    %v1600 = vmax.f32 %v1472, 0.0
    %v1601 = vmax.f32 %v1473, 0.0
    %v1602 = vpack.c.bf16 %v1478, %v1474
    %v1603 = vpack.c.bf16 %v1479, %v1475
    %v1604 = vpack.c.bf16 %v1480, %v1476
    %v1605 = vpack.c.bf16 %v1481, %v1477
    %v1606 = vpack.c.bf16 %v1486, %v1482
    %v1607 = vpack.c.bf16 %v1487, %v1483
    %v1608 = vpack.c.bf16 %v1488, %v1484
    %v1609 = vpack.c.bf16 %v1489, %v1485
    %v1610 = vpack.c.bf16 %v1494, %v1490
    %v1611 = vpack.c.bf16 %v1495, %v1491
    %v1612 = vpack.c.bf16 %v1496, %v1492
    %v1613 = vpack.c.bf16 %v1497, %v1493
    %v1614 = vpack.c.bf16 %v1502, %v1498
    %v1615 = vpack.c.bf16 %v1503, %v1499
    %v1616 = vpack.c.bf16 %v1504, %v1500
    %v1617 = vpack.c.bf16 %v1505, %v1501
    %v1618 = vpack.c.bf16 %v1510, %v1506
    %v1619 = vpack.c.bf16 %v1511, %v1507
    %v1620 = vpack.c.bf16 %v1512, %v1508
    %v1621 = vpack.c.bf16 %v1513, %v1509
    %v1622 = vpack.c.bf16 %v1518, %v1514
    %v1623 = vpack.c.bf16 %v1519, %v1515
    %v1624 = vpack.c.bf16 %v1520, %v1516
    %v1625 = vpack.c.bf16 %v1521, %v1517
    %v1626 = vpack.c.bf16 %v1526, %v1522
    %v1627 = vpack.c.bf16 %v1527, %v1523
    %v1628 = vpack.c.bf16 %v1528, %v1524
    %v1629 = vpack.c.bf16 %v1529, %v1525
    %v1630 = vpack.c.bf16 %v1534, %v1530
    %v1631 = vpack.c.bf16 %v1535, %v1531
    %v1632 = vpack.c.bf16 %v1536, %v1532
    %v1633 = vpack.c.bf16 %v1537, %v1533
    %v1634 = vpack.c.bf16 %v1542, %v1538
    %v1635 = vpack.c.bf16 %v1543, %v1539
    %v1636 = vpack.c.bf16 %v1544, %v1540
    %v1637 = vpack.c.bf16 %v1545, %v1541
    %v1638 = vpack.c.bf16 %v1550, %v1546
    %v1639 = vpack.c.bf16 %v1551, %v1547
    %v1640 = vpack.c.bf16 %v1552, %v1548
    %v1641 = vpack.c.bf16 %v1553, %v1549
    %v1642 = vpack.c.bf16 %v1558, %v1554
    %v1643 = vpack.c.bf16 %v1559, %v1555
    %v1644 = vpack.c.bf16 %v1560, %v1556
    %v1645 = vpack.c.bf16 %v1561, %v1557
    %v1646 = vpack.c.bf16 %v1566, %v1562
    %v1647 = vpack.c.bf16 %v1567, %v1563
    %v1648 = vpack.c.bf16 %v1568, %v1564
    %v1649 = vpack.c.bf16 %v1569, %v1565
    %v1650 = vpack.c.bf16 %v1574, %v1570
    %v1651 = vpack.c.bf16 %v1575, %v1571
    %v1652 = vpack.c.bf16 %v1576, %v1572
    %v1653 = vpack.c.bf16 %v1577, %v1573
    %v1654 = vpack.c.bf16 %v1582, %v1578
    %v1655 = vpack.c.bf16 %v1583, %v1579
    %v1656 = vpack.c.bf16 %v1584, %v1580
    %v1657 = vpack.c.bf16 %v1585, %v1581
    %v1658 = vpack.c.bf16 %v1590, %v1586
    %v1659 = vpack.c.bf16 %v1591, %v1587
    %v1660 = vpack.c.bf16 %v1592, %v1588
    %v1661 = vpack.c.bf16 %v1593, %v1589
    %v1662 = vpack.c.bf16 %v1598, %v1594
    %v1663 = vpack.c.bf16 %v1599, %v1595
    %v1664 = vpack.c.bf16 %v1600, %v1596
    %v1665 = vpack.c.bf16 %v1601, %v1597
    %v1666 = vld [vmem:[#allocation2] sm:$0xff]
    %v1667 = vld [vmem:[#allocation2 + $0x8] sm:$0xff]
    %v1668 = vld [vmem:[#allocation2 + $0x10] sm:$0xff]
    %v1669 = vld [vmem:[#allocation2 + $0x18] sm:$0xff]
    %v1670 = vld [vmem:[#allocation2 + $0x20] sm:$0xff]
    %v1671 = vld [vmem:[#allocation2 + $0x28] sm:$0xff]
    %v1672 = vld [vmem:[#allocation2 + $0x30] sm:$0xff]
    %v1673 = vld [vmem:[#allocation2 + $0x38] sm:$0xff]
    %v1674 = vld [vmem:[#allocation2 + $0x40] sm:$0xff]
    %v1675 = vld [vmem:[#allocation2 + $0x48] sm:$0xff]
    %v1676 = vld [vmem:[#allocation2 + $0x50] sm:$0xff]
    %v1677 = vld [vmem:[#allocation2 + $0x58] sm:$0xff]
    %v1678 = vld [vmem:[#allocation2 + $0x60] sm:$0xff]
    %v1679 = vld [vmem:[#allocation2 + $0x68] sm:$0xff]
    %v1680 = vld [vmem:[#allocation2 + $0x70] sm:$0xff]
    %v1681 = vld [vmem:[#allocation2 + $0x78] sm:$0xff]
    %v1682 = vld [vmem:[#allocation2 + $0x80] sm:$0xff]
    %v1683 = vld [vmem:[#allocation2 + $0x88] sm:$0xff]
    %v1684 = vld [vmem:[#allocation2 + $0x90] sm:$0xff]
    %v1685 = vld [vmem:[#allocation2 + $0x98] sm:$0xff]
    %v1686 = vld [vmem:[#allocation2 + $0xa0] sm:$0xff]
    %v1687 = vld [vmem:[#allocation2 + $0xa8] sm:$0xff]
    %v1688 = vld [vmem:[#allocation2 + $0xb0] sm:$0xff]
    %v1689 = vld [vmem:[#allocation2 + $0xb8] sm:$0xff]
    %v1690 = vld [vmem:[#allocation2 + $0xc0] sm:$0xff]
    %v1691 = vld [vmem:[#allocation2 + $0xc8] sm:$0xff]
    %v1692 = vld [vmem:[#allocation2 + $0xd0] sm:$0xff]
    %v1693 = vld [vmem:[#allocation2 + $0xd8] sm:$0xff]
    %v1694 = vld [vmem:[#allocation2 + $0xe0] sm:$0xff]
    %v1695 = vld [vmem:[#allocation2 + $0xe8] sm:$0xff]
    %v1696 = vld [vmem:[#allocation2 + $0xf0] sm:$0xff]
    %v1697 = vld [vmem:[#allocation2 + $0xf8] sm:$0xff]
    %v1698 = vld [vmem:[#allocation2 + $0x100] sm:$0xff]
    %v1699 = vld [vmem:[#allocation2 + $0x108] sm:$0xff]
    %v1700 = vld [vmem:[#allocation2 + $0x110] sm:$0xff]
    %v1701 = vld [vmem:[#allocation2 + $0x118] sm:$0xff]
    %v1702 = vld [vmem:[#allocation2 + $0x120] sm:$0xff]
    %v1703 = vld [vmem:[#allocation2 + $0x128] sm:$0xff]
    %v1704 = vld [vmem:[#allocation2 + $0x130] sm:$0xff]
    %v1705 = vld [vmem:[#allocation2 + $0x138] sm:$0xff]
    %v1706 = vld [vmem:[#allocation2 + $0x140] sm:$0xff]
    %v1707 = vld [vmem:[#allocation2 + $0x148] sm:$0xff]
    %v1708 = vld [vmem:[#allocation2 + $0x150] sm:$0xff]
    %v1709 = vld [vmem:[#allocation2 + $0x158] sm:$0xff]
    %v1710 = vld [vmem:[#allocation2 + $0x160] sm:$0xff]
    %v1711 = vld [vmem:[#allocation2 + $0x168] sm:$0xff]
    %v1712 = vld [vmem:[#allocation2 + $0x170] sm:$0xff]
    %v1713 = vld [vmem:[#allocation2 + $0x178] sm:$0xff]
    %v1714 = vld [vmem:[#allocation2 + $0x180] sm:$0xff]
    %v1715 = vld [vmem:[#allocation2 + $0x188] sm:$0xff]
    %v1716 = vld [vmem:[#allocation2 + $0x190] sm:$0xff]
    %v1717 = vld [vmem:[#allocation2 + $0x198] sm:$0xff]
    %v1718 = vld [vmem:[#allocation2 + $0x1a0] sm:$0xff]
    %v1719 = vld [vmem:[#allocation2 + $0x1a8] sm:$0xff]
    %v1720 = vld [vmem:[#allocation2 + $0x1b0] sm:$0xff]
    %v1721 = vld [vmem:[#allocation2 + $0x1b8] sm:$0xff]
    %v1722 = vld [vmem:[#allocation2 + $0x1c0] sm:$0xff]
    %v1723 = vld [vmem:[#allocation2 + $0x1c8] sm:$0xff]
    %v1724 = vld [vmem:[#allocation2 + $0x1d0] sm:$0xff]
    %v1725 = vld [vmem:[#allocation2 + $0x1d8] sm:$0xff]
    %v1726 = vld [vmem:[#allocation2 + $0x1e0] sm:$0xff]
    %v1727 = vld [vmem:[#allocation2 + $0x1e8] sm:$0xff]
    %v1728 = vld [vmem:[#allocation2 + $0x1f0] sm:$0xff]
    %v1729 = vld [vmem:[#allocation2 + $0x1f8] sm:$0xff]
    %v1730 = vld [vmem:[#allocation2 + $0x200] sm:$0xff]
    %v1731 = vld [vmem:[#allocation2 + $0x208] sm:$0xff]
    %v1732 = vld [vmem:[#allocation2 + $0x210] sm:$0xff]
    %v1733 = vld [vmem:[#allocation2 + $0x218] sm:$0xff]
    %v1734 = vld [vmem:[#allocation2 + $0x220] sm:$0xff]
    %v1735 = vld [vmem:[#allocation2 + $0x228] sm:$0xff]
    %v1736 = vld [vmem:[#allocation2 + $0x230] sm:$0xff]
    %v1737 = vld [vmem:[#allocation2 + $0x238] sm:$0xff]
    %v1738 = vld [vmem:[#allocation2 + $0x240] sm:$0xff]
    %v1739 = vld [vmem:[#allocation2 + $0x248] sm:$0xff]
    %v1740 = vld [vmem:[#allocation2 + $0x250] sm:$0xff]
    %v1741 = vld [vmem:[#allocation2 + $0x258] sm:$0xff]
    %v1742 = vld [vmem:[#allocation2 + $0x260] sm:$0xff]
    %v1743 = vld [vmem:[#allocation2 + $0x268] sm:$0xff]
    %v1744 = vld [vmem:[#allocation2 + $0x270] sm:$0xff]
    %v1745 = vld [vmem:[#allocation2 + $0x278] sm:$0xff]
    %v1746 = vld [vmem:[#allocation2 + $0x280] sm:$0xff]
    %v1747 = vld [vmem:[#allocation2 + $0x288] sm:$0xff]
    %v1748 = vld [vmem:[#allocation2 + $0x290] sm:$0xff]
    %v1749 = vld [vmem:[#allocation2 + $0x298] sm:$0xff]
    %v1750 = vld [vmem:[#allocation2 + $0x2a0] sm:$0xff]
    %v1751 = vld [vmem:[#allocation2 + $0x2a8] sm:$0xff]
    %v1752 = vld [vmem:[#allocation2 + $0x2b0] sm:$0xff]
    %v1753 = vld [vmem:[#allocation2 + $0x2b8] sm:$0xff]
    %v1754 = vld [vmem:[#allocation2 + $0x2c0] sm:$0xff]
    %v1755 = vld [vmem:[#allocation2 + $0x2c8] sm:$0xff]
    %v1756 = vld [vmem:[#allocation2 + $0x2d0] sm:$0xff]
    %v1757 = vld [vmem:[#allocation2 + $0x2d8] sm:$0xff]
    %v1758 = vld [vmem:[#allocation2 + $0x2e0] sm:$0xff]
    %v1759 = vld [vmem:[#allocation2 + $0x2e8] sm:$0xff]
    %v1760 = vld [vmem:[#allocation2 + $0x2f0] sm:$0xff]
    %v1761 = vld [vmem:[#allocation2 + $0x2f8] sm:$0xff]
    %v1762 = vld [vmem:[#allocation2 + $0x300] sm:$0xff]
    %v1763 = vld [vmem:[#allocation2 + $0x308] sm:$0xff]
    %v1764 = vld [vmem:[#allocation2 + $0x310] sm:$0xff]
    %v1765 = vld [vmem:[#allocation2 + $0x318] sm:$0xff]
    %v1766 = vld [vmem:[#allocation2 + $0x320] sm:$0xff]
    %v1767 = vld [vmem:[#allocation2 + $0x328] sm:$0xff]
    %v1768 = vld [vmem:[#allocation2 + $0x330] sm:$0xff]
    %v1769 = vld [vmem:[#allocation2 + $0x338] sm:$0xff]
    %v1770 = vld [vmem:[#allocation2 + $0x340] sm:$0xff]
    %v1771 = vld [vmem:[#allocation2 + $0x348] sm:$0xff]
    %v1772 = vld [vmem:[#allocation2 + $0x350] sm:$0xff]
    %v1773 = vld [vmem:[#allocation2 + $0x358] sm:$0xff]
    %v1774 = vld [vmem:[#allocation2 + $0x360] sm:$0xff]
    %v1775 = vld [vmem:[#allocation2 + $0x368] sm:$0xff]
    %v1776 = vld [vmem:[#allocation2 + $0x370] sm:$0xff]
    %v1777 = vld [vmem:[#allocation2 + $0x378] sm:$0xff]
    %v1778 = vld [vmem:[#allocation2 + $0x380] sm:$0xff]
    %v1779 = vld [vmem:[#allocation2 + $0x388] sm:$0xff]
    %v1780 = vld [vmem:[#allocation2 + $0x390] sm:$0xff]
    %v1781 = vld [vmem:[#allocation2 + $0x398] sm:$0xff]
    %v1782 = vld [vmem:[#allocation2 + $0x3a0] sm:$0xff]
    %v1783 = vld [vmem:[#allocation2 + $0x3a8] sm:$0xff]
    %v1784 = vld [vmem:[#allocation2 + $0x3b0] sm:$0xff]
    %v1785 = vld [vmem:[#allocation2 + $0x3b8] sm:$0xff]
    %v1786 = vld [vmem:[#allocation2 + $0x3c0] sm:$0xff]
    %v1787 = vld [vmem:[#allocation2 + $0x3c8] sm:$0xff]
    %v1788 = vld [vmem:[#allocation2 + $0x3d0] sm:$0xff]
    %v1789 = vld [vmem:[#allocation2 + $0x3d8] sm:$0xff]
    %v1790 = vld [vmem:[#allocation2 + $0x3e0] sm:$0xff]
    %v1791 = vld [vmem:[#allocation2 + $0x3e8] sm:$0xff]
    %v1792 = vld [vmem:[#allocation2 + $0x3f0] sm:$0xff]
    %v1793 = vld [vmem:[#allocation2 + $0x3f8] sm:$0xff]
    %v1922 = vunpack.c.l.b16 %v1666
    %v1923 = vunpack.c.h.b16 %v1666
    %v1924 = vunpack.c.l.b16 %v1667
    %v1925 = vunpack.c.h.b16 %v1667
    %v1926 = vunpack.c.l.b16 %v1668
    %v1927 = vunpack.c.h.b16 %v1668
    %v1928 = vunpack.c.l.b16 %v1669
    %v1929 = vunpack.c.h.b16 %v1669
    %v1930 = vunpack.c.l.b16 %v1670
    %v1931 = vunpack.c.h.b16 %v1670
    %v1932 = vunpack.c.l.b16 %v1671
    %v1933 = vunpack.c.h.b16 %v1671
    %v1934 = vunpack.c.l.b16 %v1672
    %v1935 = vunpack.c.h.b16 %v1672
    %v1936 = vunpack.c.l.b16 %v1673
    %v1937 = vunpack.c.h.b16 %v1673
    %v1938 = vunpack.c.l.b16 %v1674
    %v1939 = vunpack.c.h.b16 %v1674
    %v1940 = vunpack.c.l.b16 %v1675
    %v1941 = vunpack.c.h.b16 %v1675
    %v1942 = vunpack.c.l.b16 %v1676
    %v1943 = vunpack.c.h.b16 %v1676
    %v1944 = vunpack.c.l.b16 %v1677
    %v1945 = vunpack.c.h.b16 %v1677
    %v1946 = vunpack.c.l.b16 %v1678
    %v1947 = vunpack.c.h.b16 %v1678
    %v1948 = vunpack.c.l.b16 %v1679
    %v1949 = vunpack.c.h.b16 %v1679
    %v1950 = vunpack.c.l.b16 %v1680
    %v1951 = vunpack.c.h.b16 %v1680
    %v1952 = vunpack.c.l.b16 %v1681
    %v1953 = vunpack.c.h.b16 %v1681
    %v1954 = vunpack.c.l.b16 %v1682
    %v1955 = vunpack.c.h.b16 %v1682
    %v1956 = vunpack.c.l.b16 %v1683
    %v1957 = vunpack.c.h.b16 %v1683
    %v1958 = vunpack.c.l.b16 %v1684
    %v1959 = vunpack.c.h.b16 %v1684
    %v1960 = vunpack.c.l.b16 %v1685
    %v1961 = vunpack.c.h.b16 %v1685
    %v1962 = vunpack.c.l.b16 %v1686
    %v1963 = vunpack.c.h.b16 %v1686
    %v1964 = vunpack.c.l.b16 %v1687
    %v1965 = vunpack.c.h.b16 %v1687
    %v1966 = vunpack.c.l.b16 %v1688
    %v1967 = vunpack.c.h.b16 %v1688
    %v1968 = vunpack.c.l.b16 %v1689
    %v1969 = vunpack.c.h.b16 %v1689
    %v1970 = vunpack.c.l.b16 %v1690
    %v1971 = vunpack.c.h.b16 %v1690
    %v1972 = vunpack.c.l.b16 %v1691
    %v1973 = vunpack.c.h.b16 %v1691
    %v1974 = vunpack.c.l.b16 %v1692
    %v1975 = vunpack.c.h.b16 %v1692
    %v1976 = vunpack.c.l.b16 %v1693
    %v1977 = vunpack.c.h.b16 %v1693
    %v1978 = vunpack.c.l.b16 %v1694
    %v1979 = vunpack.c.h.b16 %v1694
    %v1980 = vunpack.c.l.b16 %v1695
    %v1981 = vunpack.c.h.b16 %v1695
    %v1982 = vunpack.c.l.b16 %v1696
    %v1983 = vunpack.c.h.b16 %v1696
    %v1984 = vunpack.c.l.b16 %v1697
    %v1985 = vunpack.c.h.b16 %v1697
    %v1986 = vunpack.c.l.b16 %v1698
    %v1987 = vunpack.c.h.b16 %v1698
    %v1988 = vunpack.c.l.b16 %v1699
    %v1989 = vunpack.c.h.b16 %v1699
    %v1990 = vunpack.c.l.b16 %v1700
    %v1991 = vunpack.c.h.b16 %v1700
    %v1992 = vunpack.c.l.b16 %v1701
    %v1993 = vunpack.c.h.b16 %v1701
    %v1994 = vunpack.c.l.b16 %v1702
    %v1995 = vunpack.c.h.b16 %v1702
    %v1996 = vunpack.c.l.b16 %v1703
    %v1997 = vunpack.c.h.b16 %v1703
    %v1998 = vunpack.c.l.b16 %v1704
    %v1999 = vunpack.c.h.b16 %v1704
    %v2000 = vunpack.c.l.b16 %v1705
    %v2001 = vunpack.c.h.b16 %v1705
    %v2002 = vunpack.c.l.b16 %v1706
    %v2003 = vunpack.c.h.b16 %v1706
    %v2004 = vunpack.c.l.b16 %v1707
    %v2005 = vunpack.c.h.b16 %v1707
    %v2006 = vunpack.c.l.b16 %v1708
    %v2007 = vunpack.c.h.b16 %v1708
    %v2008 = vunpack.c.l.b16 %v1709
    %v2009 = vunpack.c.h.b16 %v1709
    %v2010 = vunpack.c.l.b16 %v1710
    %v2011 = vunpack.c.h.b16 %v1710
    %v2012 = vunpack.c.l.b16 %v1711
    %v2013 = vunpack.c.h.b16 %v1711
    %v2014 = vunpack.c.l.b16 %v1712
    %v2015 = vunpack.c.h.b16 %v1712
    %v2016 = vunpack.c.l.b16 %v1713
    %v2017 = vunpack.c.h.b16 %v1713
    %v2018 = vunpack.c.l.b16 %v1714
    %v2019 = vunpack.c.h.b16 %v1714
    %v2020 = vunpack.c.l.b16 %v1715
    %v2021 = vunpack.c.h.b16 %v1715
    %v2022 = vunpack.c.l.b16 %v1716
    %v2023 = vunpack.c.h.b16 %v1716
    %v2024 = vunpack.c.l.b16 %v1717
    %v2025 = vunpack.c.h.b16 %v1717
    %v2026 = vunpack.c.l.b16 %v1718
    %v2027 = vunpack.c.h.b16 %v1718
    %v2028 = vunpack.c.l.b16 %v1719
    %v2029 = vunpack.c.h.b16 %v1719
    %v2030 = vunpack.c.l.b16 %v1720
    %v2031 = vunpack.c.h.b16 %v1720
    %v2032 = vunpack.c.l.b16 %v1721
    %v2033 = vunpack.c.h.b16 %v1721
    %v2034 = vunpack.c.l.b16 %v1722
    %v2035 = vunpack.c.h.b16 %v1722
    %v2036 = vunpack.c.l.b16 %v1723
    %v2037 = vunpack.c.h.b16 %v1723
    %v2038 = vunpack.c.l.b16 %v1724
    %v2039 = vunpack.c.h.b16 %v1724
    %v2040 = vunpack.c.l.b16 %v1725
    %v2041 = vunpack.c.h.b16 %v1725
    %v2042 = vunpack.c.l.b16 %v1726
    %v2043 = vunpack.c.h.b16 %v1726
    %v2044 = vunpack.c.l.b16 %v1727
    %v2045 = vunpack.c.h.b16 %v1727
    %v2046 = vunpack.c.l.b16 %v1728
    %v2047 = vunpack.c.h.b16 %v1728
    %v2048 = vunpack.c.l.b16 %v1729
    %v2049 = vunpack.c.h.b16 %v1729
    %v2050 = vunpack.c.l.b16 %v1730
    %v2051 = vunpack.c.h.b16 %v1730
    %v2052 = vunpack.c.l.b16 %v1731
    %v2053 = vunpack.c.h.b16 %v1731
    %v2054 = vunpack.c.l.b16 %v1732
    %v2055 = vunpack.c.h.b16 %v1732
    %v2056 = vunpack.c.l.b16 %v1733
    %v2057 = vunpack.c.h.b16 %v1733
    %v2058 = vunpack.c.l.b16 %v1734
    %v2059 = vunpack.c.h.b16 %v1734
    %v2060 = vunpack.c.l.b16 %v1735
    %v2061 = vunpack.c.h.b16 %v1735
    %v2062 = vunpack.c.l.b16 %v1736
    %v2063 = vunpack.c.h.b16 %v1736
    %v2064 = vunpack.c.l.b16 %v1737
    %v2065 = vunpack.c.h.b16 %v1737
    %v2066 = vunpack.c.l.b16 %v1738
    %v2067 = vunpack.c.h.b16 %v1738
    %v2068 = vunpack.c.l.b16 %v1739
    %v2069 = vunpack.c.h.b16 %v1739
    %v2070 = vunpack.c.l.b16 %v1740
    %v2071 = vunpack.c.h.b16 %v1740
    %v2072 = vunpack.c.l.b16 %v1741
    %v2073 = vunpack.c.h.b16 %v1741
    %v2074 = vunpack.c.l.b16 %v1742
    %v2075 = vunpack.c.h.b16 %v1742
    %v2076 = vunpack.c.l.b16 %v1743
    %v2077 = vunpack.c.h.b16 %v1743
    %v2078 = vunpack.c.l.b16 %v1744
    %v2079 = vunpack.c.h.b16 %v1744
    %v2080 = vunpack.c.l.b16 %v1745
    %v2081 = vunpack.c.h.b16 %v1745
    %v2082 = vunpack.c.l.b16 %v1746
    %v2083 = vunpack.c.h.b16 %v1746
    %v2084 = vunpack.c.l.b16 %v1747
    %v2085 = vunpack.c.h.b16 %v1747
    %v2086 = vunpack.c.l.b16 %v1748
    %v2087 = vunpack.c.h.b16 %v1748
    %v2088 = vunpack.c.l.b16 %v1749
    %v2089 = vunpack.c.h.b16 %v1749
    %v2090 = vunpack.c.l.b16 %v1750
    %v2091 = vunpack.c.h.b16 %v1750
    %v2092 = vunpack.c.l.b16 %v1751
    %v2093 = vunpack.c.h.b16 %v1751
    %v2094 = vunpack.c.l.b16 %v1752
    %v2095 = vunpack.c.h.b16 %v1752
    %v2096 = vunpack.c.l.b16 %v1753
    %v2097 = vunpack.c.h.b16 %v1753
    %v2098 = vunpack.c.l.b16 %v1754
    %v2099 = vunpack.c.h.b16 %v1754
    %v2100 = vunpack.c.l.b16 %v1755
    %v2101 = vunpack.c.h.b16 %v1755
    %v2102 = vunpack.c.l.b16 %v1756
    %v2103 = vunpack.c.h.b16 %v1756
    %v2104 = vunpack.c.l.b16 %v1757
    %v2105 = vunpack.c.h.b16 %v1757
    %v2106 = vunpack.c.l.b16 %v1758
    %v2107 = vunpack.c.h.b16 %v1758
    %v2108 = vunpack.c.l.b16 %v1759
    %v2109 = vunpack.c.h.b16 %v1759
    %v2110 = vunpack.c.l.b16 %v1760
    %v2111 = vunpack.c.h.b16 %v1760
    %v2112 = vunpack.c.l.b16 %v1761
    %v2113 = vunpack.c.h.b16 %v1761
    %v2114 = vunpack.c.l.b16 %v1762
    %v2115 = vunpack.c.h.b16 %v1762
    %v2116 = vunpack.c.l.b16 %v1763
    %v2117 = vunpack.c.h.b16 %v1763
    %v2118 = vunpack.c.l.b16 %v1764
    %v2119 = vunpack.c.h.b16 %v1764
    %v2120 = vunpack.c.l.b16 %v1765
    %v2121 = vunpack.c.h.b16 %v1765
    %v2122 = vunpack.c.l.b16 %v1766
    %v2123 = vunpack.c.h.b16 %v1766
    %v2124 = vunpack.c.l.b16 %v1767
    %v2125 = vunpack.c.h.b16 %v1767
    %v2126 = vunpack.c.l.b16 %v1768
    %v2127 = vunpack.c.h.b16 %v1768
    %v2128 = vunpack.c.l.b16 %v1769
    %v2129 = vunpack.c.h.b16 %v1769
    %v2130 = vunpack.c.l.b16 %v1770
    %v2131 = vunpack.c.h.b16 %v1770
    %v2132 = vunpack.c.l.b16 %v1771
    %v2133 = vunpack.c.h.b16 %v1771
    %v2134 = vunpack.c.l.b16 %v1772
    %v2135 = vunpack.c.h.b16 %v1772
    %v2136 = vunpack.c.l.b16 %v1773
    %v2137 = vunpack.c.h.b16 %v1773
    %v2138 = vunpack.c.l.b16 %v1774
    %v2139 = vunpack.c.h.b16 %v1774
    %v2140 = vunpack.c.l.b16 %v1775
    %v2141 = vunpack.c.h.b16 %v1775
    %v2142 = vunpack.c.l.b16 %v1776
    %v2143 = vunpack.c.h.b16 %v1776
    %v2144 = vunpack.c.l.b16 %v1777
    %v2145 = vunpack.c.h.b16 %v1777
    %v2146 = vunpack.c.l.b16 %v1778
    %v2147 = vunpack.c.h.b16 %v1778
    %v2148 = vunpack.c.l.b16 %v1779
    %v2149 = vunpack.c.h.b16 %v1779
    %v2150 = vunpack.c.l.b16 %v1780
    %v2151 = vunpack.c.h.b16 %v1780
    %v2152 = vunpack.c.l.b16 %v1781
    %v2153 = vunpack.c.h.b16 %v1781
    %v2154 = vunpack.c.l.b16 %v1782
    %v2155 = vunpack.c.h.b16 %v1782
    %v2156 = vunpack.c.l.b16 %v1783
    %v2157 = vunpack.c.h.b16 %v1783
    %v2158 = vunpack.c.l.b16 %v1784
    %v2159 = vunpack.c.h.b16 %v1784
    %v2160 = vunpack.c.l.b16 %v1785
    %v2161 = vunpack.c.h.b16 %v1785
    %v2162 = vunpack.c.l.b16 %v1786
    %v2163 = vunpack.c.h.b16 %v1786
    %v2164 = vunpack.c.l.b16 %v1787
    %v2165 = vunpack.c.h.b16 %v1787
    %v2166 = vunpack.c.l.b16 %v1788
    %v2167 = vunpack.c.h.b16 %v1788
    %v2168 = vunpack.c.l.b16 %v1789
    %v2169 = vunpack.c.h.b16 %v1789
    %v2170 = vunpack.c.l.b16 %v1790
    %v2171 = vunpack.c.h.b16 %v1790
    %v2172 = vunpack.c.l.b16 %v1791
    %v2173 = vunpack.c.h.b16 %v1791
    %v2174 = vunpack.c.l.b16 %v1792
    %v2175 = vunpack.c.h.b16 %v1792
    %v2176 = vunpack.c.l.b16 %v1793
    %v2177 = vunpack.c.h.b16 %v1793
    %v2178 = vpack.c.b16 %v1926, %v1922
    %v2179 = vpack.c.b16 %v1927, %v1923
    %v2180 = vpack.c.b16 %v1928, %v1924
    %v2181 = vpack.c.b16 %v1929, %v1925
    %v2182 = vpack.c.b16 %v1934, %v1930
    %v2183 = vpack.c.b16 %v1935, %v1931
    %v2184 = vpack.c.b16 %v1936, %v1932
    %v2185 = vpack.c.b16 %v1937, %v1933
    %v2186 = vpack.c.b16 %v1942, %v1938
    %v2187 = vpack.c.b16 %v1943, %v1939
    %v2188 = vpack.c.b16 %v1944, %v1940
    %v2189 = vpack.c.b16 %v1945, %v1941
    %v2190 = vpack.c.b16 %v1950, %v1946
    %v2191 = vpack.c.b16 %v1951, %v1947
    %v2192 = vpack.c.b16 %v1952, %v1948
    %v2193 = vpack.c.b16 %v1953, %v1949
    %v2194 = vpack.c.b16 %v1958, %v1954
    %v2195 = vpack.c.b16 %v1959, %v1955
    %v2196 = vpack.c.b16 %v1960, %v1956
    %v2197 = vpack.c.b16 %v1961, %v1957
    %v2198 = vpack.c.b16 %v1966, %v1962
    %v2199 = vpack.c.b16 %v1967, %v1963
    %v2200 = vpack.c.b16 %v1968, %v1964
    %v2201 = vpack.c.b16 %v1969, %v1965
    %v2202 = vpack.c.b16 %v1974, %v1970
    %v2203 = vpack.c.b16 %v1975, %v1971
    %v2204 = vpack.c.b16 %v1976, %v1972
    %v2205 = vpack.c.b16 %v1977, %v1973
    %v2206 = vpack.c.b16 %v1982, %v1978
    %v2207 = vpack.c.b16 %v1983, %v1979
    %v2208 = vpack.c.b16 %v1984, %v1980
    %v2209 = vpack.c.b16 %v1985, %v1981
    %v2210 = vpack.c.b16 %v1990, %v1986
    %v2211 = vpack.c.b16 %v1991, %v1987
    %v2212 = vpack.c.b16 %v1992, %v1988
    %v2213 = vpack.c.b16 %v1993, %v1989
    %v2214 = vpack.c.b16 %v1998, %v1994
    %v2215 = vpack.c.b16 %v1999, %v1995
    %v2216 = vpack.c.b16 %v2000, %v1996
    %v2217 = vpack.c.b16 %v2001, %v1997
    %v2218 = vpack.c.b16 %v2006, %v2002
    %v2219 = vpack.c.b16 %v2007, %v2003
    %v2220 = vpack.c.b16 %v2008, %v2004
    %v2221 = vpack.c.b16 %v2009, %v2005
    %v2222 = vpack.c.b16 %v2014, %v2010
    %v2223 = vpack.c.b16 %v2015, %v2011
    %v2224 = vpack.c.b16 %v2016, %v2012
    %v2225 = vpack.c.b16 %v2017, %v2013
    %v2226 = vpack.c.b16 %v2022, %v2018
    %v2227 = vpack.c.b16 %v2023, %v2019
    %v2228 = vpack.c.b16 %v2024, %v2020
    %v2229 = vpack.c.b16 %v2025, %v2021
    %v2230 = vpack.c.b16 %v2030, %v2026
    %v2231 = vpack.c.b16 %v2031, %v2027
    %v2232 = vpack.c.b16 %v2032, %v2028
    %v2233 = vpack.c.b16 %v2033, %v2029
    %v2234 = vpack.c.b16 %v2038, %v2034
    %v2235 = vpack.c.b16 %v2039, %v2035
    %v2236 = vpack.c.b16 %v2040, %v2036
    %v2237 = vpack.c.b16 %v2041, %v2037
    %v2238 = vpack.c.b16 %v2046, %v2042
    %v2239 = vpack.c.b16 %v2047, %v2043
    %v2240 = vpack.c.b16 %v2048, %v2044
    %v2241 = vpack.c.b16 %v2049, %v2045
    %v2242 = vpack.c.b16 %v2054, %v2050
    %v2243 = vpack.c.b16 %v2055, %v2051
    %v2244 = vpack.c.b16 %v2056, %v2052
    %v2245 = vpack.c.b16 %v2057, %v2053
    %v2246 = vpack.c.b16 %v2062, %v2058
    %v2247 = vpack.c.b16 %v2063, %v2059
    %v2248 = vpack.c.b16 %v2064, %v2060
    %v2249 = vpack.c.b16 %v2065, %v2061
    %v2250 = vpack.c.b16 %v2070, %v2066
    %v2251 = vpack.c.b16 %v2071, %v2067
    %v2252 = vpack.c.b16 %v2072, %v2068
    %v2253 = vpack.c.b16 %v2073, %v2069
    %v2254 = vpack.c.b16 %v2078, %v2074
    %v2255 = vpack.c.b16 %v2079, %v2075
    %v2256 = vpack.c.b16 %v2080, %v2076
    %v2257 = vpack.c.b16 %v2081, %v2077
    %v2258 = vpack.c.b16 %v2086, %v2082
    %v2259 = vpack.c.b16 %v2087, %v2083
    %v2260 = vpack.c.b16 %v2088, %v2084
    %v2261 = vpack.c.b16 %v2089, %v2085
    %v2262 = vpack.c.b16 %v2094, %v2090
    %v2263 = vpack.c.b16 %v2095, %v2091
    %v2264 = vpack.c.b16 %v2096, %v2092
    %v2265 = vpack.c.b16 %v2097, %v2093
    %v2266 = vpack.c.b16 %v2102, %v2098
    %v2267 = vpack.c.b16 %v2103, %v2099
    %v2268 = vpack.c.b16 %v2104, %v2100
    %v2269 = vpack.c.b16 %v2105, %v2101
    %v2270 = vpack.c.b16 %v2110, %v2106
    %v2271 = vpack.c.b16 %v2111, %v2107
    %v2272 = vpack.c.b16 %v2112, %v2108
    %v2273 = vpack.c.b16 %v2113, %v2109
    %v2274 = vpack.c.b16 %v2118, %v2114
    %v2275 = vpack.c.b16 %v2119, %v2115
    %v2276 = vpack.c.b16 %v2120, %v2116
    %v2277 = vpack.c.b16 %v2121, %v2117
    %v2278 = vpack.c.b16 %v2126, %v2122
    %v2279 = vpack.c.b16 %v2127, %v2123
    %v2280 = vpack.c.b16 %v2128, %v2124
    %v2281 = vpack.c.b16 %v2129, %v2125
    %v2282 = vpack.c.b16 %v2134, %v2130
    %v2283 = vpack.c.b16 %v2135, %v2131
    %v2284 = vpack.c.b16 %v2136, %v2132
    %v2285 = vpack.c.b16 %v2137, %v2133
    %v2286 = vpack.c.b16 %v2142, %v2138
    %v2287 = vpack.c.b16 %v2143, %v2139
    %v2288 = vpack.c.b16 %v2144, %v2140
    %v2289 = vpack.c.b16 %v2145, %v2141
    %v2290 = vpack.c.b16 %v2150, %v2146
    %v2291 = vpack.c.b16 %v2151, %v2147
    %v2292 = vpack.c.b16 %v2152, %v2148
    %v2293 = vpack.c.b16 %v2153, %v2149
    %v2294 = vpack.c.b16 %v2158, %v2154
    %v2295 = vpack.c.b16 %v2159, %v2155
    %v2296 = vpack.c.b16 %v2160, %v2156
    %v2297 = vpack.c.b16 %v2161, %v2157
    %v2298 = vpack.c.b16 %v2166, %v2162
    %v2299 = vpack.c.b16 %v2167, %v2163
    %v2300 = vpack.c.b16 %v2168, %v2164
    %v2301 = vpack.c.b16 %v2169, %v2165
    %v2302 = vpack.c.b16 %v2174, %v2170
    %v2303 = vpack.c.b16 %v2175, %v2171
    %v2304 = vpack.c.b16 %v2176, %v2172
    %v2305 = vpack.c.b16 %v2177, %v2173
    %2434 = vmatprep.subr.bf16.mxu0 %v2179
    %2435 = vmatpush1.bf16.msra.mxu0 %v2178
    %2436 = vmatprep.subr.bf16.mxu0 %v2183
    %2437 = vmatpush1.bf16.msra.mxu0 %v2182
    %2438 = vmatprep.subr.bf16.mxu0 %v2187
    %2439 = vmatpush1.bf16.msra.mxu0 %v2186
    %2440 = vmatprep.subr.bf16.mxu0 %v2191
    %2441 = vmatpush1.bf16.msra.mxu0 %v2190
    %2442 = vmatprep.subr.bf16.mxu0 %v2195
    %2443 = vmatpush1.bf16.msra.mxu0 %v2194
    %2444 = vmatprep.subr.bf16.mxu0 %v2199
    %2445 = vmatpush1.bf16.msra.mxu0 %v2198
    %2446 = vmatprep.subr.bf16.mxu0 %v2203
    %2447 = vmatpush1.bf16.msra.mxu0 %v2202
    %2448 = vmatprep.subr.bf16.mxu0 %v2207
    %2449 = vmatpush1.bf16.msra.mxu0 %v2206
    %2450 = vmatprep.subr.bf16.mxu0 %v2211
    %2451 = vmatpush1.bf16.msra.mxu0 %v2210
    %2452 = vmatprep.subr.bf16.mxu0 %v2215
    %2453 = vmatpush1.bf16.msra.mxu0 %v2214
    %2454 = vmatprep.subr.bf16.mxu0 %v2219
    %2455 = vmatpush1.bf16.msra.mxu0 %v2218
    %2456 = vmatprep.subr.bf16.mxu0 %v2223
    %2457 = vmatpush1.bf16.msra.mxu0 %v2222
    %2458 = vmatprep.subr.bf16.mxu0 %v2227
    %2459 = vmatpush1.bf16.msra.mxu0 %v2226
    %2460 = vmatprep.subr.bf16.mxu0 %v2231
    %2461 = vmatpush1.bf16.msra.mxu0 %v2230
    %2462 = vmatprep.subr.bf16.mxu0 %v2235
    %2463 = vmatpush1.bf16.msra.mxu0 %v2234
    %2464 = vmatprep.subr.bf16.mxu0 %v2239
    %2465 = vmatpush1.bf16.msra.mxu0 %v2238
    %2466 = vmatprep.mubr.bf16.mxu0 %v1603
    %2467 = vmatmul.mubr.bf16.gmra.mrb[0].mxu0 %v1602
    %v2468 = vpop.f32.mrb[0].mxu0
    %v2469 = vadd.f32 0.0, %v2468
    %v2470 = vpop.f32.mrb[0].mxu0
    %v2471 = vadd.f32 0.0, %v2470
    %v2472 = vpop.f32.mrb[0].mxu0
    %v2473 = vadd.f32 0.0, %v2472
    %v2474 = vpop.f32.mrb[0].mxu0
    %v2475 = vadd.f32 0.0, %v2474
    %2476 = vmatprep.mubr.bf16.mxu0 %v1607
    %2477 = vmatmul.mubr.bf16.gmra.mrb[0].mxu0 %v1606
    %v2478 = vpop.f32.mrb[0].mxu0
    %v2479 = vadd.f32 0.0, %v2478
    %v2480 = vpop.f32.mrb[0].mxu0
    %v2481 = vadd.f32 0.0, %v2480
    %v2482 = vpop.f32.mrb[0].mxu0
    %v2483 = vadd.f32 0.0, %v2482
    %v2484 = vpop.f32.mrb[0].mxu0
    %v2485 = vadd.f32 0.0, %v2484
    %2486 = vmatprep.mubr.bf16.mxu0 %v1611
    %2487 = vmatmul.mubr.bf16.gmra.mrb[0].mxu0 %v1610
    %v2488 = vpop.f32.mrb[0].mxu0
    %v2489 = vadd.f32 0.0, %v2488
    %v2490 = vpop.f32.mrb[0].mxu0
    %v2491 = vadd.f32 0.0, %v2490
    %v2492 = vpop.f32.mrb[0].mxu0
    %v2493 = vadd.f32 0.0, %v2492
    %v2494 = vpop.f32.mrb[0].mxu0
    %v2495 = vadd.f32 0.0, %v2494
    %2496 = vmatprep.mubr.bf16.mxu0 %v1615
    %2497 = vmatmul.mubr.bf16.gmra.mrb[0].mxu0 %v1614
    %v2498 = vpop.f32.mrb[0].mxu0
    %v2499 = vadd.f32 0.0, %v2498
    %v2500 = vpop.f32.mrb[0].mxu0
    %v2501 = vadd.f32 0.0, %v2500
    %v2502 = vpop.f32.mrb[0].mxu0
    %v2503 = vadd.f32 0.0, %v2502
    %v2504 = vpop.f32.mrb[0].mxu0
    %v2505 = vadd.f32 0.0, %v2504
    %2506 = vmatprep.mubr.bf16.mxu0 %v1619
    %2507 = vmatmul.mubr.bf16.gmra.mrb[0].mxu0 %v1618
    %v2508 = vpop.f32.mrb[0].mxu0
    %v2509 = vadd.f32 0.0, %v2508
    %v2510 = vpop.f32.mrb[0].mxu0
    %v2511 = vadd.f32 0.0, %v2510
    %v2512 = vpop.f32.mrb[0].mxu0
    %v2513 = vadd.f32 0.0, %v2512
    %v2514 = vpop.f32.mrb[0].mxu0
    %v2515 = vadd.f32 0.0, %v2514
    %2516 = vmatprep.mubr.bf16.mxu0 %v1623
    %2517 = vmatmul.mubr.bf16.gmra.mrb[0].mxu0 %v1622
    %v2518 = vpop.f32.mrb[0].mxu0
    %v2519 = vadd.f32 0.0, %v2518
    %v2520 = vpop.f32.mrb[0].mxu0
    %v2521 = vadd.f32 0.0, %v2520
    %v2522 = vpop.f32.mrb[0].mxu0
    %v2523 = vadd.f32 0.0, %v2522
    %v2524 = vpop.f32.mrb[0].mxu0
    %v2525 = vadd.f32 0.0, %v2524
    %2526 = vmatprep.mubr.bf16.mxu0 %v1627
    %2527 = vmatmul.mubr.bf16.gmra.mrb[0].mxu0 %v1626
    %v2528 = vpop.f32.mrb[0].mxu0
    %v2529 = vadd.f32 0.0, %v2528
    %v2530 = vpop.f32.mrb[0].mxu0
    %v2531 = vadd.f32 0.0, %v2530
    %v2532 = vpop.f32.mrb[0].mxu0
    %v2533 = vadd.f32 0.0, %v2532
    %v2534 = vpop.f32.mrb[0].mxu0
    %v2535 = vadd.f32 0.0, %v2534
    %2536 = vmatprep.mubr.bf16.mxu0 %v1631
    %2537 = vmatmul.mubr.bf16.gmra.mrb[0].mxu0 %v1630
    %v2538 = vpop.f32.mrb[0].mxu0
    %v2539 = vadd.f32 0.0, %v2538
    %v2540 = vpop.f32.mrb[0].mxu0
    %v2541 = vadd.f32 0.0, %v2540
    %v2542 = vpop.f32.mrb[0].mxu0
    %v2543 = vadd.f32 0.0, %v2542
    %v2544 = vpop.f32.mrb[0].mxu0
    %v2545 = vadd.f32 0.0, %v2544
    %2546 = vmatprep.mubr.bf16.mxu0 %v1635
    %2547 = vmatmul.mubr.bf16.gmra.mrb[0].mxu0 %v1634
    %v2548 = vpop.f32.mrb[0].mxu0
    %v2549 = vadd.f32 0.0, %v2548
    %v2550 = vpop.f32.mrb[0].mxu0
    %v2551 = vadd.f32 0.0, %v2550
    %v2552 = vpop.f32.mrb[0].mxu0
    %v2553 = vadd.f32 0.0, %v2552
    %v2554 = vpop.f32.mrb[0].mxu0
    %v2555 = vadd.f32 0.0, %v2554
    %2556 = vmatprep.mubr.bf16.mxu0 %v1639
    %2557 = vmatmul.mubr.bf16.gmra.mrb[0].mxu0 %v1638
    %v2558 = vpop.f32.mrb[0].mxu0
    %v2559 = vadd.f32 0.0, %v2558
    %v2560 = vpop.f32.mrb[0].mxu0
    %v2561 = vadd.f32 0.0, %v2560
    %v2562 = vpop.f32.mrb[0].mxu0
    %v2563 = vadd.f32 0.0, %v2562
    %v2564 = vpop.f32.mrb[0].mxu0
    %v2565 = vadd.f32 0.0, %v2564
    %2566 = vmatprep.mubr.bf16.mxu0 %v1643
    %2567 = vmatmul.mubr.bf16.gmra.mrb[0].mxu0 %v1642
    %v2568 = vpop.f32.mrb[0].mxu0
    %v2569 = vadd.f32 0.0, %v2568
    %v2570 = vpop.f32.mrb[0].mxu0
    %v2571 = vadd.f32 0.0, %v2570
    %v2572 = vpop.f32.mrb[0].mxu0
    %v2573 = vadd.f32 0.0, %v2572
    %v2574 = vpop.f32.mrb[0].mxu0
    %v2575 = vadd.f32 0.0, %v2574
    %2576 = vmatprep.mubr.bf16.mxu0 %v1647
    %2577 = vmatmul.mubr.bf16.gmra.mrb[0].mxu0 %v1646
    %v2578 = vpop.f32.mrb[0].mxu0
    %v2579 = vadd.f32 0.0, %v2578
    %v2580 = vpop.f32.mrb[0].mxu0
    %v2581 = vadd.f32 0.0, %v2580
    %v2582 = vpop.f32.mrb[0].mxu0
    %v2583 = vadd.f32 0.0, %v2582
    %v2584 = vpop.f32.mrb[0].mxu0
    %v2585 = vadd.f32 0.0, %v2584
    %2586 = vmatprep.mubr.bf16.mxu0 %v1651
    %2587 = vmatmul.mubr.bf16.gmra.mrb[0].mxu0 %v1650
    %v2588 = vpop.f32.mrb[0].mxu0
    %v2589 = vadd.f32 0.0, %v2588
    %v2590 = vpop.f32.mrb[0].mxu0
    %v2591 = vadd.f32 0.0, %v2590
    %v2592 = vpop.f32.mrb[0].mxu0
    %v2593 = vadd.f32 0.0, %v2592
    %v2594 = vpop.f32.mrb[0].mxu0
    %v2595 = vadd.f32 0.0, %v2594
    %2596 = vmatprep.mubr.bf16.mxu0 %v1655
    %2597 = vmatmul.mubr.bf16.gmra.mrb[0].mxu0 %v1654
    %v2598 = vpop.f32.mrb[0].mxu0
    %v2599 = vadd.f32 0.0, %v2598
    %v2600 = vpop.f32.mrb[0].mxu0
    %v2601 = vadd.f32 0.0, %v2600
    %v2602 = vpop.f32.mrb[0].mxu0
    %v2603 = vadd.f32 0.0, %v2602
    %v2604 = vpop.f32.mrb[0].mxu0
    %v2605 = vadd.f32 0.0, %v2604
    %2606 = vmatprep.mubr.bf16.mxu0 %v1659
    %2607 = vmatmul.mubr.bf16.gmra.mrb[0].mxu0 %v1658
    %v2608 = vpop.f32.mrb[0].mxu0
    %v2609 = vadd.f32 0.0, %v2608
    %v2610 = vpop.f32.mrb[0].mxu0
    %v2611 = vadd.f32 0.0, %v2610
    %v2612 = vpop.f32.mrb[0].mxu0
    %v2613 = vadd.f32 0.0, %v2612
    %v2614 = vpop.f32.mrb[0].mxu0
    %v2615 = vadd.f32 0.0, %v2614
    %2616 = vmatprep.mubr.bf16.mxu0 %v1663
    %2617 = vmatmul.mubr.bf16.gmra.mrb[0].mxu0 %v1662
    %v2618 = vpop.f32.mrb[0].mxu0
    %v2619 = vadd.f32 0.0, %v2618
    %v2620 = vpop.f32.mrb[0].mxu0
    %v2621 = vadd.f32 0.0, %v2620
    %v2622 = vpop.f32.mrb[0].mxu0
    %v2623 = vadd.f32 0.0, %v2622
    %v2624 = vpop.f32.mrb[0].mxu0
    %v2625 = vadd.f32 0.0, %v2624
    %2626 = vdwg.mxu0
    %2627 = vmatprep.subr.bf16.mxu0 %v2243
    %2628 = vmatpush1.bf16.msra.mxu0 %v2242
    %2629 = vmatprep.subr.bf16.mxu0 %v2247
    %2630 = vmatpush1.bf16.msra.mxu0 %v2246
    %2631 = vmatprep.subr.bf16.mxu0 %v2251
    %2632 = vmatpush1.bf16.msra.mxu0 %v2250
    %2633 = vmatprep.subr.bf16.mxu0 %v2255
    %2634 = vmatpush1.bf16.msra.mxu0 %v2254
    %2635 = vmatprep.subr.bf16.mxu0 %v2259
    %2636 = vmatpush1.bf16.msra.mxu0 %v2258
    %2637 = vmatprep.subr.bf16.mxu0 %v2263
    %2638 = vmatpush1.bf16.msra.mxu0 %v2262
    %2639 = vmatprep.subr.bf16.mxu0 %v2267
    %2640 = vmatpush1.bf16.msra.mxu0 %v2266
    %2641 = vmatprep.subr.bf16.mxu0 %v2271
    %2642 = vmatpush1.bf16.msra.mxu0 %v2270
    %2643 = vmatprep.subr.bf16.mxu0 %v2275
    %2644 = vmatpush1.bf16.msra.mxu0 %v2274
    %2645 = vmatprep.subr.bf16.mxu0 %v2279
    %2646 = vmatpush1.bf16.msra.mxu0 %v2278
    %2647 = vmatprep.subr.bf16.mxu0 %v2283
    %2648 = vmatpush1.bf16.msra.mxu0 %v2282
    %2649 = vmatprep.subr.bf16.mxu0 %v2287
    %2650 = vmatpush1.bf16.msra.mxu0 %v2286
    %2651 = vmatprep.subr.bf16.mxu0 %v2291
    %2652 = vmatpush1.bf16.msra.mxu0 %v2290
    %2653 = vmatprep.subr.bf16.mxu0 %v2295
    %2654 = vmatpush1.bf16.msra.mxu0 %v2294
    %2655 = vmatprep.subr.bf16.mxu0 %v2299
    %2656 = vmatpush1.bf16.msra.mxu0 %v2298
    %2657 = vmatprep.subr.bf16.mxu0 %v2303
    %2658 = vmatpush1.bf16.msra.mxu0 %v2302
    %2659 = vmatprep.mubr.bf16.mxu0 %v1605
    %2660 = vmatmul.mubr.bf16.gmra.mrb[0].mxu0 %v1604
    %v2661 = vpop.f32.mrb[0].mxu0
    %v2662 = vadd.f32 %v2469, %v2661
    %v2663 = vpop.f32.mrb[0].mxu0
    %v2664 = vadd.f32 %v2471, %v2663
    %v2665 = vpop.f32.mrb[0].mxu0
    %v2666 = vadd.f32 %v2473, %v2665
    %v2667 = vpop.f32.mrb[0].mxu0
    %v2668 = vadd.f32 %v2475, %v2667
    %2669 = vmatprep.mubr.bf16.mxu0 %v1609
    %2670 = vmatmul.mubr.bf16.gmra.mrb[0].mxu0 %v1608
    %v2671 = vpop.f32.mrb[0].mxu0
    %v2672 = vadd.f32 %v2479, %v2671
    %v2673 = vpop.f32.mrb[0].mxu0
    %v2674 = vadd.f32 %v2481, %v2673
    %v2675 = vpop.f32.mrb[0].mxu0
    %v2676 = vadd.f32 %v2483, %v2675
    %v2677 = vpop.f32.mrb[0].mxu0
    %v2678 = vadd.f32 %v2485, %v2677
    %2679 = vmatprep.mubr.bf16.mxu0 %v1613
    %2680 = vmatmul.mubr.bf16.gmra.mrb[0].mxu0 %v1612
    %v2681 = vpop.f32.mrb[0].mxu0
    %v2682 = vadd.f32 %v2489, %v2681
    %v2683 = vpop.f32.mrb[0].mxu0
    %v2684 = vadd.f32 %v2491, %v2683
    %v2685 = vpop.f32.mrb[0].mxu0
    %v2686 = vadd.f32 %v2493, %v2685
    %v2687 = vpop.f32.mrb[0].mxu0
    %v2688 = vadd.f32 %v2495, %v2687
    %2689 = vmatprep.mubr.bf16.mxu0 %v1617
    %2690 = vmatmul.mubr.bf16.gmra.mrb[0].mxu0 %v1616
    %v2691 = vpop.f32.mrb[0].mxu0
    %v2692 = vadd.f32 %v2499, %v2691
    %v2693 = vpop.f32.mrb[0].mxu0
    %v2694 = vadd.f32 %v2501, %v2693
    %v2695 = vpop.f32.mrb[0].mxu0
    %v2696 = vadd.f32 %v2503, %v2695
    %v2697 = vpop.f32.mrb[0].mxu0
    %v2698 = vadd.f32 %v2505, %v2697
    %2699 = vmatprep.mubr.bf16.mxu0 %v1621
    %2700 = vmatmul.mubr.bf16.gmra.mrb[0].mxu0 %v1620
    %v2701 = vpop.f32.mrb[0].mxu0
    %v2702 = vadd.f32 %v2509, %v2701
    %v2703 = vpop.f32.mrb[0].mxu0
    %v2704 = vadd.f32 %v2511, %v2703
    %v2705 = vpop.f32.mrb[0].mxu0
    %v2706 = vadd.f32 %v2513, %v2705
    %v2707 = vpop.f32.mrb[0].mxu0
    %v2708 = vadd.f32 %v2515, %v2707
    %2709 = vmatprep.mubr.bf16.mxu0 %v1625
    %2710 = vmatmul.mubr.bf16.gmra.mrb[0].mxu0 %v1624
    %v2711 = vpop.f32.mrb[0].mxu0
    %v2712 = vadd.f32 %v2519, %v2711
    %v2713 = vpop.f32.mrb[0].mxu0
    %v2714 = vadd.f32 %v2521, %v2713
    %v2715 = vpop.f32.mrb[0].mxu0
    %v2716 = vadd.f32 %v2523, %v2715
    %v2717 = vpop.f32.mrb[0].mxu0
    %v2718 = vadd.f32 %v2525, %v2717
    %2719 = vmatprep.mubr.bf16.mxu0 %v1629
    %2720 = vmatmul.mubr.bf16.gmra.mrb[0].mxu0 %v1628
    %v2721 = vpop.f32.mrb[0].mxu0
    %v2722 = vadd.f32 %v2529, %v2721
    %v2723 = vpop.f32.mrb[0].mxu0
    %v2724 = vadd.f32 %v2531, %v2723
    %v2725 = vpop.f32.mrb[0].mxu0
    %v2726 = vadd.f32 %v2533, %v2725
    %v2727 = vpop.f32.mrb[0].mxu0
    %v2728 = vadd.f32 %v2535, %v2727
    %2729 = vmatprep.mubr.bf16.mxu0 %v1633
    %2730 = vmatmul.mubr.bf16.gmra.mrb[0].mxu0 %v1632
    %v2731 = vpop.f32.mrb[0].mxu0
    %v2732 = vadd.f32 %v2539, %v2731
    %v2733 = vpop.f32.mrb[0].mxu0
    %v2734 = vadd.f32 %v2541, %v2733
    %v2735 = vpop.f32.mrb[0].mxu0
    %v2736 = vadd.f32 %v2543, %v2735
    %v2737 = vpop.f32.mrb[0].mxu0
    %v2738 = vadd.f32 %v2545, %v2737
    %2739 = vmatprep.mubr.bf16.mxu0 %v1637
    %2740 = vmatmul.mubr.bf16.gmra.mrb[0].mxu0 %v1636
    %v2741 = vpop.f32.mrb[0].mxu0
    %v2742 = vadd.f32 %v2549, %v2741
    %v2743 = vpop.f32.mrb[0].mxu0
    %v2744 = vadd.f32 %v2551, %v2743
    %v2745 = vpop.f32.mrb[0].mxu0
    %v2746 = vadd.f32 %v2553, %v2745
    %v2747 = vpop.f32.mrb[0].mxu0
    %v2748 = vadd.f32 %v2555, %v2747
    %2749 = vmatprep.mubr.bf16.mxu0 %v1641
    %2750 = vmatmul.mubr.bf16.gmra.mrb[0].mxu0 %v1640
    %v2751 = vpop.f32.mrb[0].mxu0
    %v2752 = vadd.f32 %v2559, %v2751
    %v2753 = vpop.f32.mrb[0].mxu0
    %v2754 = vadd.f32 %v2561, %v2753
    %v2755 = vpop.f32.mrb[0].mxu0
    %v2756 = vadd.f32 %v2563, %v2755
    %v2757 = vpop.f32.mrb[0].mxu0
    %v2758 = vadd.f32 %v2565, %v2757
    %2759 = vmatprep.mubr.bf16.mxu0 %v1645
    %2760 = vmatmul.mubr.bf16.gmra.mrb[0].mxu0 %v1644
    %v2761 = vpop.f32.mrb[0].mxu0
    %v2762 = vadd.f32 %v2569, %v2761
    %v2763 = vpop.f32.mrb[0].mxu0
    %v2764 = vadd.f32 %v2571, %v2763
    %v2765 = vpop.f32.mrb[0].mxu0
    %v2766 = vadd.f32 %v2573, %v2765
    %v2767 = vpop.f32.mrb[0].mxu0
    %v2768 = vadd.f32 %v2575, %v2767
    %2769 = vmatprep.mubr.bf16.mxu0 %v1649
    %2770 = vmatmul.mubr.bf16.gmra.mrb[0].mxu0 %v1648
    %v2771 = vpop.f32.mrb[0].mxu0
    %v2772 = vadd.f32 %v2579, %v2771
    %v2773 = vpop.f32.mrb[0].mxu0
    %v2774 = vadd.f32 %v2581, %v2773
    %v2775 = vpop.f32.mrb[0].mxu0
    %v2776 = vadd.f32 %v2583, %v2775
    %v2777 = vpop.f32.mrb[0].mxu0
    %v2778 = vadd.f32 %v2585, %v2777
    %2779 = vmatprep.mubr.bf16.mxu0 %v1653
    %2780 = vmatmul.mubr.bf16.gmra.mrb[0].mxu0 %v1652
    %v2781 = vpop.f32.mrb[0].mxu0
    %v2782 = vadd.f32 %v2589, %v2781
    %v2783 = vpop.f32.mrb[0].mxu0
    %v2784 = vadd.f32 %v2591, %v2783
    %v2785 = vpop.f32.mrb[0].mxu0
    %v2786 = vadd.f32 %v2593, %v2785
    %v2787 = vpop.f32.mrb[0].mxu0
    %v2788 = vadd.f32 %v2595, %v2787
    %2789 = vmatprep.mubr.bf16.mxu0 %v1657
    %2790 = vmatmul.mubr.bf16.gmra.mrb[0].mxu0 %v1656
    %v2791 = vpop.f32.mrb[0].mxu0
    %v2792 = vadd.f32 %v2599, %v2791
    %v2793 = vpop.f32.mrb[0].mxu0
    %v2794 = vadd.f32 %v2601, %v2793
    %v2795 = vpop.f32.mrb[0].mxu0
    %v2796 = vadd.f32 %v2603, %v2795
    %v2797 = vpop.f32.mrb[0].mxu0
    %v2798 = vadd.f32 %v2605, %v2797
    %2799 = vmatprep.mubr.bf16.mxu0 %v1661
    %2800 = vmatmul.mubr.bf16.gmra.mrb[0].mxu0 %v1660
    %v2801 = vpop.f32.mrb[0].mxu0
    %v2802 = vadd.f32 %v2609, %v2801
    %v2803 = vpop.f32.mrb[0].mxu0
    %v2804 = vadd.f32 %v2611, %v2803
    %v2805 = vpop.f32.mrb[0].mxu0
    %v2806 = vadd.f32 %v2613, %v2805
    %v2807 = vpop.f32.mrb[0].mxu0
    %v2808 = vadd.f32 %v2615, %v2807
    %2809 = vmatprep.mubr.bf16.mxu0 %v1665
    %2810 = vmatmul.mubr.bf16.gmra.mrb[0].mxu0 %v1664
    %v2811 = vpop.f32.mrb[0].mxu0
    %v2812 = vadd.f32 %v2619, %v2811
    %v2813 = vpop.f32.mrb[0].mxu0
    %v2814 = vadd.f32 %v2621, %v2813
    %v2815 = vpop.f32.mrb[0].mxu0
    %v2816 = vadd.f32 %v2623, %v2815
    %v2817 = vpop.f32.mrb[0].mxu0
    %v2818 = vadd.f32 %v2625, %v2817
    %2819 = vdwg.mxu0
    %2820 = vmatprep.subr.bf16.mxu0 %v2181
    %2821 = vmatpush1.bf16.msra.mxu0 %v2180
    %2822 = vmatprep.subr.bf16.mxu0 %v2185
    %2823 = vmatpush1.bf16.msra.mxu0 %v2184
    %2824 = vmatprep.subr.bf16.mxu0 %v2189
    %2825 = vmatpush1.bf16.msra.mxu0 %v2188
    %2826 = vmatprep.subr.bf16.mxu0 %v2193
    %2827 = vmatpush1.bf16.msra.mxu0 %v2192
    %2828 = vmatprep.subr.bf16.mxu0 %v2197
    %2829 = vmatpush1.bf16.msra.mxu0 %v2196
    %2830 = vmatprep.subr.bf16.mxu0 %v2201
    %2831 = vmatpush1.bf16.msra.mxu0 %v2200
    %2832 = vmatprep.subr.bf16.mxu0 %v2205
    %2833 = vmatpush1.bf16.msra.mxu0 %v2204
    %2834 = vmatprep.subr.bf16.mxu0 %v2209
    %2835 = vmatpush1.bf16.msra.mxu0 %v2208
    %2836 = vmatprep.subr.bf16.mxu0 %v2213
    %2837 = vmatpush1.bf16.msra.mxu0 %v2212
    %2838 = vmatprep.subr.bf16.mxu0 %v2217
    %2839 = vmatpush1.bf16.msra.mxu0 %v2216
    %2840 = vmatprep.subr.bf16.mxu0 %v2221
    %2841 = vmatpush1.bf16.msra.mxu0 %v2220
    %2842 = vmatprep.subr.bf16.mxu0 %v2225
    %2843 = vmatpush1.bf16.msra.mxu0 %v2224
    %2844 = vmatprep.subr.bf16.mxu0 %v2229
    %2845 = vmatpush1.bf16.msra.mxu0 %v2228
    %2846 = vmatprep.subr.bf16.mxu0 %v2233
    %2847 = vmatpush1.bf16.msra.mxu0 %v2232
    %2848 = vmatprep.subr.bf16.mxu0 %v2237
    %2849 = vmatpush1.bf16.msra.mxu0 %v2236
    %2850 = vmatprep.subr.bf16.mxu0 %v2241
    %2851 = vmatpush1.bf16.msra.mxu0 %v2240
    %2852 = vmatprep.mubr.bf16.mxu0 %v1603
    %2853 = vmatmul.mubr.bf16.gmra.mrb[0].mxu0 %v1602
    %v2854 = vpop.f32.mrb[0].mxu0
    %v2855 = vadd.f32 0.0, %v2854
    %v2856 = vpop.f32.mrb[0].mxu0
    %v2857 = vadd.f32 0.0, %v2856
    %v2858 = vpop.f32.mrb[0].mxu0
    %v2859 = vadd.f32 0.0, %v2858
    %v2860 = vpop.f32.mrb[0].mxu0
    %v2861 = vadd.f32 0.0, %v2860
    %2862 = vmatprep.mubr.bf16.mxu0 %v1607
    %2863 = vmatmul.mubr.bf16.gmra.mrb[0].mxu0 %v1606
    %v2864 = vpop.f32.mrb[0].mxu0
    %v2865 = vadd.f32 0.0, %v2864
    %v2866 = vpop.f32.mrb[0].mxu0
    %v2867 = vadd.f32 0.0, %v2866
    %v2868 = vpop.f32.mrb[0].mxu0
    %v2869 = vadd.f32 0.0, %v2868
    %v2870 = vpop.f32.mrb[0].mxu0
    %v2871 = vadd.f32 0.0, %v2870
    %2872 = vmatprep.mubr.bf16.mxu0 %v1611
    %2873 = vmatmul.mubr.bf16.gmra.mrb[0].mxu0 %v1610
    %v2874 = vpop.f32.mrb[0].mxu0
    %v2875 = vadd.f32 0.0, %v2874
    %v2876 = vpop.f32.mrb[0].mxu0
    %v2877 = vadd.f32 0.0, %v2876
    %v2878 = vpop.f32.mrb[0].mxu0
    %v2879 = vadd.f32 0.0, %v2878
    %v2880 = vpop.f32.mrb[0].mxu0
    %v2881 = vadd.f32 0.0, %v2880
    %2882 = vmatprep.mubr.bf16.mxu0 %v1615
    %2883 = vmatmul.mubr.bf16.gmra.mrb[0].mxu0 %v1614
    %v2884 = vpop.f32.mrb[0].mxu0
    %v2885 = vadd.f32 0.0, %v2884
    %v2886 = vpop.f32.mrb[0].mxu0
    %v2887 = vadd.f32 0.0, %v2886
    %v2888 = vpop.f32.mrb[0].mxu0
    %v2889 = vadd.f32 0.0, %v2888
    %v2890 = vpop.f32.mrb[0].mxu0
    %v2891 = vadd.f32 0.0, %v2890
    %2892 = vmatprep.mubr.bf16.mxu0 %v1619
    %2893 = vmatmul.mubr.bf16.gmra.mrb[0].mxu0 %v1618
    %v2894 = vpop.f32.mrb[0].mxu0
    %v2895 = vadd.f32 0.0, %v2894
    %v2896 = vpop.f32.mrb[0].mxu0
    %v2897 = vadd.f32 0.0, %v2896
    %v2898 = vpop.f32.mrb[0].mxu0
    %v2899 = vadd.f32 0.0, %v2898
    %v2900 = vpop.f32.mrb[0].mxu0
    %v2901 = vadd.f32 0.0, %v2900
    %2902 = vmatprep.mubr.bf16.mxu0 %v1623
    %2903 = vmatmul.mubr.bf16.gmra.mrb[0].mxu0 %v1622
    %v2904 = vpop.f32.mrb[0].mxu0
    %v2905 = vadd.f32 0.0, %v2904
    %v2906 = vpop.f32.mrb[0].mxu0
    %v2907 = vadd.f32 0.0, %v2906
    %v2908 = vpop.f32.mrb[0].mxu0
    %v2909 = vadd.f32 0.0, %v2908
    %v2910 = vpop.f32.mrb[0].mxu0
    %v2911 = vadd.f32 0.0, %v2910
    %2912 = vmatprep.mubr.bf16.mxu0 %v1627
    %2913 = vmatmul.mubr.bf16.gmra.mrb[0].mxu0 %v1626
    %v2914 = vpop.f32.mrb[0].mxu0
    %v2915 = vadd.f32 0.0, %v2914
    %v2916 = vpop.f32.mrb[0].mxu0
    %v2917 = vadd.f32 0.0, %v2916
    %v2918 = vpop.f32.mrb[0].mxu0
    %v2919 = vadd.f32 0.0, %v2918
    %v2920 = vpop.f32.mrb[0].mxu0
    %v2921 = vadd.f32 0.0, %v2920
    %2922 = vmatprep.mubr.bf16.mxu0 %v1631
    %2923 = vmatmul.mubr.bf16.gmra.mrb[0].mxu0 %v1630
    %v2924 = vpop.f32.mrb[0].mxu0
    %v2925 = vadd.f32 0.0, %v2924
    %v2926 = vpop.f32.mrb[0].mxu0
    %v2927 = vadd.f32 0.0, %v2926
    %v2928 = vpop.f32.mrb[0].mxu0
    %v2929 = vadd.f32 0.0, %v2928
    %v2930 = vpop.f32.mrb[0].mxu0
    %v2931 = vadd.f32 0.0, %v2930
    %2932 = vmatprep.mubr.bf16.mxu0 %v1635
    %2933 = vmatmul.mubr.bf16.gmra.mrb[0].mxu0 %v1634
    %v2934 = vpop.f32.mrb[0].mxu0
    %v2935 = vadd.f32 0.0, %v2934
    %v2936 = vpop.f32.mrb[0].mxu0
    %v2937 = vadd.f32 0.0, %v2936
    %v2938 = vpop.f32.mrb[0].mxu0
    %v2939 = vadd.f32 0.0, %v2938
    %v2940 = vpop.f32.mrb[0].mxu0
    %v2941 = vadd.f32 0.0, %v2940
    %2942 = vmatprep.mubr.bf16.mxu0 %v1639
    %2943 = vmatmul.mubr.bf16.gmra.mrb[0].mxu0 %v1638
    %v2944 = vpop.f32.mrb[0].mxu0
    %v2945 = vadd.f32 0.0, %v2944
    %v2946 = vpop.f32.mrb[0].mxu0
    %v2947 = vadd.f32 0.0, %v2946
    %v2948 = vpop.f32.mrb[0].mxu0
    %v2949 = vadd.f32 0.0, %v2948
    %v2950 = vpop.f32.mrb[0].mxu0
    %v2951 = vadd.f32 0.0, %v2950
    %2952 = vmatprep.mubr.bf16.mxu0 %v1643
    %2953 = vmatmul.mubr.bf16.gmra.mrb[0].mxu0 %v1642
    %v2954 = vpop.f32.mrb[0].mxu0
    %v2955 = vadd.f32 0.0, %v2954
    %v2956 = vpop.f32.mrb[0].mxu0
    %v2957 = vadd.f32 0.0, %v2956
    %v2958 = vpop.f32.mrb[0].mxu0
    %v2959 = vadd.f32 0.0, %v2958
    %v2960 = vpop.f32.mrb[0].mxu0
    %v2961 = vadd.f32 0.0, %v2960
    %2962 = vmatprep.mubr.bf16.mxu0 %v1647
    %2963 = vmatmul.mubr.bf16.gmra.mrb[0].mxu0 %v1646
    %v2964 = vpop.f32.mrb[0].mxu0
    %v2965 = vadd.f32 0.0, %v2964
    %v2966 = vpop.f32.mrb[0].mxu0
    %v2967 = vadd.f32 0.0, %v2966
    %v2968 = vpop.f32.mrb[0].mxu0
    %v2969 = vadd.f32 0.0, %v2968
    %v2970 = vpop.f32.mrb[0].mxu0
    %v2971 = vadd.f32 0.0, %v2970
    %2972 = vmatprep.mubr.bf16.mxu0 %v1651
    %2973 = vmatmul.mubr.bf16.gmra.mrb[0].mxu0 %v1650
    %v2974 = vpop.f32.mrb[0].mxu0
    %v2975 = vadd.f32 0.0, %v2974
    %v2976 = vpop.f32.mrb[0].mxu0
    %v2977 = vadd.f32 0.0, %v2976
    %v2978 = vpop.f32.mrb[0].mxu0
    %v2979 = vadd.f32 0.0, %v2978
    %v2980 = vpop.f32.mrb[0].mxu0
    %v2981 = vadd.f32 0.0, %v2980
    %2982 = vmatprep.mubr.bf16.mxu0 %v1655
    %2983 = vmatmul.mubr.bf16.gmra.mrb[0].mxu0 %v1654
    %v2984 = vpop.f32.mrb[0].mxu0
    %v2985 = vadd.f32 0.0, %v2984
    %v2986 = vpop.f32.mrb[0].mxu0
    %v2987 = vadd.f32 0.0, %v2986
    %v2988 = vpop.f32.mrb[0].mxu0
    %v2989 = vadd.f32 0.0, %v2988
    %v2990 = vpop.f32.mrb[0].mxu0
    %v2991 = vadd.f32 0.0, %v2990
    %2992 = vmatprep.mubr.bf16.mxu0 %v1659
    %2993 = vmatmul.mubr.bf16.gmra.mrb[0].mxu0 %v1658
    %v2994 = vpop.f32.mrb[0].mxu0
    %v2995 = vadd.f32 0.0, %v2994
    %v2996 = vpop.f32.mrb[0].mxu0
    %v2997 = vadd.f32 0.0, %v2996
    %v2998 = vpop.f32.mrb[0].mxu0
    %v2999 = vadd.f32 0.0, %v2998
    %v3000 = vpop.f32.mrb[0].mxu0
    %v3001 = vadd.f32 0.0, %v3000
    %3002 = vmatprep.mubr.bf16.mxu0 %v1663
    %3003 = vmatmul.mubr.bf16.gmra.mrb[0].mxu0 %v1662
    %v3004 = vpop.f32.mrb[0].mxu0
    %v3005 = vadd.f32 0.0, %v3004
    %v3006 = vpop.f32.mrb[0].mxu0
    %v3007 = vadd.f32 0.0, %v3006
    %v3008 = vpop.f32.mrb[0].mxu0
    %v3009 = vadd.f32 0.0, %v3008
    %v3010 = vpop.f32.mrb[0].mxu0
    %v3011 = vadd.f32 0.0, %v3010
    %3012 = vdwg.mxu0
    %3013 = vmatprep.subr.bf16.mxu0 %v2245
    %3014 = vmatpush1.bf16.msra.mxu0 %v2244
    %3015 = vmatprep.subr.bf16.mxu0 %v2249
    %3016 = vmatpush1.bf16.msra.mxu0 %v2248
    %3017 = vmatprep.subr.bf16.mxu0 %v2253
    %3018 = vmatpush1.bf16.msra.mxu0 %v2252
    %3019 = vmatprep.subr.bf16.mxu0 %v2257
    %3020 = vmatpush1.bf16.msra.mxu0 %v2256
    %3021 = vmatprep.subr.bf16.mxu0 %v2261
    %3022 = vmatpush1.bf16.msra.mxu0 %v2260
    %3023 = vmatprep.subr.bf16.mxu0 %v2265
    %3024 = vmatpush1.bf16.msra.mxu0 %v2264
    %3025 = vmatprep.subr.bf16.mxu0 %v2269
    %3026 = vmatpush1.bf16.msra.mxu0 %v2268
    %3027 = vmatprep.subr.bf16.mxu0 %v2273
    %3028 = vmatpush1.bf16.msra.mxu0 %v2272
    %3029 = vmatprep.subr.bf16.mxu0 %v2277
    %3030 = vmatpush1.bf16.msra.mxu0 %v2276
    %3031 = vmatprep.subr.bf16.mxu0 %v2281
    %3032 = vmatpush1.bf16.msra.mxu0 %v2280
    %3033 = vmatprep.subr.bf16.mxu0 %v2285
    %3034 = vmatpush1.bf16.msra.mxu0 %v2284
    %3035 = vmatprep.subr.bf16.mxu0 %v2289
    %3036 = vmatpush1.bf16.msra.mxu0 %v2288
    %3037 = vmatprep.subr.bf16.mxu0 %v2293
    %3038 = vmatpush1.bf16.msra.mxu0 %v2292
    %3039 = vmatprep.subr.bf16.mxu0 %v2297
    %3040 = vmatpush1.bf16.msra.mxu0 %v2296
    %3041 = vmatprep.subr.bf16.mxu0 %v2301
    %3042 = vmatpush1.bf16.msra.mxu0 %v2300
    %3043 = vmatprep.subr.bf16.mxu0 %v2305
    %3044 = vmatpush1.bf16.msra.mxu0 %v2304
    %3045 = vmatprep.mubr.bf16.mxu0 %v1605
    %3046 = vmatmul.mubr.bf16.gmra.mrb[0].mxu0 %v1604
    %v3047 = vpop.f32.mrb[0].mxu0
    %v3048 = vadd.f32 %v2855, %v3047
    %v3049 = vpop.f32.mrb[0].mxu0
    %v3050 = vadd.f32 %v2857, %v3049
    %v3051 = vpop.f32.mrb[0].mxu0
    %v3052 = vadd.f32 %v2859, %v3051
    %v3053 = vpop.f32.mrb[0].mxu0
    %v3054 = vadd.f32 %v2861, %v3053
    %3055 = vmatprep.mubr.bf16.mxu0 %v1609
    %3056 = vmatmul.mubr.bf16.gmra.mrb[0].mxu0 %v1608
    %v3057 = vpop.f32.mrb[0].mxu0
    %v3058 = vadd.f32 %v2865, %v3057
    %v3059 = vpop.f32.mrb[0].mxu0
    %v3060 = vadd.f32 %v2867, %v3059
    %v3061 = vpop.f32.mrb[0].mxu0
    %v3062 = vadd.f32 %v2869, %v3061
    %v3063 = vpop.f32.mrb[0].mxu0
    %v3064 = vadd.f32 %v2871, %v3063
    %3065 = vmatprep.mubr.bf16.mxu0 %v1613
    %3066 = vmatmul.mubr.bf16.gmra.mrb[0].mxu0 %v1612
    %v3067 = vpop.f32.mrb[0].mxu0
    %v3068 = vadd.f32 %v2875, %v3067
    %v3069 = vpop.f32.mrb[0].mxu0
    %v3070 = vadd.f32 %v2877, %v3069
    %v3071 = vpop.f32.mrb[0].mxu0
    %v3072 = vadd.f32 %v2879, %v3071
    %v3073 = vpop.f32.mrb[0].mxu0
    %v3074 = vadd.f32 %v2881, %v3073
    %3075 = vmatprep.mubr.bf16.mxu0 %v1617
    %3076 = vmatmul.mubr.bf16.gmra.mrb[0].mxu0 %v1616
    %v3077 = vpop.f32.mrb[0].mxu0
    %v3078 = vadd.f32 %v2885, %v3077
    %v3079 = vpop.f32.mrb[0].mxu0
    %v3080 = vadd.f32 %v2887, %v3079
    %v3081 = vpop.f32.mrb[0].mxu0
    %v3082 = vadd.f32 %v2889, %v3081
    %v3083 = vpop.f32.mrb[0].mxu0
    %v3084 = vadd.f32 %v2891, %v3083
    %3085 = vmatprep.mubr.bf16.mxu0 %v1621
    %3086 = vmatmul.mubr.bf16.gmra.mrb[0].mxu0 %v1620
    %v3087 = vpop.f32.mrb[0].mxu0
    %v3088 = vadd.f32 %v2895, %v3087
    %v3089 = vpop.f32.mrb[0].mxu0
    %v3090 = vadd.f32 %v2897, %v3089
    %v3091 = vpop.f32.mrb[0].mxu0
    %v3092 = vadd.f32 %v2899, %v3091
    %v3093 = vpop.f32.mrb[0].mxu0
    %v3094 = vadd.f32 %v2901, %v3093
    %3095 = vmatprep.mubr.bf16.mxu0 %v1625
    %3096 = vmatmul.mubr.bf16.gmra.mrb[0].mxu0 %v1624
    %v3097 = vpop.f32.mrb[0].mxu0
    %v3098 = vadd.f32 %v2905, %v3097
    %v3099 = vpop.f32.mrb[0].mxu0
    %v3100 = vadd.f32 %v2907, %v3099
    %v3101 = vpop.f32.mrb[0].mxu0
    %v3102 = vadd.f32 %v2909, %v3101
    %v3103 = vpop.f32.mrb[0].mxu0
    %v3104 = vadd.f32 %v2911, %v3103
    %3105 = vmatprep.mubr.bf16.mxu0 %v1629
    %3106 = vmatmul.mubr.bf16.gmra.mrb[0].mxu0 %v1628
    %v3107 = vpop.f32.mrb[0].mxu0
    %v3108 = vadd.f32 %v2915, %v3107
    %v3109 = vpop.f32.mrb[0].mxu0
    %v3110 = vadd.f32 %v2917, %v3109
    %v3111 = vpop.f32.mrb[0].mxu0
    %v3112 = vadd.f32 %v2919, %v3111
    %v3113 = vpop.f32.mrb[0].mxu0
    %v3114 = vadd.f32 %v2921, %v3113
    %3115 = vmatprep.mubr.bf16.mxu0 %v1633
    %3116 = vmatmul.mubr.bf16.gmra.mrb[0].mxu0 %v1632
    %v3117 = vpop.f32.mrb[0].mxu0
    %v3118 = vadd.f32 %v2925, %v3117
    %v3119 = vpop.f32.mrb[0].mxu0
    %v3120 = vadd.f32 %v2927, %v3119
    %v3121 = vpop.f32.mrb[0].mxu0
    %v3122 = vadd.f32 %v2929, %v3121
    %v3123 = vpop.f32.mrb[0].mxu0
    %v3124 = vadd.f32 %v2931, %v3123
    %3125 = vmatprep.mubr.bf16.mxu0 %v1637
    %3126 = vmatmul.mubr.bf16.gmra.mrb[0].mxu0 %v1636
    %v3127 = vpop.f32.mrb[0].mxu0
    %v3128 = vadd.f32 %v2935, %v3127
    %v3129 = vpop.f32.mrb[0].mxu0
    %v3130 = vadd.f32 %v2937, %v3129
    %v3131 = vpop.f32.mrb[0].mxu0
    %v3132 = vadd.f32 %v2939, %v3131
    %v3133 = vpop.f32.mrb[0].mxu0
    %v3134 = vadd.f32 %v2941, %v3133
    %3135 = vmatprep.mubr.bf16.mxu0 %v1641
    %3136 = vmatmul.mubr.bf16.gmra.mrb[0].mxu0 %v1640
    %v3137 = vpop.f32.mrb[0].mxu0
    %v3138 = vadd.f32 %v2945, %v3137
    %v3139 = vpop.f32.mrb[0].mxu0
    %v3140 = vadd.f32 %v2947, %v3139
    %v3141 = vpop.f32.mrb[0].mxu0
    %v3142 = vadd.f32 %v2949, %v3141
    %v3143 = vpop.f32.mrb[0].mxu0
    %v3144 = vadd.f32 %v2951, %v3143
    %3145 = vmatprep.mubr.bf16.mxu0 %v1645
    %3146 = vmatmul.mubr.bf16.gmra.mrb[0].mxu0 %v1644
    %v3147 = vpop.f32.mrb[0].mxu0
    %v3148 = vadd.f32 %v2955, %v3147
    %v3149 = vpop.f32.mrb[0].mxu0
    %v3150 = vadd.f32 %v2957, %v3149
    %v3151 = vpop.f32.mrb[0].mxu0
    %v3152 = vadd.f32 %v2959, %v3151
    %v3153 = vpop.f32.mrb[0].mxu0
    %v3154 = vadd.f32 %v2961, %v3153
    %3155 = vmatprep.mubr.bf16.mxu0 %v1649
    %3156 = vmatmul.mubr.bf16.gmra.mrb[0].mxu0 %v1648
    %v3157 = vpop.f32.mrb[0].mxu0
    %v3158 = vadd.f32 %v2965, %v3157
    %v3159 = vpop.f32.mrb[0].mxu0
    %v3160 = vadd.f32 %v2967, %v3159
    %v3161 = vpop.f32.mrb[0].mxu0
    %v3162 = vadd.f32 %v2969, %v3161
    %v3163 = vpop.f32.mrb[0].mxu0
    %v3164 = vadd.f32 %v2971, %v3163
    %3165 = vmatprep.mubr.bf16.mxu0 %v1653
    %3166 = vmatmul.mubr.bf16.gmra.mrb[0].mxu0 %v1652
    %v3167 = vpop.f32.mrb[0].mxu0
    %v3168 = vadd.f32 %v2975, %v3167
    %v3169 = vpop.f32.mrb[0].mxu0
    %v3170 = vadd.f32 %v2977, %v3169
    %v3171 = vpop.f32.mrb[0].mxu0
    %v3172 = vadd.f32 %v2979, %v3171
    %v3173 = vpop.f32.mrb[0].mxu0
    %v3174 = vadd.f32 %v2981, %v3173
    %3175 = vmatprep.mubr.bf16.mxu0 %v1657
    %3176 = vmatmul.mubr.bf16.gmra.mrb[0].mxu0 %v1656
    %v3177 = vpop.f32.mrb[0].mxu0
    %v3178 = vadd.f32 %v2985, %v3177
    %v3179 = vpop.f32.mrb[0].mxu0
    %v3180 = vadd.f32 %v2987, %v3179
    %v3181 = vpop.f32.mrb[0].mxu0
    %v3182 = vadd.f32 %v2989, %v3181
    %v3183 = vpop.f32.mrb[0].mxu0
    %v3184 = vadd.f32 %v2991, %v3183
    %3185 = vmatprep.mubr.bf16.mxu0 %v1661
    %3186 = vmatmul.mubr.bf16.gmra.mrb[0].mxu0 %v1660
    %v3187 = vpop.f32.mrb[0].mxu0
    %v3188 = vadd.f32 %v2995, %v3187
    %v3189 = vpop.f32.mrb[0].mxu0
    %v3190 = vadd.f32 %v2997, %v3189
    %v3191 = vpop.f32.mrb[0].mxu0
    %v3192 = vadd.f32 %v2999, %v3191
    %v3193 = vpop.f32.mrb[0].mxu0
    %v3194 = vadd.f32 %v3001, %v3193
    %3195 = vmatprep.mubr.bf16.mxu0 %v1665
    %3196 = vmatmul.mubr.bf16.gmra.mrb[0].mxu0 %v1664
    %v3197 = vpop.f32.mrb[0].mxu0
    %v3198 = vadd.f32 %v3005, %v3197
    %v3199 = vpop.f32.mrb[0].mxu0
    %v3200 = vadd.f32 %v3007, %v3199
    %v3201 = vpop.f32.mrb[0].mxu0
    %v3202 = vadd.f32 %v3009, %v3201
    %v3203 = vpop.f32.mrb[0].mxu0
    %v3204 = vadd.f32 %v3011, %v3203
    %3205 = vdwg.mxu0
    %v3206 = vld [vmem:[%s5] sm:$0xf]
    %v3207 = vld [vmem:[%s6] sm:$0xf]
    %v3208 = vadd.f32 %v2662, %v2666
    %v3209 = vadd.f32 %v3208, %v2672
    %v3210 = vadd.f32 %v3209, %v2676
    %v3211 = vadd.f32 %v3210, %v2682
    %v3212 = vadd.f32 %v3211, %v2686
    %v3213 = vadd.f32 %v3212, %v2692
    %v3214 = vadd.f32 %v3213, %v2696
    %v3215 = vadd.f32 %v3214, %v2702
    %v3216 = vadd.f32 %v3215, %v2706
    %v3217 = vadd.f32 %v3216, %v2712
    %v3218 = vadd.f32 %v3217, %v2716
    %v3219 = vadd.f32 %v3218, %v2722
    %v3220 = vadd.f32 %v3219, %v2726
    %v3221 = vadd.f32 %v3220, %v2732
    %v3222 = vadd.f32 %v3221, %v2736
    %v3223 = vadd.f32 %v3222, %v2742
    %v3224 = vadd.f32 %v3223, %v2746
    %v3225 = vadd.f32 %v3224, %v2752
    %v3226 = vadd.f32 %v3225, %v2756
    %v3227 = vadd.f32 %v3226, %v2762
    %v3228 = vadd.f32 %v3227, %v2766
    %v3229 = vadd.f32 %v3228, %v2772
    %v3230 = vadd.f32 %v3229, %v2776
    %v3231 = vadd.f32 %v3230, %v2782
    %v3232 = vadd.f32 %v3231, %v2786
    %v3233 = vadd.f32 %v3232, %v2792
    %v3234 = vadd.f32 %v3233, %v2796
    %v3235 = vadd.f32 %v3234, %v2802
    %v3236 = vadd.f32 %v3235, %v2806
    %v3237 = vadd.f32 %v3236, %v2812
    %v3238 = vadd.f32 %v3237, %v2816
    %v3239 = vrot.slane %v3238, 4
    %v3240 = vadd.f32 %v3238, %v3239
    %v3241 = vrot.slane %v3240, 2
    %v3242 = vadd.f32 %v3240, %v3241
    %v3243 = vrot.slane %v3242, 1
    %v3244 = vadd.f32 %v3242, %v3243
    %v3245 = vadd.f32 %v2664, %v2668
    %v3246 = vadd.f32 %v3245, %v2674
    %v3247 = vadd.f32 %v3246, %v2678
    %v3248 = vadd.f32 %v3247, %v2684
    %v3249 = vadd.f32 %v3248, %v2688
    %v3250 = vadd.f32 %v3249, %v2694
    %v3251 = vadd.f32 %v3250, %v2698
    %v3252 = vadd.f32 %v3251, %v2704
    %v3253 = vadd.f32 %v3252, %v2708
    %v3254 = vadd.f32 %v3253, %v2714
    %v3255 = vadd.f32 %v3254, %v2718
    %v3256 = vadd.f32 %v3255, %v2724
    %v3257 = vadd.f32 %v3256, %v2728
    %v3258 = vadd.f32 %v3257, %v2734
    %v3259 = vadd.f32 %v3258, %v2738
    %v3260 = vadd.f32 %v3259, %v2744
    %v3261 = vadd.f32 %v3260, %v2748
    %v3262 = vadd.f32 %v3261, %v2754
    %v3263 = vadd.f32 %v3262, %v2758
    %v3264 = vadd.f32 %v3263, %v2764
    %v3265 = vadd.f32 %v3264, %v2768
    %v3266 = vadd.f32 %v3265, %v2774
    %v3267 = vadd.f32 %v3266, %v2778
    %v3268 = vadd.f32 %v3267, %v2784
    %v3269 = vadd.f32 %v3268, %v2788
    %v3270 = vadd.f32 %v3269, %v2794
    %v3271 = vadd.f32 %v3270, %v2798
    %v3272 = vadd.f32 %v3271, %v2804
    %v3273 = vadd.f32 %v3272, %v2808
    %v3274 = vadd.f32 %v3273, %v2814
    %v3275 = vadd.f32 %v3274, %v2818
    %v3276 = vrot.slane %v3275, 4
    %v3277 = vadd.f32 %v3275, %v3276
    %v3278 = vrot.slane %v3277, 2
    %v3279 = vadd.f32 %v3277, %v3278
    %v3280 = vrot.slane %v3279, 1
    %v3281 = vadd.f32 %v3279, %v3280
    %v3282 = vadd.f32 %v3048, %v3052
    %v3283 = vadd.f32 %v3282, %v3058
    %v3284 = vadd.f32 %v3283, %v3062
    %v3285 = vadd.f32 %v3284, %v3068
    %v3286 = vadd.f32 %v3285, %v3072
    %v3287 = vadd.f32 %v3286, %v3078
    %v3288 = vadd.f32 %v3287, %v3082
    %v3289 = vadd.f32 %v3288, %v3088
    %v3290 = vadd.f32 %v3289, %v3092
    %v3291 = vadd.f32 %v3290, %v3098
    %v3292 = vadd.f32 %v3291, %v3102
    %v3293 = vadd.f32 %v3292, %v3108
    %v3294 = vadd.f32 %v3293, %v3112
    %v3295 = vadd.f32 %v3294, %v3118
    %v3296 = vadd.f32 %v3295, %v3122
    %v3297 = vadd.f32 %v3296, %v3128
    %v3298 = vadd.f32 %v3297, %v3132
    %v3299 = vadd.f32 %v3298, %v3138
    %v3300 = vadd.f32 %v3299, %v3142
    %v3301 = vadd.f32 %v3300, %v3148
    %v3302 = vadd.f32 %v3301, %v3152
    %v3303 = vadd.f32 %v3302, %v3158
    %v3304 = vadd.f32 %v3303, %v3162
    %v3305 = vadd.f32 %v3304, %v3168
    %v3306 = vadd.f32 %v3305, %v3172
    %v3307 = vadd.f32 %v3306, %v3178
    %v3308 = vadd.f32 %v3307, %v3182
    %v3309 = vadd.f32 %v3308, %v3188
    %v3310 = vadd.f32 %v3309, %v3192
    %v3311 = vadd.f32 %v3310, %v3198
    %v3312 = vadd.f32 %v3311, %v3202
    %v3313 = vrot.slane %v3312, 4
    %v3314 = vadd.f32 %v3312, %v3313
    %v3315 = vrot.slane %v3314, 2
    %v3316 = vadd.f32 %v3314, %v3315
    %v3317 = vrot.slane %v3316, 1
    %v3318 = vadd.f32 %v3316, %v3317
    %v3319 = vadd.f32 %v3050, %v3054
    %v3320 = vadd.f32 %v3319, %v3060
    %v3321 = vadd.f32 %v3320, %v3064
    %v3322 = vadd.f32 %v3321, %v3070
    %v3323 = vadd.f32 %v3322, %v3074
    %v3324 = vadd.f32 %v3323, %v3080
    %v3325 = vadd.f32 %v3324, %v3084
    %v3326 = vadd.f32 %v3325, %v3090
    %v3327 = vadd.f32 %v3326, %v3094
    %v3328 = vadd.f32 %v3327, %v3100
    %v3329 = vadd.f32 %v3328, %v3104
    %v3330 = vadd.f32 %v3329, %v3110
    %v3331 = vadd.f32 %v3330, %v3114
    %v3332 = vadd.f32 %v3331, %v3120
    %v3333 = vadd.f32 %v3332, %v3124
    %v3334 = vadd.f32 %v3333, %v3130
    %v3335 = vadd.f32 %v3334, %v3134
    %v3336 = vadd.f32 %v3335, %v3140
    %v3337 = vadd.f32 %v3336, %v3144
    %v3338 = vadd.f32 %v3337, %v3150
    %v3339 = vadd.f32 %v3338, %v3154
    %v3340 = vadd.f32 %v3339, %v3160
    %v3341 = vadd.f32 %v3340, %v3164
    %v3342 = vadd.f32 %v3341, %v3170
    %v3343 = vadd.f32 %v3342, %v3174
    %v3344 = vadd.f32 %v3343, %v3180
    %v3345 = vadd.f32 %v3344, %v3184
    %v3346 = vadd.f32 %v3345, %v3190
    %v3347 = vadd.f32 %v3346, %v3194
    %v3348 = vadd.f32 %v3347, %v3200
    %v3349 = vadd.f32 %v3348, %v3204
    %v3350 = vrot.slane %v3349, 4
    %v3351 = vadd.f32 %v3349, %v3350
    %v3352 = vrot.slane %v3351, 2
    %v3353 = vadd.f32 %v3351, %v3352
    %v3354 = vrot.slane %v3353, 1
    %v3355 = vadd.f32 %v3353, %v3354
    %v3356 = vmul.f32 %v3244, 0.00390625
    %v3357 = vmul.f32 %v3281, 0.00390625
    %v3358 = vmul.f32 %v3318, 0.00390625
    %v3359 = vmul.f32 %v3355, 0.00390625
    %v3360 = vsub.f32 %v2662, %v3356
    %v3361 = vsub.f32 %v2664, %v3357
    %v3362 = vsub.f32 %v3048, %v3358
    %v3363 = vsub.f32 %v3050, %v3359
    %v3364 = vsub.f32 %v2666, %v3356
    %v3365 = vsub.f32 %v2668, %v3357
    %v3366 = vsub.f32 %v3052, %v3358
    %v3367 = vsub.f32 %v3054, %v3359
    %v3368 = vsub.f32 %v2672, %v3356
    %v3369 = vsub.f32 %v2674, %v3357
    %v3370 = vsub.f32 %v3058, %v3358
    %v3371 = vsub.f32 %v3060, %v3359
    %v3372 = vsub.f32 %v2676, %v3356
    %v3373 = vsub.f32 %v2678, %v3357
    %v3374 = vsub.f32 %v3062, %v3358
    %v3375 = vsub.f32 %v3064, %v3359
    %v3376 = vsub.f32 %v2682, %v3356
    %v3377 = vsub.f32 %v2684, %v3357
    %v3378 = vsub.f32 %v3068, %v3358
    %v3379 = vsub.f32 %v3070, %v3359
    %v3380 = vsub.f32 %v2686, %v3356
    %v3381 = vsub.f32 %v2688, %v3357
    %v3382 = vsub.f32 %v3072, %v3358
    %v3383 = vsub.f32 %v3074, %v3359
    %v3384 = vsub.f32 %v2692, %v3356
    %v3385 = vsub.f32 %v2694, %v3357
    %v3386 = vsub.f32 %v3078, %v3358
    %v3387 = vsub.f32 %v3080, %v3359
    %v3388 = vsub.f32 %v2696, %v3356
    %v3389 = vsub.f32 %v2698, %v3357
    %v3390 = vsub.f32 %v3082, %v3358
    %v3391 = vsub.f32 %v3084, %v3359
    %v3392 = vsub.f32 %v2702, %v3356
    %v3393 = vsub.f32 %v2704, %v3357
    %v3394 = vsub.f32 %v3088, %v3358
    %v3395 = vsub.f32 %v3090, %v3359
    %v3396 = vsub.f32 %v2706, %v3356
    %v3397 = vsub.f32 %v2708, %v3357
    %v3398 = vsub.f32 %v3092, %v3358
    %v3399 = vsub.f32 %v3094, %v3359
    %v3400 = vsub.f32 %v2712, %v3356
    %v3401 = vsub.f32 %v2714, %v3357
    %v3402 = vsub.f32 %v3098, %v3358
    %v3403 = vsub.f32 %v3100, %v3359
    %v3404 = vsub.f32 %v2716, %v3356
    %v3405 = vsub.f32 %v2718, %v3357
    %v3406 = vsub.f32 %v3102, %v3358
    %v3407 = vsub.f32 %v3104, %v3359
    %v3408 = vsub.f32 %v2722, %v3356
    %v3409 = vsub.f32 %v2724, %v3357
    %v3410 = vsub.f32 %v3108, %v3358
    %v3411 = vsub.f32 %v3110, %v3359
    %v3412 = vsub.f32 %v2726, %v3356
    %v3413 = vsub.f32 %v2728, %v3357
    %v3414 = vsub.f32 %v3112, %v3358
    %v3415 = vsub.f32 %v3114, %v3359
    %v3416 = vsub.f32 %v2732, %v3356
    %v3417 = vsub.f32 %v2734, %v3357
    %v3418 = vsub.f32 %v3118, %v3358
    %v3419 = vsub.f32 %v3120, %v3359
    %v3420 = vsub.f32 %v2736, %v3356
    %v3421 = vsub.f32 %v2738, %v3357
    %v3422 = vsub.f32 %v3122, %v3358
    %v3423 = vsub.f32 %v3124, %v3359
    %v3424 = vsub.f32 %v2742, %v3356
    %v3425 = vsub.f32 %v2744, %v3357
    %v3426 = vsub.f32 %v3128, %v3358
    %v3427 = vsub.f32 %v3130, %v3359
    %v3428 = vsub.f32 %v2746, %v3356
    %v3429 = vsub.f32 %v2748, %v3357
    %v3430 = vsub.f32 %v3132, %v3358
    %v3431 = vsub.f32 %v3134, %v3359
    %v3432 = vsub.f32 %v2752, %v3356
    %v3433 = vsub.f32 %v2754, %v3357
    %v3434 = vsub.f32 %v3138, %v3358
    %v3435 = vsub.f32 %v3140, %v3359
    %v3436 = vsub.f32 %v2756, %v3356
    %v3437 = vsub.f32 %v2758, %v3357
    %v3438 = vsub.f32 %v3142, %v3358
    %v3439 = vsub.f32 %v3144, %v3359
    %v3440 = vsub.f32 %v2762, %v3356
    %v3441 = vsub.f32 %v2764, %v3357
    %v3442 = vsub.f32 %v3148, %v3358
    %v3443 = vsub.f32 %v3150, %v3359
    %v3444 = vsub.f32 %v2766, %v3356
    %v3445 = vsub.f32 %v2768, %v3357
    %v3446 = vsub.f32 %v3152, %v3358
    %v3447 = vsub.f32 %v3154, %v3359
    %v3448 = vsub.f32 %v2772, %v3356
    %v3449 = vsub.f32 %v2774, %v3357
    %v3450 = vsub.f32 %v3158, %v3358
    %v3451 = vsub.f32 %v3160, %v3359
    %v3452 = vsub.f32 %v2776, %v3356
    %v3453 = vsub.f32 %v2778, %v3357
    %v3454 = vsub.f32 %v3162, %v3358
    %v3455 = vsub.f32 %v3164, %v3359
    %v3456 = vsub.f32 %v2782, %v3356
    %v3457 = vsub.f32 %v2784, %v3357
    %v3458 = vsub.f32 %v3168, %v3358
    %v3459 = vsub.f32 %v3170, %v3359
    %v3460 = vsub.f32 %v2786, %v3356
    %v3461 = vsub.f32 %v2788, %v3357
    %v3462 = vsub.f32 %v3172, %v3358
    %v3463 = vsub.f32 %v3174, %v3359
    %v3464 = vsub.f32 %v2792, %v3356
    %v3465 = vsub.f32 %v2794, %v3357
    %v3466 = vsub.f32 %v3178, %v3358
    %v3467 = vsub.f32 %v3180, %v3359
    %v3468 = vsub.f32 %v2796, %v3356
    %v3469 = vsub.f32 %v2798, %v3357
    %v3470 = vsub.f32 %v3182, %v3358
    %v3471 = vsub.f32 %v3184, %v3359
    %v3472 = vsub.f32 %v2802, %v3356
    %v3473 = vsub.f32 %v2804, %v3357
    %v3474 = vsub.f32 %v3188, %v3358
    %v3475 = vsub.f32 %v3190, %v3359
    %v3476 = vsub.f32 %v2806, %v3356
    %v3477 = vsub.f32 %v2808, %v3357
    %v3478 = vsub.f32 %v3192, %v3358
    %v3479 = vsub.f32 %v3194, %v3359
    %v3480 = vsub.f32 %v2812, %v3356
    %v3481 = vsub.f32 %v2814, %v3357
    %v3482 = vsub.f32 %v3198, %v3358
    %v3483 = vsub.f32 %v3200, %v3359
    %v3484 = vsub.f32 %v2816, %v3356
    %v3485 = vsub.f32 %v2818, %v3357
    %v3486 = vsub.f32 %v3202, %v3358
    %v3487 = vsub.f32 %v3204, %v3359
    %v3488 = vmul.f32 %v3360, %v3360
    %v3489 = vmul.f32 %v3361, %v3361
    %v3490 = vmul.f32 %v3362, %v3362
    %v3491 = vmul.f32 %v3363, %v3363
    %v3492 = vmul.f32 %v3364, %v3364
    %v3493 = vmul.f32 %v3365, %v3365
    %v3494 = vmul.f32 %v3366, %v3366
    %v3495 = vmul.f32 %v3367, %v3367
    %v3496 = vmul.f32 %v3368, %v3368
    %v3497 = vmul.f32 %v3369, %v3369
    %v3498 = vmul.f32 %v3370, %v3370
    %v3499 = vmul.f32 %v3371, %v3371
    %v3500 = vmul.f32 %v3372, %v3372
    %v3501 = vmul.f32 %v3373, %v3373
    %v3502 = vmul.f32 %v3374, %v3374
    %v3503 = vmul.f32 %v3375, %v3375
    %v3504 = vmul.f32 %v3376, %v3376
    %v3505 = vmul.f32 %v3377, %v3377
    %v3506 = vmul.f32 %v3378, %v3378
    %v3507 = vmul.f32 %v3379, %v3379
    %v3508 = vmul.f32 %v3380, %v3380
    %v3509 = vmul.f32 %v3381, %v3381
    %v3510 = vmul.f32 %v3382, %v3382
    %v3511 = vmul.f32 %v3383, %v3383
    %v3512 = vmul.f32 %v3384, %v3384
    %v3513 = vmul.f32 %v3385, %v3385
    %v3514 = vmul.f32 %v3386, %v3386
    %v3515 = vmul.f32 %v3387, %v3387
    %v3516 = vmul.f32 %v3388, %v3388
    %v3517 = vmul.f32 %v3389, %v3389
    %v3518 = vmul.f32 %v3390, %v3390
    %v3519 = vmul.f32 %v3391, %v3391
    %v3520 = vmul.f32 %v3392, %v3392
    %v3521 = vmul.f32 %v3393, %v3393
    %v3522 = vmul.f32 %v3394, %v3394
    %v3523 = vmul.f32 %v3395, %v3395
    %v3524 = vmul.f32 %v3396, %v3396
    %v3525 = vmul.f32 %v3397, %v3397
    %v3526 = vmul.f32 %v3398, %v3398
    %v3527 = vmul.f32 %v3399, %v3399
    %v3528 = vmul.f32 %v3400, %v3400
    %v3529 = vmul.f32 %v3401, %v3401
    %v3530 = vmul.f32 %v3402, %v3402
    %v3531 = vmul.f32 %v3403, %v3403
    %v3532 = vmul.f32 %v3404, %v3404
    %v3533 = vmul.f32 %v3405, %v3405
    %v3534 = vmul.f32 %v3406, %v3406
    %v3535 = vmul.f32 %v3407, %v3407
    %v3536 = vmul.f32 %v3408, %v3408
    %v3537 = vmul.f32 %v3409, %v3409
    %v3538 = vmul.f32 %v3410, %v3410
    %v3539 = vmul.f32 %v3411, %v3411
    %v3540 = vmul.f32 %v3412, %v3412
    %v3541 = vmul.f32 %v3413, %v3413
    %v3542 = vmul.f32 %v3414, %v3414
    %v3543 = vmul.f32 %v3415, %v3415
    %v3544 = vmul.f32 %v3416, %v3416
    %v3545 = vmul.f32 %v3417, %v3417
    %v3546 = vmul.f32 %v3418, %v3418
    %v3547 = vmul.f32 %v3419, %v3419
    %v3548 = vmul.f32 %v3420, %v3420
    %v3549 = vmul.f32 %v3421, %v3421
    %v3550 = vmul.f32 %v3422, %v3422
    %v3551 = vmul.f32 %v3423, %v3423
    %v3552 = vmul.f32 %v3424, %v3424
    %v3553 = vmul.f32 %v3425, %v3425
    %v3554 = vmul.f32 %v3426, %v3426
    %v3555 = vmul.f32 %v3427, %v3427
    %v3556 = vmul.f32 %v3428, %v3428
    %v3557 = vmul.f32 %v3429, %v3429
    %v3558 = vmul.f32 %v3430, %v3430
    %v3559 = vmul.f32 %v3431, %v3431
    %v3560 = vmul.f32 %v3432, %v3432
    %v3561 = vmul.f32 %v3433, %v3433
    %v3562 = vmul.f32 %v3434, %v3434
    %v3563 = vmul.f32 %v3435, %v3435
    %v3564 = vmul.f32 %v3436, %v3436
    %v3565 = vmul.f32 %v3437, %v3437
    %v3566 = vmul.f32 %v3438, %v3438
    %v3567 = vmul.f32 %v3439, %v3439
    %v3568 = vmul.f32 %v3440, %v3440
    %v3569 = vmul.f32 %v3441, %v3441
    %v3570 = vmul.f32 %v3442, %v3442
    %v3571 = vmul.f32 %v3443, %v3443
    %v3572 = vmul.f32 %v3444, %v3444
    %v3573 = vmul.f32 %v3445, %v3445
    %v3574 = vmul.f32 %v3446, %v3446
    %v3575 = vmul.f32 %v3447, %v3447
    %v3576 = vmul.f32 %v3448, %v3448
    %v3577 = vmul.f32 %v3449, %v3449
    %v3578 = vmul.f32 %v3450, %v3450
    %v3579 = vmul.f32 %v3451, %v3451
    %v3580 = vmul.f32 %v3452, %v3452
    %v3581 = vmul.f32 %v3453, %v3453
    %v3582 = vmul.f32 %v3454, %v3454
    %v3583 = vmul.f32 %v3455, %v3455
    %v3584 = vmul.f32 %v3456, %v3456
    %v3585 = vmul.f32 %v3457, %v3457
    %v3586 = vmul.f32 %v3458, %v3458
    %v3587 = vmul.f32 %v3459, %v3459
    %v3588 = vmul.f32 %v3460, %v3460
    %v3589 = vmul.f32 %v3461, %v3461
    %v3590 = vmul.f32 %v3462, %v3462
    %v3591 = vmul.f32 %v3463, %v3463
    %v3592 = vmul.f32 %v3464, %v3464
    %v3593 = vmul.f32 %v3465, %v3465
    %v3594 = vmul.f32 %v3466, %v3466
    %v3595 = vmul.f32 %v3467, %v3467
    %v3596 = vmul.f32 %v3468, %v3468
    %v3597 = vmul.f32 %v3469, %v3469
    %v3598 = vmul.f32 %v3470, %v3470
    %v3599 = vmul.f32 %v3471, %v3471
    %v3600 = vmul.f32 %v3472, %v3472
    %v3601 = vmul.f32 %v3473, %v3473
    %v3602 = vmul.f32 %v3474, %v3474
    %v3603 = vmul.f32 %v3475, %v3475
    %v3604 = vmul.f32 %v3476, %v3476
    %v3605 = vmul.f32 %v3477, %v3477
    %v3606 = vmul.f32 %v3478, %v3478
    %v3607 = vmul.f32 %v3479, %v3479
    %v3608 = vmul.f32 %v3480, %v3480
    %v3609 = vmul.f32 %v3481, %v3481
    %v3610 = vmul.f32 %v3482, %v3482
    %v3611 = vmul.f32 %v3483, %v3483
    %v3612 = vmul.f32 %v3484, %v3484
    %v3613 = vmul.f32 %v3485, %v3485
    %v3614 = vmul.f32 %v3486, %v3486
    %v3615 = vmul.f32 %v3487, %v3487
    %v3616 = vadd.f32 %v3488, %v3492
    %v3617 = vadd.f32 %v3616, %v3496
    %v3618 = vadd.f32 %v3617, %v3500
    %v3619 = vadd.f32 %v3618, %v3504
    %v3620 = vadd.f32 %v3619, %v3508
    %v3621 = vadd.f32 %v3620, %v3512
    %v3622 = vadd.f32 %v3621, %v3516
    %v3623 = vadd.f32 %v3622, %v3520
    %v3624 = vadd.f32 %v3623, %v3524
    %v3625 = vadd.f32 %v3624, %v3528
    %v3626 = vadd.f32 %v3625, %v3532
    %v3627 = vadd.f32 %v3626, %v3536
    %v3628 = vadd.f32 %v3627, %v3540
    %v3629 = vadd.f32 %v3628, %v3544
    %v3630 = vadd.f32 %v3629, %v3548
    %v3631 = vadd.f32 %v3630, %v3552
    %v3632 = vadd.f32 %v3631, %v3556
    %v3633 = vadd.f32 %v3632, %v3560
    %v3634 = vadd.f32 %v3633, %v3564
    %v3635 = vadd.f32 %v3634, %v3568
    %v3636 = vadd.f32 %v3635, %v3572
    %v3637 = vadd.f32 %v3636, %v3576
    %v3638 = vadd.f32 %v3637, %v3580
    %v3639 = vadd.f32 %v3638, %v3584
    %v3640 = vadd.f32 %v3639, %v3588
    %v3641 = vadd.f32 %v3640, %v3592
    %v3642 = vadd.f32 %v3641, %v3596
    %v3643 = vadd.f32 %v3642, %v3600
    %v3644 = vadd.f32 %v3643, %v3604
    %v3645 = vadd.f32 %v3644, %v3608
    %v3646 = vadd.f32 %v3645, %v3612
    %v3647 = vrot.slane %v3646, 4
    %v3648 = vadd.f32 %v3646, %v3647
    %v3649 = vrot.slane %v3648, 2
    %v3650 = vadd.f32 %v3648, %v3649
    %v3651 = vrot.slane %v3650, 1
    %v3652 = vadd.f32 %v3650, %v3651
    %v3653 = vadd.f32 %v3489, %v3493
    %v3654 = vadd.f32 %v3653, %v3497
    %v3655 = vadd.f32 %v3654, %v3501
    %v3656 = vadd.f32 %v3655, %v3505
    %v3657 = vadd.f32 %v3656, %v3509
    %v3658 = vadd.f32 %v3657, %v3513
    %v3659 = vadd.f32 %v3658, %v3517
    %v3660 = vadd.f32 %v3659, %v3521
    %v3661 = vadd.f32 %v3660, %v3525
    %v3662 = vadd.f32 %v3661, %v3529
    %v3663 = vadd.f32 %v3662, %v3533
    %v3664 = vadd.f32 %v3663, %v3537
    %v3665 = vadd.f32 %v3664, %v3541
    %v3666 = vadd.f32 %v3665, %v3545
    %v3667 = vadd.f32 %v3666, %v3549
    %v3668 = vadd.f32 %v3667, %v3553
    %v3669 = vadd.f32 %v3668, %v3557
    %v3670 = vadd.f32 %v3669, %v3561
    %v3671 = vadd.f32 %v3670, %v3565
    %v3672 = vadd.f32 %v3671, %v3569
    %v3673 = vadd.f32 %v3672, %v3573
    %v3674 = vadd.f32 %v3673, %v3577
    %v3675 = vadd.f32 %v3674, %v3581
    %v3676 = vadd.f32 %v3675, %v3585
    %v3677 = vadd.f32 %v3676, %v3589
    %v3678 = vadd.f32 %v3677, %v3593
    %v3679 = vadd.f32 %v3678, %v3597
    %v3680 = vadd.f32 %v3679, %v3601
    %v3681 = vadd.f32 %v3680, %v3605
    %v3682 = vadd.f32 %v3681, %v3609
    %v3683 = vadd.f32 %v3682, %v3613
    %v3684 = vrot.slane %v3683, 4
    %v3685 = vadd.f32 %v3683, %v3684
    %v3686 = vrot.slane %v3685, 2
    %v3687 = vadd.f32 %v3685, %v3686
    %v3688 = vrot.slane %v3687, 1
    %v3689 = vadd.f32 %v3687, %v3688
    %v3690 = vadd.f32 %v3490, %v3494
    %v3691 = vadd.f32 %v3690, %v3498
    %v3692 = vadd.f32 %v3691, %v3502
    %v3693 = vadd.f32 %v3692, %v3506
    %v3694 = vadd.f32 %v3693, %v3510
    %v3695 = vadd.f32 %v3694, %v3514
    %v3696 = vadd.f32 %v3695, %v3518
    %v3697 = vadd.f32 %v3696, %v3522
    %v3698 = vadd.f32 %v3697, %v3526
    %v3699 = vadd.f32 %v3698, %v3530
    %v3700 = vadd.f32 %v3699, %v3534
    %v3701 = vadd.f32 %v3700, %v3538
    %v3702 = vadd.f32 %v3701, %v3542
    %v3703 = vadd.f32 %v3702, %v3546
    %v3704 = vadd.f32 %v3703, %v3550
    %v3705 = vadd.f32 %v3704, %v3554
    %v3706 = vadd.f32 %v3705, %v3558
    %v3707 = vadd.f32 %v3706, %v3562
    %v3708 = vadd.f32 %v3707, %v3566
    %v3709 = vadd.f32 %v3708, %v3570
    %v3710 = vadd.f32 %v3709, %v3574
    %v3711 = vadd.f32 %v3710, %v3578
    %v3712 = vadd.f32 %v3711, %v3582
    %v3713 = vadd.f32 %v3712, %v3586
    %v3714 = vadd.f32 %v3713, %v3590
    %v3715 = vadd.f32 %v3714, %v3594
    %v3716 = vadd.f32 %v3715, %v3598
    %v3717 = vadd.f32 %v3716, %v3602
    %v3718 = vadd.f32 %v3717, %v3606
    %v3719 = vadd.f32 %v3718, %v3610
    %v3720 = vadd.f32 %v3719, %v3614
    %v3721 = vrot.slane %v3720, 4
    %v3722 = vadd.f32 %v3720, %v3721
    %v3723 = vrot.slane %v3722, 2
    %v3724 = vadd.f32 %v3722, %v3723
    %v3725 = vrot.slane %v3724, 1
    %v3726 = vadd.f32 %v3724, %v3725
    %v3727 = vadd.f32 %v3491, %v3495
    %v3728 = vadd.f32 %v3727, %v3499
    %v3729 = vadd.f32 %v3728, %v3503
    %v3730 = vadd.f32 %v3729, %v3507
    %v3731 = vadd.f32 %v3730, %v3511
    %v3732 = vadd.f32 %v3731, %v3515
    %v3733 = vadd.f32 %v3732, %v3519
    %v3734 = vadd.f32 %v3733, %v3523
    %v3735 = vadd.f32 %v3734, %v3527
    %v3736 = vadd.f32 %v3735, %v3531
    %v3737 = vadd.f32 %v3736, %v3535
    %v3738 = vadd.f32 %v3737, %v3539
    %v3739 = vadd.f32 %v3738, %v3543
    %v3740 = vadd.f32 %v3739, %v3547
    %v3741 = vadd.f32 %v3740, %v3551
    %v3742 = vadd.f32 %v3741, %v3555
    %v3743 = vadd.f32 %v3742, %v3559
    %v3744 = vadd.f32 %v3743, %v3563
    %v3745 = vadd.f32 %v3744, %v3567
    %v3746 = vadd.f32 %v3745, %v3571
    %v3747 = vadd.f32 %v3746, %v3575
    %v3748 = vadd.f32 %v3747, %v3579
    %v3749 = vadd.f32 %v3748, %v3583
    %v3750 = vadd.f32 %v3749, %v3587
    %v3751 = vadd.f32 %v3750, %v3591
    %v3752 = vadd.f32 %v3751, %v3595
    %v3753 = vadd.f32 %v3752, %v3599
    %v3754 = vadd.f32 %v3753, %v3603
    %v3755 = vadd.f32 %v3754, %v3607
    %v3756 = vadd.f32 %v3755, %v3611
    %v3757 = vadd.f32 %v3756, %v3615
    %v3758 = vrot.slane %v3757, 4
    %v3759 = vadd.f32 %v3757, %v3758
    %v3760 = vrot.slane %v3759, 2
    %v3761 = vadd.f32 %v3759, %v3760
    %v3762 = vrot.slane %v3761, 1
    %v3763 = vadd.f32 %v3761, %v3762
    %v3764 = vmul.f32 %v3652, 0.00390625
    %v3765 = vmul.f32 %v3689, 0.00390625
    %v3766 = vmul.f32 %v3726, 0.00390625
    %v3767 = vmul.f32 %v3763, 0.00390625
    %v3768 = vadd.f32 %v3764, 1e-05
    %v3769 = vadd.f32 %v3765, 1e-05
    %v3770 = vadd.f32 %v3766, 1e-05
    %v3771 = vadd.f32 %v3767, 1e-05
    %v3772 = vrsqrt.pop %v3768
    %v3773 = vrsqrt.pop %v3769
    %v3774 = vrsqrt.pop %v3770
    %v3775 = vrsqrt.pop %v3771
    %v3780 = vcombine.low %v3772, %v3773
    %v3781 = vcombine.low %v3774, %v3775
    %v3783 = vunpack.c.l.s4 1966171168
    %v3784 = vunpack.c.0.s8 %v3783
    %v3785 = vlaneseq
    %v3786 = vshrl.u32 %v3785, 7
    %v3787 = vsub.s32 %v3784, %v3786
    %v3788 = vrot.slane %v3780, %v3787
    %v3790 = vunpack.c.l.s4 1966171168
    %v3791 = vunpack.c.0.s8 %v3790
    %v3792 = vlaneseq
    %v3793 = vshrl.u32 %v3792, 7
    %v3794 = vsub.s32 %v3791, %v3793
    %v3795 = vrot.slane %v3781, %v3794
    %v3796 = vcombine.low %v3788, %v3795
    %v3798 = vunpack.c.l.s4 1966171168
    %v3799 = vunpack.c.0.s8 %v3798
    %v3800 = vlaneseq
    %v3801 = vshrl.u32 %v3800, 7
    %v3802 = vsub.s32 %v3799, %v3801
    %v3803 = vrot.slane %v3796, %v3802
    %v3805 = vmul.f32 %v3206, %v3803
    %v3807 = vlaneseq
    %v3808 = vshrl.u32 %v3807, 7
    %v3809 = vsub.s32 0, %v3808
    %v3810 = vrot.slane %v3805, %v3809
    %v3811 = vlaneseq
    %v3812 = vshrl.u32 %v3811, 7
    %v3813 = vsub.s32 1, %v3812
    %v3814 = vrot.slane %v3805, %v3813
    %v3815 = vlaneseq
    %v3816 = vshrl.u32 %v3815, 7
    %v3817 = vsub.s32 2, %v3816
    %v3818 = vrot.slane %v3805, %v3817
    %v3819 = vlaneseq
    %v3820 = vshrl.u32 %v3819, 7
    %v3821 = vsub.s32 3, %v3820
    %v3822 = vrot.slane %v3805, %v3821
    %v3827 = vmul.f32 %v3360, %v3810
    %v3828 = vmul.f32 %v3361, %v3814
    %v3829 = vmul.f32 %v3362, %v3818
    %v3830 = vmul.f32 %v3363, %v3822
    %v3831 = vmul.f32 %v3364, %v3810
    %v3832 = vmul.f32 %v3365, %v3814
    %v3833 = vmul.f32 %v3366, %v3818
    %v3834 = vmul.f32 %v3367, %v3822
    %v3835 = vmul.f32 %v3368, %v3810
    %v3836 = vmul.f32 %v3369, %v3814
    %v3837 = vmul.f32 %v3370, %v3818
    %v3838 = vmul.f32 %v3371, %v3822
    %v3839 = vmul.f32 %v3372, %v3810
    %v3840 = vmul.f32 %v3373, %v3814
    %v3841 = vmul.f32 %v3374, %v3818
    %v3842 = vmul.f32 %v3375, %v3822
    %v3843 = vmul.f32 %v3376, %v3810
    %v3844 = vmul.f32 %v3377, %v3814
    %v3845 = vmul.f32 %v3378, %v3818
    %v3846 = vmul.f32 %v3379, %v3822
    %v3847 = vmul.f32 %v3380, %v3810
    %v3848 = vmul.f32 %v3381, %v3814
    %v3849 = vmul.f32 %v3382, %v3818
    %v3850 = vmul.f32 %v3383, %v3822
    %v3851 = vmul.f32 %v3384, %v3810
    %v3852 = vmul.f32 %v3385, %v3814
    %v3853 = vmul.f32 %v3386, %v3818
    %v3854 = vmul.f32 %v3387, %v3822
    %v3855 = vmul.f32 %v3388, %v3810
    %v3856 = vmul.f32 %v3389, %v3814
    %v3857 = vmul.f32 %v3390, %v3818
    %v3858 = vmul.f32 %v3391, %v3822
    %v3859 = vmul.f32 %v3392, %v3810
    %v3860 = vmul.f32 %v3393, %v3814
    %v3861 = vmul.f32 %v3394, %v3818
    %v3862 = vmul.f32 %v3395, %v3822
    %v3863 = vmul.f32 %v3396, %v3810
    %v3864 = vmul.f32 %v3397, %v3814
    %v3865 = vmul.f32 %v3398, %v3818
    %v3866 = vmul.f32 %v3399, %v3822
    %v3867 = vmul.f32 %v3400, %v3810
    %v3868 = vmul.f32 %v3401, %v3814
    %v3869 = vmul.f32 %v3402, %v3818
    %v3870 = vmul.f32 %v3403, %v3822
    %v3871 = vmul.f32 %v3404, %v3810
    %v3872 = vmul.f32 %v3405, %v3814
    %v3873 = vmul.f32 %v3406, %v3818
    %v3874 = vmul.f32 %v3407, %v3822
    %v3875 = vmul.f32 %v3408, %v3810
    %v3876 = vmul.f32 %v3409, %v3814
    %v3877 = vmul.f32 %v3410, %v3818
    %v3878 = vmul.f32 %v3411, %v3822
    %v3879 = vmul.f32 %v3412, %v3810
    %v3880 = vmul.f32 %v3413, %v3814
    %v3881 = vmul.f32 %v3414, %v3818
    %v3882 = vmul.f32 %v3415, %v3822
    %v3883 = vmul.f32 %v3416, %v3810
    %v3884 = vmul.f32 %v3417, %v3814
    %v3885 = vmul.f32 %v3418, %v3818
    %v3886 = vmul.f32 %v3419, %v3822
    %v3887 = vmul.f32 %v3420, %v3810
    %v3888 = vmul.f32 %v3421, %v3814
    %v3889 = vmul.f32 %v3422, %v3818
    %v3890 = vmul.f32 %v3423, %v3822
    %v3891 = vmul.f32 %v3424, %v3810
    %v3892 = vmul.f32 %v3425, %v3814
    %v3893 = vmul.f32 %v3426, %v3818
    %v3894 = vmul.f32 %v3427, %v3822
    %v3895 = vmul.f32 %v3428, %v3810
    %v3896 = vmul.f32 %v3429, %v3814
    %v3897 = vmul.f32 %v3430, %v3818
    %v3898 = vmul.f32 %v3431, %v3822
    %v3899 = vmul.f32 %v3432, %v3810
    %v3900 = vmul.f32 %v3433, %v3814
    %v3901 = vmul.f32 %v3434, %v3818
    %v3902 = vmul.f32 %v3435, %v3822
    %v3903 = vmul.f32 %v3436, %v3810
    %v3904 = vmul.f32 %v3437, %v3814
    %v3905 = vmul.f32 %v3438, %v3818
    %v3906 = vmul.f32 %v3439, %v3822
    %v3907 = vmul.f32 %v3440, %v3810
    %v3908 = vmul.f32 %v3441, %v3814
    %v3909 = vmul.f32 %v3442, %v3818
    %v3910 = vmul.f32 %v3443, %v3822
    %v3911 = vmul.f32 %v3444, %v3810
    %v3912 = vmul.f32 %v3445, %v3814
    %v3913 = vmul.f32 %v3446, %v3818
    %v3914 = vmul.f32 %v3447, %v3822
    %v3915 = vmul.f32 %v3448, %v3810
    %v3916 = vmul.f32 %v3449, %v3814
    %v3917 = vmul.f32 %v3450, %v3818
    %v3918 = vmul.f32 %v3451, %v3822
    %v3919 = vmul.f32 %v3452, %v3810
    %v3920 = vmul.f32 %v3453, %v3814
    %v3921 = vmul.f32 %v3454, %v3818
    %v3922 = vmul.f32 %v3455, %v3822
    %v3923 = vmul.f32 %v3456, %v3810
    %v3924 = vmul.f32 %v3457, %v3814
    %v3925 = vmul.f32 %v3458, %v3818
    %v3926 = vmul.f32 %v3459, %v3822
    %v3927 = vmul.f32 %v3460, %v3810
    %v3928 = vmul.f32 %v3461, %v3814
    %v3929 = vmul.f32 %v3462, %v3818
    %v3930 = vmul.f32 %v3463, %v3822
    %v3931 = vmul.f32 %v3464, %v3810
    %v3932 = vmul.f32 %v3465, %v3814
    %v3933 = vmul.f32 %v3466, %v3818
    %v3934 = vmul.f32 %v3467, %v3822
    %v3935 = vmul.f32 %v3468, %v3810
    %v3936 = vmul.f32 %v3469, %v3814
    %v3937 = vmul.f32 %v3470, %v3818
    %v3938 = vmul.f32 %v3471, %v3822
    %v3939 = vmul.f32 %v3472, %v3810
    %v3940 = vmul.f32 %v3473, %v3814
    %v3941 = vmul.f32 %v3474, %v3818
    %v3942 = vmul.f32 %v3475, %v3822
    %v3943 = vmul.f32 %v3476, %v3810
    %v3944 = vmul.f32 %v3477, %v3814
    %v3945 = vmul.f32 %v3478, %v3818
    %v3946 = vmul.f32 %v3479, %v3822
    %v3947 = vmul.f32 %v3480, %v3810
    %v3948 = vmul.f32 %v3481, %v3814
    %v3949 = vmul.f32 %v3482, %v3818
    %v3950 = vmul.f32 %v3483, %v3822
    %v3951 = vmul.f32 %v3484, %v3810
    %v3952 = vmul.f32 %v3485, %v3814
    %v3953 = vmul.f32 %v3486, %v3818
    %v3954 = vmul.f32 %v3487, %v3822
    %v3956 = vlaneseq
    %v3957 = vshrl.u32 %v3956, 7
    %v3958 = vsub.s32 0, %v3957
    %v3959 = vrot.slane %v3207, %v3958
    %v3960 = vlaneseq
    %v3961 = vshrl.u32 %v3960, 7
    %v3962 = vsub.s32 1, %v3961
    %v3963 = vrot.slane %v3207, %v3962
    %v3964 = vlaneseq
    %v3965 = vshrl.u32 %v3964, 7
    %v3966 = vsub.s32 2, %v3965
    %v3967 = vrot.slane %v3207, %v3966
    %v3968 = vlaneseq
    %v3969 = vshrl.u32 %v3968, 7
    %v3970 = vsub.s32 3, %v3969
    %v3971 = vrot.slane %v3207, %v3970
    %v3976 = vadd.f32 %v3827, %v3959
    %v3977 = vadd.f32 %v3828, %v3963
    %v3978 = vadd.f32 %v3829, %v3967
    %v3979 = vadd.f32 %v3830, %v3971
    %v3980 = vadd.f32 %v3831, %v3959
    %v3981 = vadd.f32 %v3832, %v3963
    %v3982 = vadd.f32 %v3833, %v3967
    %v3983 = vadd.f32 %v3834, %v3971
    %v3984 = vadd.f32 %v3835, %v3959
    %v3985 = vadd.f32 %v3836, %v3963
    %v3986 = vadd.f32 %v3837, %v3967
    %v3987 = vadd.f32 %v3838, %v3971
    %v3988 = vadd.f32 %v3839, %v3959
    %v3989 = vadd.f32 %v3840, %v3963
    %v3990 = vadd.f32 %v3841, %v3967
    %v3991 = vadd.f32 %v3842, %v3971
    %v3992 = vadd.f32 %v3843, %v3959
    %v3993 = vadd.f32 %v3844, %v3963
    %v3994 = vadd.f32 %v3845, %v3967
    %v3995 = vadd.f32 %v3846, %v3971
    %v3996 = vadd.f32 %v3847, %v3959
    %v3997 = vadd.f32 %v3848, %v3963
    %v3998 = vadd.f32 %v3849, %v3967
    %v3999 = vadd.f32 %v3850, %v3971
    %v4000 = vadd.f32 %v3851, %v3959
    %v4001 = vadd.f32 %v3852, %v3963
    %v4002 = vadd.f32 %v3853, %v3967
    %v4003 = vadd.f32 %v3854, %v3971
    %v4004 = vadd.f32 %v3855, %v3959
    %v4005 = vadd.f32 %v3856, %v3963
    %v4006 = vadd.f32 %v3857, %v3967
    %v4007 = vadd.f32 %v3858, %v3971
    %v4008 = vadd.f32 %v3859, %v3959
    %v4009 = vadd.f32 %v3860, %v3963
    %v4010 = vadd.f32 %v3861, %v3967
    %v4011 = vadd.f32 %v3862, %v3971
    %v4012 = vadd.f32 %v3863, %v3959
    %v4013 = vadd.f32 %v3864, %v3963
    %v4014 = vadd.f32 %v3865, %v3967
    %v4015 = vadd.f32 %v3866, %v3971
    %v4016 = vadd.f32 %v3867, %v3959
    %v4017 = vadd.f32 %v3868, %v3963
    %v4018 = vadd.f32 %v3869, %v3967
    %v4019 = vadd.f32 %v3870, %v3971
    %v4020 = vadd.f32 %v3871, %v3959
    %v4021 = vadd.f32 %v3872, %v3963
    %v4022 = vadd.f32 %v3873, %v3967
    %v4023 = vadd.f32 %v3874, %v3971
    %v4024 = vadd.f32 %v3875, %v3959
    %v4025 = vadd.f32 %v3876, %v3963
    %v4026 = vadd.f32 %v3877, %v3967
    %v4027 = vadd.f32 %v3878, %v3971
    %v4028 = vadd.f32 %v3879, %v3959
    %v4029 = vadd.f32 %v3880, %v3963
    %v4030 = vadd.f32 %v3881, %v3967
    %v4031 = vadd.f32 %v3882, %v3971
    %v4032 = vadd.f32 %v3883, %v3959
    %v4033 = vadd.f32 %v3884, %v3963
    %v4034 = vadd.f32 %v3885, %v3967
    %v4035 = vadd.f32 %v3886, %v3971
    %v4036 = vadd.f32 %v3887, %v3959
    %v4037 = vadd.f32 %v3888, %v3963
    %v4038 = vadd.f32 %v3889, %v3967
    %v4039 = vadd.f32 %v3890, %v3971
    %v4040 = vadd.f32 %v3891, %v3959
    %v4041 = vadd.f32 %v3892, %v3963
    %v4042 = vadd.f32 %v3893, %v3967
    %v4043 = vadd.f32 %v3894, %v3971
    %v4044 = vadd.f32 %v3895, %v3959
    %v4045 = vadd.f32 %v3896, %v3963
    %v4046 = vadd.f32 %v3897, %v3967
    %v4047 = vadd.f32 %v3898, %v3971
    %v4048 = vadd.f32 %v3899, %v3959
    %v4049 = vadd.f32 %v3900, %v3963
    %v4050 = vadd.f32 %v3901, %v3967
    %v4051 = vadd.f32 %v3902, %v3971
    %v4052 = vadd.f32 %v3903, %v3959
    %v4053 = vadd.f32 %v3904, %v3963
    %v4054 = vadd.f32 %v3905, %v3967
    %v4055 = vadd.f32 %v3906, %v3971
    %v4056 = vadd.f32 %v3907, %v3959
    %v4057 = vadd.f32 %v3908, %v3963
    %v4058 = vadd.f32 %v3909, %v3967
    %v4059 = vadd.f32 %v3910, %v3971
    %v4060 = vadd.f32 %v3911, %v3959
    %v4061 = vadd.f32 %v3912, %v3963
    %v4062 = vadd.f32 %v3913, %v3967
    %v4063 = vadd.f32 %v3914, %v3971
    %v4064 = vadd.f32 %v3915, %v3959
    %v4065 = vadd.f32 %v3916, %v3963
    %v4066 = vadd.f32 %v3917, %v3967
    %v4067 = vadd.f32 %v3918, %v3971
    %v4068 = vadd.f32 %v3919, %v3959
    %v4069 = vadd.f32 %v3920, %v3963
    %v4070 = vadd.f32 %v3921, %v3967
    %v4071 = vadd.f32 %v3922, %v3971
    %v4072 = vadd.f32 %v3923, %v3959
    %v4073 = vadd.f32 %v3924, %v3963
    %v4074 = vadd.f32 %v3925, %v3967
    %v4075 = vadd.f32 %v3926, %v3971
    %v4076 = vadd.f32 %v3927, %v3959
    %v4077 = vadd.f32 %v3928, %v3963
    %v4078 = vadd.f32 %v3929, %v3967
    %v4079 = vadd.f32 %v3930, %v3971
    %v4080 = vadd.f32 %v3931, %v3959
    %v4081 = vadd.f32 %v3932, %v3963
    %v4082 = vadd.f32 %v3933, %v3967
    %v4083 = vadd.f32 %v3934, %v3971
    %v4084 = vadd.f32 %v3935, %v3959
    %v4085 = vadd.f32 %v3936, %v3963
    %v4086 = vadd.f32 %v3937, %v3967
    %v4087 = vadd.f32 %v3938, %v3971
    %v4088 = vadd.f32 %v3939, %v3959
    %v4089 = vadd.f32 %v3940, %v3963
    %v4090 = vadd.f32 %v3941, %v3967
    %v4091 = vadd.f32 %v3942, %v3971
    %v4092 = vadd.f32 %v3943, %v3959
    %v4093 = vadd.f32 %v3944, %v3963
    %v4094 = vadd.f32 %v3945, %v3967
    %v4095 = vadd.f32 %v3946, %v3971
    %v4096 = vadd.f32 %v3947, %v3959
    %v4097 = vadd.f32 %v3948, %v3963
    %v4098 = vadd.f32 %v3949, %v3967
    %v4099 = vadd.f32 %v3950, %v3971
    %v4100 = vadd.f32 %v3951, %v3959
    %v4101 = vadd.f32 %v3952, %v3963
    %v4102 = vadd.f32 %v3953, %v3967
    %v4103 = vadd.f32 %v3954, %v3971
    %v4104 = vmax.f32 %v3976, 0.0
    %v4105 = vmax.f32 %v3977, 0.0
    %v4106 = vmax.f32 %v3978, 0.0
    %v4107 = vmax.f32 %v3979, 0.0
    %v4108 = vmax.f32 %v3980, 0.0
    %v4109 = vmax.f32 %v3981, 0.0
    %v4110 = vmax.f32 %v3982, 0.0
    %v4111 = vmax.f32 %v3983, 0.0
    %v4112 = vmax.f32 %v3984, 0.0
    %v4113 = vmax.f32 %v3985, 0.0
    %v4114 = vmax.f32 %v3986, 0.0
    %v4115 = vmax.f32 %v3987, 0.0
    %v4116 = vmax.f32 %v3988, 0.0
    %v4117 = vmax.f32 %v3989, 0.0
    %v4118 = vmax.f32 %v3990, 0.0
    %v4119 = vmax.f32 %v3991, 0.0
    %v4120 = vmax.f32 %v3992, 0.0
    %v4121 = vmax.f32 %v3993, 0.0
    %v4122 = vmax.f32 %v3994, 0.0
    %v4123 = vmax.f32 %v3995, 0.0
    %v4124 = vmax.f32 %v3996, 0.0
    %v4125 = vmax.f32 %v3997, 0.0
    %v4126 = vmax.f32 %v3998, 0.0
    %v4127 = vmax.f32 %v3999, 0.0
    %v4128 = vmax.f32 %v4000, 0.0
    %v4129 = vmax.f32 %v4001, 0.0
    %v4130 = vmax.f32 %v4002, 0.0
    %v4131 = vmax.f32 %v4003, 0.0
    %v4132 = vmax.f32 %v4004, 0.0
    %v4133 = vmax.f32 %v4005, 0.0
    %v4134 = vmax.f32 %v4006, 0.0
    %v4135 = vmax.f32 %v4007, 0.0
    %v4136 = vmax.f32 %v4008, 0.0
    %v4137 = vmax.f32 %v4009, 0.0
    %v4138 = vmax.f32 %v4010, 0.0
    %v4139 = vmax.f32 %v4011, 0.0
    %v4140 = vmax.f32 %v4012, 0.0
    %v4141 = vmax.f32 %v4013, 0.0
    %v4142 = vmax.f32 %v4014, 0.0
    %v4143 = vmax.f32 %v4015, 0.0
    %v4144 = vmax.f32 %v4016, 0.0
    %v4145 = vmax.f32 %v4017, 0.0
    %v4146 = vmax.f32 %v4018, 0.0
    %v4147 = vmax.f32 %v4019, 0.0
    %v4148 = vmax.f32 %v4020, 0.0
    %v4149 = vmax.f32 %v4021, 0.0
    %v4150 = vmax.f32 %v4022, 0.0
    %v4151 = vmax.f32 %v4023, 0.0
    %v4152 = vmax.f32 %v4024, 0.0
    %v4153 = vmax.f32 %v4025, 0.0
    %v4154 = vmax.f32 %v4026, 0.0
    %v4155 = vmax.f32 %v4027, 0.0
    %v4156 = vmax.f32 %v4028, 0.0
    %v4157 = vmax.f32 %v4029, 0.0
    %v4158 = vmax.f32 %v4030, 0.0
    %v4159 = vmax.f32 %v4031, 0.0
    %v4160 = vmax.f32 %v4032, 0.0
    %v4161 = vmax.f32 %v4033, 0.0
    %v4162 = vmax.f32 %v4034, 0.0
    %v4163 = vmax.f32 %v4035, 0.0
    %v4164 = vmax.f32 %v4036, 0.0
    %v4165 = vmax.f32 %v4037, 0.0
    %v4166 = vmax.f32 %v4038, 0.0
    %v4167 = vmax.f32 %v4039, 0.0
    %v4168 = vmax.f32 %v4040, 0.0
    %v4169 = vmax.f32 %v4041, 0.0
    %v4170 = vmax.f32 %v4042, 0.0
    %v4171 = vmax.f32 %v4043, 0.0
    %v4172 = vmax.f32 %v4044, 0.0
    %v4173 = vmax.f32 %v4045, 0.0
    %v4174 = vmax.f32 %v4046, 0.0
    %v4175 = vmax.f32 %v4047, 0.0
    %v4176 = vmax.f32 %v4048, 0.0
    %v4177 = vmax.f32 %v4049, 0.0
    %v4178 = vmax.f32 %v4050, 0.0
    %v4179 = vmax.f32 %v4051, 0.0
    %v4180 = vmax.f32 %v4052, 0.0
    %v4181 = vmax.f32 %v4053, 0.0
    %v4182 = vmax.f32 %v4054, 0.0
    %v4183 = vmax.f32 %v4055, 0.0
    %v4184 = vmax.f32 %v4056, 0.0
    %v4185 = vmax.f32 %v4057, 0.0
    %v4186 = vmax.f32 %v4058, 0.0
    %v4187 = vmax.f32 %v4059, 0.0
    %v4188 = vmax.f32 %v4060, 0.0
    %v4189 = vmax.f32 %v4061, 0.0
    %v4190 = vmax.f32 %v4062, 0.0
    %v4191 = vmax.f32 %v4063, 0.0
    %v4192 = vmax.f32 %v4064, 0.0
    %v4193 = vmax.f32 %v4065, 0.0
    %v4194 = vmax.f32 %v4066, 0.0
    %v4195 = vmax.f32 %v4067, 0.0
    %v4196 = vmax.f32 %v4068, 0.0
    %v4197 = vmax.f32 %v4069, 0.0
    %v4198 = vmax.f32 %v4070, 0.0
    %v4199 = vmax.f32 %v4071, 0.0
    %v4200 = vmax.f32 %v4072, 0.0
    %v4201 = vmax.f32 %v4073, 0.0
    %v4202 = vmax.f32 %v4074, 0.0
    %v4203 = vmax.f32 %v4075, 0.0
    %v4204 = vmax.f32 %v4076, 0.0
    %v4205 = vmax.f32 %v4077, 0.0
    %v4206 = vmax.f32 %v4078, 0.0
    %v4207 = vmax.f32 %v4079, 0.0
    %v4208 = vmax.f32 %v4080, 0.0
    %v4209 = vmax.f32 %v4081, 0.0
    %v4210 = vmax.f32 %v4082, 0.0
    %v4211 = vmax.f32 %v4083, 0.0
    %v4212 = vmax.f32 %v4084, 0.0
    %v4213 = vmax.f32 %v4085, 0.0
    %v4214 = vmax.f32 %v4086, 0.0
    %v4215 = vmax.f32 %v4087, 0.0
    %v4216 = vmax.f32 %v4088, 0.0
    %v4217 = vmax.f32 %v4089, 0.0
    %v4218 = vmax.f32 %v4090, 0.0
    %v4219 = vmax.f32 %v4091, 0.0
    %v4220 = vmax.f32 %v4092, 0.0
    %v4221 = vmax.f32 %v4093, 0.0
    %v4222 = vmax.f32 %v4094, 0.0
    %v4223 = vmax.f32 %v4095, 0.0
    %v4224 = vmax.f32 %v4096, 0.0
    %v4225 = vmax.f32 %v4097, 0.0
    %v4226 = vmax.f32 %v4098, 0.0
    %v4227 = vmax.f32 %v4099, 0.0
    %v4228 = vmax.f32 %v4100, 0.0
    %v4229 = vmax.f32 %v4101, 0.0
    %v4230 = vmax.f32 %v4102, 0.0
    %v4231 = vmax.f32 %v4103, 0.0
    %v4232 = vpack.c.bf16 %v4108, %v4104
    %v4233 = vpack.c.bf16 %v4109, %v4105
    %v4234 = vpack.c.bf16 %v4110, %v4106
    %v4235 = vpack.c.bf16 %v4111, %v4107
    %v4236 = vpack.c.bf16 %v4116, %v4112
    %v4237 = vpack.c.bf16 %v4117, %v4113
    %v4238 = vpack.c.bf16 %v4118, %v4114
    %v4239 = vpack.c.bf16 %v4119, %v4115
    %v4240 = vpack.c.bf16 %v4124, %v4120
    %v4241 = vpack.c.bf16 %v4125, %v4121
    %v4242 = vpack.c.bf16 %v4126, %v4122
    %v4243 = vpack.c.bf16 %v4127, %v4123
    %v4244 = vpack.c.bf16 %v4132, %v4128
    %v4245 = vpack.c.bf16 %v4133, %v4129
    %v4246 = vpack.c.bf16 %v4134, %v4130
    %v4247 = vpack.c.bf16 %v4135, %v4131
    %v4248 = vpack.c.bf16 %v4140, %v4136
    %v4249 = vpack.c.bf16 %v4141, %v4137
    %v4250 = vpack.c.bf16 %v4142, %v4138
    %v4251 = vpack.c.bf16 %v4143, %v4139
    %v4252 = vpack.c.bf16 %v4148, %v4144
    %v4253 = vpack.c.bf16 %v4149, %v4145
    %v4254 = vpack.c.bf16 %v4150, %v4146
    %v4255 = vpack.c.bf16 %v4151, %v4147
    %v4256 = vpack.c.bf16 %v4156, %v4152
    %v4257 = vpack.c.bf16 %v4157, %v4153
    %v4258 = vpack.c.bf16 %v4158, %v4154
    %v4259 = vpack.c.bf16 %v4159, %v4155
    %v4260 = vpack.c.bf16 %v4164, %v4160
    %v4261 = vpack.c.bf16 %v4165, %v4161
    %v4262 = vpack.c.bf16 %v4166, %v4162
    %v4263 = vpack.c.bf16 %v4167, %v4163
    %v4264 = vpack.c.bf16 %v4172, %v4168
    %v4265 = vpack.c.bf16 %v4173, %v4169
    %v4266 = vpack.c.bf16 %v4174, %v4170
    %v4267 = vpack.c.bf16 %v4175, %v4171
    %v4268 = vpack.c.bf16 %v4180, %v4176
    %v4269 = vpack.c.bf16 %v4181, %v4177
    %v4270 = vpack.c.bf16 %v4182, %v4178
    %v4271 = vpack.c.bf16 %v4183, %v4179
    %v4272 = vpack.c.bf16 %v4188, %v4184
    %v4273 = vpack.c.bf16 %v4189, %v4185
    %v4274 = vpack.c.bf16 %v4190, %v4186
    %v4275 = vpack.c.bf16 %v4191, %v4187
    %v4276 = vpack.c.bf16 %v4196, %v4192
    %v4277 = vpack.c.bf16 %v4197, %v4193
    %v4278 = vpack.c.bf16 %v4198, %v4194
    %v4279 = vpack.c.bf16 %v4199, %v4195
    %v4280 = vpack.c.bf16 %v4204, %v4200
    %v4281 = vpack.c.bf16 %v4205, %v4201
    %v4282 = vpack.c.bf16 %v4206, %v4202
    %v4283 = vpack.c.bf16 %v4207, %v4203
    %v4284 = vpack.c.bf16 %v4212, %v4208
    %v4285 = vpack.c.bf16 %v4213, %v4209
    %v4286 = vpack.c.bf16 %v4214, %v4210
    %v4287 = vpack.c.bf16 %v4215, %v4211
    %v4288 = vpack.c.bf16 %v4220, %v4216
    %v4289 = vpack.c.bf16 %v4221, %v4217
    %v4290 = vpack.c.bf16 %v4222, %v4218
    %v4291 = vpack.c.bf16 %v4223, %v4219
    %v4292 = vpack.c.bf16 %v4228, %v4224
    %v4293 = vpack.c.bf16 %v4229, %v4225
    %v4294 = vpack.c.bf16 %v4230, %v4226
    %v4295 = vpack.c.bf16 %v4231, %v4227
    %v4296 = vld [vmem:[%s7] sm:$0xf]
    %v4297 = vld [vmem:[%s7 + $0x4] sm:$0xf]
    %v4298 = vld [vmem:[%s7 + $0x8] sm:$0xf]
    %v4299 = vld [vmem:[%s7 + $0xc] sm:$0xf]
    %v4300 = vld [vmem:[%s7 + $0x10] sm:$0xf]
    %v4301 = vld [vmem:[%s7 + $0x14] sm:$0xf]
    %v4302 = vld [vmem:[%s7 + $0x18] sm:$0xf]
    %v4303 = vld [vmem:[%s7 + $0x1c] sm:$0xf]
    %v4304 = vld [vmem:[%s7 + $0x20] sm:$0xf]
    %v4305 = vld [vmem:[%s7 + $0x24] sm:$0xf]
    %v4306 = vld [vmem:[%s7 + $0x28] sm:$0xf]
    %v4307 = vld [vmem:[%s7 + $0x2c] sm:$0xf]
    %v4308 = vld [vmem:[%s7 + $0x30] sm:$0xf]
    %v4309 = vld [vmem:[%s7 + $0x34] sm:$0xf]
    %v4310 = vld [vmem:[%s7 + $0x38] sm:$0xf]
    %v4311 = vld [vmem:[%s7 + $0x3c] sm:$0xf]
    %v4312 = vld [vmem:[%s7 + $0x40] sm:$0xf]
    %v4313 = vld [vmem:[%s7 + $0x44] sm:$0xf]
    %v4314 = vld [vmem:[%s7 + $0x48] sm:$0xf]
    %v4315 = vld [vmem:[%s7 + $0x4c] sm:$0xf]
    %v4316 = vld [vmem:[%s7 + $0x50] sm:$0xf]
    %v4317 = vld [vmem:[%s7 + $0x54] sm:$0xf]
    %v4318 = vld [vmem:[%s7 + $0x58] sm:$0xf]
    %v4319 = vld [vmem:[%s7 + $0x5c] sm:$0xf]
    %v4320 = vld [vmem:[%s7 + $0x60] sm:$0xf]
    %v4321 = vld [vmem:[%s7 + $0x64] sm:$0xf]
    %v4322 = vld [vmem:[%s7 + $0x68] sm:$0xf]
    %v4323 = vld [vmem:[%s7 + $0x6c] sm:$0xf]
    %v4324 = vld [vmem:[%s7 + $0x70] sm:$0xf]
    %v4325 = vld [vmem:[%s7 + $0x74] sm:$0xf]
    %v4326 = vld [vmem:[%s7 + $0x78] sm:$0xf]
    %v4327 = vld [vmem:[%s7 + $0x7c] sm:$0xf]
    %v4328 = vld [vmem:[%s7 + $0x80] sm:$0xf]
    %v4329 = vld [vmem:[%s7 + $0x84] sm:$0xf]
    %v4330 = vld [vmem:[%s7 + $0x88] sm:$0xf]
    %v4331 = vld [vmem:[%s7 + $0x8c] sm:$0xf]
    %v4332 = vld [vmem:[%s7 + $0x90] sm:$0xf]
    %v4333 = vld [vmem:[%s7 + $0x94] sm:$0xf]
    %v4334 = vld [vmem:[%s7 + $0x98] sm:$0xf]
    %v4335 = vld [vmem:[%s7 + $0x9c] sm:$0xf]
    %v4336 = vld [vmem:[%s7 + $0xa0] sm:$0xf]
    %v4337 = vld [vmem:[%s7 + $0xa4] sm:$0xf]
    %v4338 = vld [vmem:[%s7 + $0xa8] sm:$0xf]
    %v4339 = vld [vmem:[%s7 + $0xac] sm:$0xf]
    %v4340 = vld [vmem:[%s7 + $0xb0] sm:$0xf]
    %v4341 = vld [vmem:[%s7 + $0xb4] sm:$0xf]
    %v4342 = vld [vmem:[%s7 + $0xb8] sm:$0xf]
    %v4343 = vld [vmem:[%s7 + $0xbc] sm:$0xf]
    %v4344 = vld [vmem:[%s7 + $0xc0] sm:$0xf]
    %v4345 = vld [vmem:[%s7 + $0xc4] sm:$0xf]
    %v4346 = vld [vmem:[%s7 + $0xc8] sm:$0xf]
    %v4347 = vld [vmem:[%s7 + $0xcc] sm:$0xf]
    %v4348 = vld [vmem:[%s7 + $0xd0] sm:$0xf]
    %v4349 = vld [vmem:[%s7 + $0xd4] sm:$0xf]
    %v4350 = vld [vmem:[%s7 + $0xd8] sm:$0xf]
    %v4351 = vld [vmem:[%s7 + $0xdc] sm:$0xf]
    %v4352 = vld [vmem:[%s7 + $0xe0] sm:$0xf]
    %v4353 = vld [vmem:[%s7 + $0xe4] sm:$0xf]
    %v4354 = vld [vmem:[%s7 + $0xe8] sm:$0xf]
    %v4355 = vld [vmem:[%s7 + $0xec] sm:$0xf]
    %v4356 = vld [vmem:[%s7 + $0xf0] sm:$0xf]
    %v4357 = vld [vmem:[%s7 + $0xf4] sm:$0xf]
    %v4358 = vld [vmem:[%s7 + $0xf8] sm:$0xf]
    %v4359 = vld [vmem:[%s7 + $0xfc] sm:$0xf]
    %v4424 = vunpack.c.l.b16 %v4296
    %v4425 = vunpack.c.l.b16 %v4297
    %v4426 = vunpack.c.l.b16 %v4298
    %v4427 = vunpack.c.l.b16 %v4299
    %v4428 = vunpack.c.l.b16 %v4300
    %v4429 = vunpack.c.l.b16 %v4301
    %v4430 = vunpack.c.l.b16 %v4302
    %v4431 = vunpack.c.l.b16 %v4303
    %v4432 = vunpack.c.l.b16 %v4304
    %v4433 = vunpack.c.l.b16 %v4305
    %v4434 = vunpack.c.l.b16 %v4306
    %v4435 = vunpack.c.l.b16 %v4307
    %v4436 = vunpack.c.l.b16 %v4308
    %v4437 = vunpack.c.l.b16 %v4309
    %v4438 = vunpack.c.l.b16 %v4310
    %v4439 = vunpack.c.l.b16 %v4311
    %v4440 = vunpack.c.l.b16 %v4312
    %v4441 = vunpack.c.l.b16 %v4313
    %v4442 = vunpack.c.l.b16 %v4314
    %v4443 = vunpack.c.l.b16 %v4315
    %v4444 = vunpack.c.l.b16 %v4316
    %v4445 = vunpack.c.l.b16 %v4317
    %v4446 = vunpack.c.l.b16 %v4318
    %v4447 = vunpack.c.l.b16 %v4319
    %v4448 = vunpack.c.l.b16 %v4320
    %v4449 = vunpack.c.l.b16 %v4321
    %v4450 = vunpack.c.l.b16 %v4322
    %v4451 = vunpack.c.l.b16 %v4323
    %v4452 = vunpack.c.l.b16 %v4324
    %v4453 = vunpack.c.l.b16 %v4325
    %v4454 = vunpack.c.l.b16 %v4326
    %v4455 = vunpack.c.l.b16 %v4327
    %v4456 = vunpack.c.l.b16 %v4328
    %v4457 = vunpack.c.l.b16 %v4329
    %v4458 = vunpack.c.l.b16 %v4330
    %v4459 = vunpack.c.l.b16 %v4331
    %v4460 = vunpack.c.l.b16 %v4332
    %v4461 = vunpack.c.l.b16 %v4333
    %v4462 = vunpack.c.l.b16 %v4334
    %v4463 = vunpack.c.l.b16 %v4335
    %v4464 = vunpack.c.l.b16 %v4336
    %v4465 = vunpack.c.l.b16 %v4337
    %v4466 = vunpack.c.l.b16 %v4338
    %v4467 = vunpack.c.l.b16 %v4339
    %v4468 = vunpack.c.l.b16 %v4340
    %v4469 = vunpack.c.l.b16 %v4341
    %v4470 = vunpack.c.l.b16 %v4342
    %v4471 = vunpack.c.l.b16 %v4343
    %v4472 = vunpack.c.l.b16 %v4344
    %v4473 = vunpack.c.l.b16 %v4345
    %v4474 = vunpack.c.l.b16 %v4346
    %v4475 = vunpack.c.l.b16 %v4347
    %v4476 = vunpack.c.l.b16 %v4348
    %v4477 = vunpack.c.l.b16 %v4349
    %v4478 = vunpack.c.l.b16 %v4350
    %v4479 = vunpack.c.l.b16 %v4351
    %v4480 = vunpack.c.l.b16 %v4352
    %v4481 = vunpack.c.l.b16 %v4353
    %v4482 = vunpack.c.l.b16 %v4354
    %v4483 = vunpack.c.l.b16 %v4355
    %v4484 = vunpack.c.l.b16 %v4356
    %v4485 = vunpack.c.l.b16 %v4357
    %v4486 = vunpack.c.l.b16 %v4358
    %v4487 = vunpack.c.l.b16 %v4359
    %v4488 = vpack.c.b16 %v4425, %v4424
    %v4489 = vpack.c.b16 %v4427, %v4426
    %v4490 = vpack.c.b16 %v4429, %v4428
    %v4491 = vpack.c.b16 %v4431, %v4430
    %v4492 = vpack.c.b16 %v4433, %v4432
    %v4493 = vpack.c.b16 %v4435, %v4434
    %v4494 = vpack.c.b16 %v4437, %v4436
    %v4495 = vpack.c.b16 %v4439, %v4438
    %v4496 = vpack.c.b16 %v4441, %v4440
    %v4497 = vpack.c.b16 %v4443, %v4442
    %v4498 = vpack.c.b16 %v4445, %v4444
    %v4499 = vpack.c.b16 %v4447, %v4446
    %v4500 = vpack.c.b16 %v4449, %v4448
    %v4501 = vpack.c.b16 %v4451, %v4450
    %v4502 = vpack.c.b16 %v4453, %v4452
    %v4503 = vpack.c.b16 %v4455, %v4454
    %v4504 = vpack.c.b16 %v4457, %v4456
    %v4505 = vpack.c.b16 %v4459, %v4458
    %v4506 = vpack.c.b16 %v4461, %v4460
    %v4507 = vpack.c.b16 %v4463, %v4462
    %v4508 = vpack.c.b16 %v4465, %v4464
    %v4509 = vpack.c.b16 %v4467, %v4466
    %v4510 = vpack.c.b16 %v4469, %v4468
    %v4511 = vpack.c.b16 %v4471, %v4470
    %v4512 = vpack.c.b16 %v4473, %v4472
    %v4513 = vpack.c.b16 %v4475, %v4474
    %v4514 = vpack.c.b16 %v4477, %v4476
    %v4515 = vpack.c.b16 %v4479, %v4478
    %v4516 = vpack.c.b16 %v4481, %v4480
    %v4517 = vpack.c.b16 %v4483, %v4482
    %v4518 = vpack.c.b16 %v4485, %v4484
    %v4519 = vpack.c.b16 %v4487, %v4486
    %4552 = vmatprep.subr.bf16.mxu0 0
    %4553 = vmatpush1.bf16.msra.mxu0 %v4488
    %4554 = vmatprep.subr.bf16.mxu0 0
    %4555 = vmatpush1.bf16.msra.mxu0 %v4489
    %4556 = vmatprep.subr.bf16.mxu0 0
    %4557 = vmatpush1.bf16.msra.mxu0 %v4490
    %4558 = vmatprep.subr.bf16.mxu0 0
    %4559 = vmatpush1.bf16.msra.mxu0 %v4491
    %4560 = vmatprep.subr.bf16.mxu0 0
    %4561 = vmatpush1.bf16.msra.mxu0 %v4492
    %4562 = vmatprep.subr.bf16.mxu0 0
    %4563 = vmatpush1.bf16.msra.mxu0 %v4493
    %4564 = vmatprep.subr.bf16.mxu0 0
    %4565 = vmatpush1.bf16.msra.mxu0 %v4494
    %4566 = vmatprep.subr.bf16.mxu0 0
    %4567 = vmatpush1.bf16.msra.mxu0 %v4495
    %4568 = vmatprep.subr.bf16.mxu0 0
    %4569 = vmatpush1.bf16.msra.mxu0 %v4496
    %4570 = vmatprep.subr.bf16.mxu0 0
    %4571 = vmatpush1.bf16.msra.mxu0 %v4497
    %4572 = vmatprep.subr.bf16.mxu0 0
    %4573 = vmatpush1.bf16.msra.mxu0 %v4498
    %4574 = vmatprep.subr.bf16.mxu0 0
    %4575 = vmatpush1.bf16.msra.mxu0 %v4499
    %4576 = vmatprep.subr.bf16.mxu0 0
    %4577 = vmatpush1.bf16.msra.mxu0 %v4500
    %4578 = vmatprep.subr.bf16.mxu0 0
    %4579 = vmatpush1.bf16.msra.mxu0 %v4501
    %4580 = vmatprep.subr.bf16.mxu0 0
    %4581 = vmatpush1.bf16.msra.mxu0 %v4502
    %4582 = vmatprep.subr.bf16.mxu0 0
    %4583 = vmatpush1.bf16.msra.mxu0 %v4503
    %4584 = vmatprep.mubr.bf16.mxu0 %v4233
    %4585 = vmatmul.mubr.bf16.gmra.mrb[0].mxu0 %v4232
    %v4586 = vpop.f32.mrb[0].mxu0
    %v4587 = vadd.f32 0.0, %v4586
    %v4588 = vpop.f32.mrb[0].mxu0
    %v4589 = vpop.f32.mrb[0].mxu0
    %v4590 = vadd.f32 0.0, %v4589
    %v4591 = vpop.f32.mrb[0].mxu0
    %4592 = vmatprep.mubr.bf16.mxu0 %v4237
    %4593 = vmatmul.mubr.bf16.gmra.mrb[0].mxu0 %v4236
    %v4594 = vpop.f32.mrb[0].mxu0
    %v4595 = vadd.f32 0.0, %v4594
    %v4596 = vpop.f32.mrb[0].mxu0
    %v4597 = vpop.f32.mrb[0].mxu0
    %v4598 = vadd.f32 0.0, %v4597
    %v4599 = vpop.f32.mrb[0].mxu0
    %4600 = vmatprep.mubr.bf16.mxu0 %v4241
    %4601 = vmatmul.mubr.bf16.gmra.mrb[0].mxu0 %v4240
    %v4602 = vpop.f32.mrb[0].mxu0
    %v4603 = vadd.f32 0.0, %v4602
    %v4604 = vpop.f32.mrb[0].mxu0
    %v4605 = vpop.f32.mrb[0].mxu0
    %v4606 = vadd.f32 0.0, %v4605
    %v4607 = vpop.f32.mrb[0].mxu0
    %4608 = vmatprep.mubr.bf16.mxu0 %v4245
    %4609 = vmatmul.mubr.bf16.gmra.mrb[0].mxu0 %v4244
    %v4610 = vpop.f32.mrb[0].mxu0
    %v4611 = vadd.f32 0.0, %v4610
    %v4612 = vpop.f32.mrb[0].mxu0
    %v4613 = vpop.f32.mrb[0].mxu0
    %v4614 = vadd.f32 0.0, %v4613
    %v4615 = vpop.f32.mrb[0].mxu0
    %4616 = vmatprep.mubr.bf16.mxu0 %v4249
    %4617 = vmatmul.mubr.bf16.gmra.mrb[0].mxu0 %v4248
    %v4618 = vpop.f32.mrb[0].mxu0
    %v4619 = vadd.f32 0.0, %v4618
    %v4620 = vpop.f32.mrb[0].mxu0
    %v4621 = vpop.f32.mrb[0].mxu0
    %v4622 = vadd.f32 0.0, %v4621
    %v4623 = vpop.f32.mrb[0].mxu0
    %4624 = vmatprep.mubr.bf16.mxu0 %v4253
    %4625 = vmatmul.mubr.bf16.gmra.mrb[0].mxu0 %v4252
    %v4626 = vpop.f32.mrb[0].mxu0
    %v4627 = vadd.f32 0.0, %v4626
    %v4628 = vpop.f32.mrb[0].mxu0
    %v4629 = vpop.f32.mrb[0].mxu0
    %v4630 = vadd.f32 0.0, %v4629
    %v4631 = vpop.f32.mrb[0].mxu0
    %4632 = vmatprep.mubr.bf16.mxu0 %v4257
    %4633 = vmatmul.mubr.bf16.gmra.mrb[0].mxu0 %v4256
    %v4634 = vpop.f32.mrb[0].mxu0
    %v4635 = vadd.f32 0.0, %v4634
    %v4636 = vpop.f32.mrb[0].mxu0
    %v4637 = vpop.f32.mrb[0].mxu0
    %v4638 = vadd.f32 0.0, %v4637
    %v4639 = vpop.f32.mrb[0].mxu0
    %4640 = vmatprep.mubr.bf16.mxu0 %v4261
    %4641 = vmatmul.mubr.bf16.gmra.mrb[0].mxu0 %v4260
    %v4642 = vpop.f32.mrb[0].mxu0
    %v4643 = vadd.f32 0.0, %v4642
    %v4644 = vpop.f32.mrb[0].mxu0
    %v4645 = vpop.f32.mrb[0].mxu0
    %v4646 = vadd.f32 0.0, %v4645
    %v4647 = vpop.f32.mrb[0].mxu0
    %4648 = vmatprep.mubr.bf16.mxu0 %v4265
    %4649 = vmatmul.mubr.bf16.gmra.mrb[0].mxu0 %v4264
    %v4650 = vpop.f32.mrb[0].mxu0
    %v4651 = vadd.f32 0.0, %v4650
    %v4652 = vpop.f32.mrb[0].mxu0
    %v4653 = vpop.f32.mrb[0].mxu0
    %v4654 = vadd.f32 0.0, %v4653
    %v4655 = vpop.f32.mrb[0].mxu0
    %4656 = vmatprep.mubr.bf16.mxu0 %v4269
    %4657 = vmatmul.mubr.bf16.gmra.mrb[0].mxu0 %v4268
    %v4658 = vpop.f32.mrb[0].mxu0
    %v4659 = vadd.f32 0.0, %v4658
    %v4660 = vpop.f32.mrb[0].mxu0
    %v4661 = vpop.f32.mrb[0].mxu0
    %v4662 = vadd.f32 0.0, %v4661
    %v4663 = vpop.f32.mrb[0].mxu0
    %4664 = vmatprep.mubr.bf16.mxu0 %v4273
    %4665 = vmatmul.mubr.bf16.gmra.mrb[0].mxu0 %v4272
    %v4666 = vpop.f32.mrb[0].mxu0
    %v4667 = vadd.f32 0.0, %v4666
    %v4668 = vpop.f32.mrb[0].mxu0
    %v4669 = vpop.f32.mrb[0].mxu0
    %v4670 = vadd.f32 0.0, %v4669
    %v4671 = vpop.f32.mrb[0].mxu0
    %4672 = vmatprep.mubr.bf16.mxu0 %v4277
    %4673 = vmatmul.mubr.bf16.gmra.mrb[0].mxu0 %v4276
    %v4674 = vpop.f32.mrb[0].mxu0
    %v4675 = vadd.f32 0.0, %v4674
    %v4676 = vpop.f32.mrb[0].mxu0
    %v4677 = vpop.f32.mrb[0].mxu0
    %v4678 = vadd.f32 0.0, %v4677
    %v4679 = vpop.f32.mrb[0].mxu0
    %4680 = vmatprep.mubr.bf16.mxu0 %v4281
    %4681 = vmatmul.mubr.bf16.gmra.mrb[0].mxu0 %v4280
    %v4682 = vpop.f32.mrb[0].mxu0
    %v4683 = vadd.f32 0.0, %v4682
    %v4684 = vpop.f32.mrb[0].mxu0
    %v4685 = vpop.f32.mrb[0].mxu0
    %v4686 = vadd.f32 0.0, %v4685
    %v4687 = vpop.f32.mrb[0].mxu0
    %4688 = vmatprep.mubr.bf16.mxu0 %v4285
    %4689 = vmatmul.mubr.bf16.gmra.mrb[0].mxu0 %v4284
    %v4690 = vpop.f32.mrb[0].mxu0
    %v4691 = vadd.f32 0.0, %v4690
    %v4692 = vpop.f32.mrb[0].mxu0
    %v4693 = vpop.f32.mrb[0].mxu0
    %v4694 = vadd.f32 0.0, %v4693
    %v4695 = vpop.f32.mrb[0].mxu0
    %4696 = vmatprep.mubr.bf16.mxu0 %v4289
    %4697 = vmatmul.mubr.bf16.gmra.mrb[0].mxu0 %v4288
    %v4698 = vpop.f32.mrb[0].mxu0
    %v4699 = vadd.f32 0.0, %v4698
    %v4700 = vpop.f32.mrb[0].mxu0
    %v4701 = vpop.f32.mrb[0].mxu0
    %v4702 = vadd.f32 0.0, %v4701
    %v4703 = vpop.f32.mrb[0].mxu0
    %4704 = vmatprep.mubr.bf16.mxu0 %v4293
    %4705 = vmatmul.mubr.bf16.gmra.mrb[0].mxu0 %v4292
    %v4706 = vpop.f32.mrb[0].mxu0
    %v4707 = vadd.f32 0.0, %v4706
    %v4708 = vpop.f32.mrb[0].mxu0
    %v4709 = vpop.f32.mrb[0].mxu0
    %v4710 = vadd.f32 0.0, %v4709
    %v4711 = vpop.f32.mrb[0].mxu0
    %4712 = vdwg.mxu0
    %4713 = vmatprep.subr.bf16.mxu0 0
    %4714 = vmatpush1.bf16.msra.mxu0 %v4504
    %4715 = vmatprep.subr.bf16.mxu0 0
    %4716 = vmatpush1.bf16.msra.mxu0 %v4505
    %4717 = vmatprep.subr.bf16.mxu0 0
    %4718 = vmatpush1.bf16.msra.mxu0 %v4506
    %4719 = vmatprep.subr.bf16.mxu0 0
    %4720 = vmatpush1.bf16.msra.mxu0 %v4507
    %4721 = vmatprep.subr.bf16.mxu0 0
    %4722 = vmatpush1.bf16.msra.mxu0 %v4508
    %4723 = vmatprep.subr.bf16.mxu0 0
    %4724 = vmatpush1.bf16.msra.mxu0 %v4509
    %4725 = vmatprep.subr.bf16.mxu0 0
    %4726 = vmatpush1.bf16.msra.mxu0 %v4510
    %4727 = vmatprep.subr.bf16.mxu0 0
    %4728 = vmatpush1.bf16.msra.mxu0 %v4511
    %4729 = vmatprep.subr.bf16.mxu0 0
    %4730 = vmatpush1.bf16.msra.mxu0 %v4512
    %4731 = vmatprep.subr.bf16.mxu0 0
    %4732 = vmatpush1.bf16.msra.mxu0 %v4513
    %4733 = vmatprep.subr.bf16.mxu0 0
    %4734 = vmatpush1.bf16.msra.mxu0 %v4514
    %4735 = vmatprep.subr.bf16.mxu0 0
    %4736 = vmatpush1.bf16.msra.mxu0 %v4515
    %4737 = vmatprep.subr.bf16.mxu0 0
    %4738 = vmatpush1.bf16.msra.mxu0 %v4516
    %4739 = vmatprep.subr.bf16.mxu0 0
    %4740 = vmatpush1.bf16.msra.mxu0 %v4517
    %4741 = vmatprep.subr.bf16.mxu0 0
    %4742 = vmatpush1.bf16.msra.mxu0 %v4518
    %4743 = vmatprep.subr.bf16.mxu0 0
    %4744 = vmatpush1.bf16.msra.mxu0 %v4519
    %4745 = vmatprep.mubr.bf16.mxu0 %v4235
    %4746 = vmatmul.mubr.bf16.gmra.mrb[0].mxu0 %v4234
    %v4747 = vpop.f32.mrb[0].mxu0
    %v4748 = vadd.f32 %v4587, %v4747
    %v4749 = vpop.f32.mrb[0].mxu0
    %v4750 = vpop.f32.mrb[0].mxu0
    %v4751 = vadd.f32 %v4590, %v4750
    %v4752 = vpop.f32.mrb[0].mxu0
    %4753 = vmatprep.mubr.bf16.mxu0 %v4239
    %4754 = vmatmul.mubr.bf16.gmra.mrb[0].mxu0 %v4238
    %v4755 = vpop.f32.mrb[0].mxu0
    %v4756 = vadd.f32 %v4595, %v4755
    %v4757 = vpop.f32.mrb[0].mxu0
    %v4758 = vpop.f32.mrb[0].mxu0
    %v4759 = vadd.f32 %v4598, %v4758
    %v4760 = vpop.f32.mrb[0].mxu0
    %4761 = vmatprep.mubr.bf16.mxu0 %v4243
    %4762 = vmatmul.mubr.bf16.gmra.mrb[0].mxu0 %v4242
    %v4763 = vpop.f32.mrb[0].mxu0
    %v4764 = vadd.f32 %v4603, %v4763
    %v4765 = vpop.f32.mrb[0].mxu0
    %v4766 = vpop.f32.mrb[0].mxu0
    %v4767 = vadd.f32 %v4606, %v4766
    %v4768 = vpop.f32.mrb[0].mxu0
    %4769 = vmatprep.mubr.bf16.mxu0 %v4247
    %4770 = vmatmul.mubr.bf16.gmra.mrb[0].mxu0 %v4246
    %v4771 = vpop.f32.mrb[0].mxu0
    %v4772 = vadd.f32 %v4611, %v4771
    %v4773 = vpop.f32.mrb[0].mxu0
    %v4774 = vpop.f32.mrb[0].mxu0
    %v4775 = vadd.f32 %v4614, %v4774
    %v4776 = vpop.f32.mrb[0].mxu0
    %4777 = vmatprep.mubr.bf16.mxu0 %v4251
    %4778 = vmatmul.mubr.bf16.gmra.mrb[0].mxu0 %v4250
    %v4779 = vpop.f32.mrb[0].mxu0
    %v4780 = vadd.f32 %v4619, %v4779
    %v4781 = vpop.f32.mrb[0].mxu0
    %v4782 = vpop.f32.mrb[0].mxu0
    %v4783 = vadd.f32 %v4622, %v4782
    %v4784 = vpop.f32.mrb[0].mxu0
    %4785 = vmatprep.mubr.bf16.mxu0 %v4255
    %4786 = vmatmul.mubr.bf16.gmra.mrb[0].mxu0 %v4254
    %v4787 = vpop.f32.mrb[0].mxu0
    %v4788 = vadd.f32 %v4627, %v4787
    %v4789 = vpop.f32.mrb[0].mxu0
    %v4790 = vpop.f32.mrb[0].mxu0
    %v4791 = vadd.f32 %v4630, %v4790
    %v4792 = vpop.f32.mrb[0].mxu0
    %4793 = vmatprep.mubr.bf16.mxu0 %v4259
    %4794 = vmatmul.mubr.bf16.gmra.mrb[0].mxu0 %v4258
    %v4795 = vpop.f32.mrb[0].mxu0
    %v4796 = vadd.f32 %v4635, %v4795
    %v4797 = vpop.f32.mrb[0].mxu0
    %v4798 = vpop.f32.mrb[0].mxu0
    %v4799 = vadd.f32 %v4638, %v4798
    %v4800 = vpop.f32.mrb[0].mxu0
    %4801 = vmatprep.mubr.bf16.mxu0 %v4263
    %4802 = vmatmul.mubr.bf16.gmra.mrb[0].mxu0 %v4262
    %v4803 = vpop.f32.mrb[0].mxu0
    %v4804 = vadd.f32 %v4643, %v4803
    %v4805 = vpop.f32.mrb[0].mxu0
    %v4806 = vpop.f32.mrb[0].mxu0
    %v4807 = vadd.f32 %v4646, %v4806
    %v4808 = vpop.f32.mrb[0].mxu0
    %4809 = vmatprep.mubr.bf16.mxu0 %v4267
    %4810 = vmatmul.mubr.bf16.gmra.mrb[0].mxu0 %v4266
    %v4811 = vpop.f32.mrb[0].mxu0
    %v4812 = vadd.f32 %v4651, %v4811
    %v4813 = vpop.f32.mrb[0].mxu0
    %v4814 = vpop.f32.mrb[0].mxu0
    %v4815 = vadd.f32 %v4654, %v4814
    %v4816 = vpop.f32.mrb[0].mxu0
    %4817 = vmatprep.mubr.bf16.mxu0 %v4271
    %4818 = vmatmul.mubr.bf16.gmra.mrb[0].mxu0 %v4270
    %v4819 = vpop.f32.mrb[0].mxu0
    %v4820 = vadd.f32 %v4659, %v4819
    %v4821 = vpop.f32.mrb[0].mxu0
    %v4822 = vpop.f32.mrb[0].mxu0
    %v4823 = vadd.f32 %v4662, %v4822
    %v4824 = vpop.f32.mrb[0].mxu0
    %4825 = vmatprep.mubr.bf16.mxu0 %v4275
    %4826 = vmatmul.mubr.bf16.gmra.mrb[0].mxu0 %v4274
    %v4827 = vpop.f32.mrb[0].mxu0
    %v4828 = vadd.f32 %v4667, %v4827
    %v4829 = vpop.f32.mrb[0].mxu0
    %v4830 = vpop.f32.mrb[0].mxu0
    %v4831 = vadd.f32 %v4670, %v4830
    %v4832 = vpop.f32.mrb[0].mxu0
    %4833 = vmatprep.mubr.bf16.mxu0 %v4279
    %4834 = vmatmul.mubr.bf16.gmra.mrb[0].mxu0 %v4278
    %v4835 = vpop.f32.mrb[0].mxu0
    %v4836 = vadd.f32 %v4675, %v4835
    %v4837 = vpop.f32.mrb[0].mxu0
    %v4838 = vpop.f32.mrb[0].mxu0
    %v4839 = vadd.f32 %v4678, %v4838
    %v4840 = vpop.f32.mrb[0].mxu0
    %4841 = vmatprep.mubr.bf16.mxu0 %v4283
    %4842 = vmatmul.mubr.bf16.gmra.mrb[0].mxu0 %v4282
    %v4843 = vpop.f32.mrb[0].mxu0
    %v4844 = vadd.f32 %v4683, %v4843
    %v4845 = vpop.f32.mrb[0].mxu0
    %v4846 = vpop.f32.mrb[0].mxu0
    %v4847 = vadd.f32 %v4686, %v4846
    %v4848 = vpop.f32.mrb[0].mxu0
    %4849 = vmatprep.mubr.bf16.mxu0 %v4287
    %4850 = vmatmul.mubr.bf16.gmra.mrb[0].mxu0 %v4286
    %v4851 = vpop.f32.mrb[0].mxu0
    %v4852 = vadd.f32 %v4691, %v4851
    %v4853 = vpop.f32.mrb[0].mxu0
    %v4854 = vpop.f32.mrb[0].mxu0
    %v4855 = vadd.f32 %v4694, %v4854
    %v4856 = vpop.f32.mrb[0].mxu0
    %4857 = vmatprep.mubr.bf16.mxu0 %v4291
    %4858 = vmatmul.mubr.bf16.gmra.mrb[0].mxu0 %v4290
    %v4859 = vpop.f32.mrb[0].mxu0
    %v4860 = vadd.f32 %v4699, %v4859
    %v4861 = vpop.f32.mrb[0].mxu0
    %v4862 = vpop.f32.mrb[0].mxu0
    %v4863 = vadd.f32 %v4702, %v4862
    %v4864 = vpop.f32.mrb[0].mxu0
    %4865 = vmatprep.mubr.bf16.mxu0 %v4295
    %4866 = vmatmul.mubr.bf16.gmra.mrb[0].mxu0 %v4294
    %v4867 = vpop.f32.mrb[0].mxu0
    %v4868 = vadd.f32 %v4707, %v4867
    %v4869 = vpop.f32.mrb[0].mxu0
    %v4870 = vpop.f32.mrb[0].mxu0
    %v4871 = vadd.f32 %v4710, %v4870
    %v4872 = vpop.f32.mrb[0].mxu0
    %4873 = vdwg.mxu0
    %4874 = vst [vmem:[#allocation5] sm:$0xff] %v4748
    %4875 = vst [vmem:[#allocation5 + $0x8] sm:$0xff] %v4751
    %4876 = vst [vmem:[#allocation5 + $0x10] sm:$0xff] %v4756
    %4877 = vst [vmem:[#allocation5 + $0x18] sm:$0xff] %v4759
    %4878 = vst [vmem:[#allocation5 + $0x20] sm:$0xff] %v4764
    %4879 = vst [vmem:[#allocation5 + $0x28] sm:$0xff] %v4767
    %4880 = vst [vmem:[#allocation5 + $0x30] sm:$0xff] %v4772
    %4881 = vst [vmem:[#allocation5 + $0x38] sm:$0xff] %v4775
    %4882 = vst [vmem:[#allocation5 + $0x40] sm:$0xff] %v4780
    %4883 = vst [vmem:[#allocation5 + $0x48] sm:$0xff] %v4783
    %4884 = vst [vmem:[#allocation5 + $0x50] sm:$0xff] %v4788
    %4885 = vst [vmem:[#allocation5 + $0x58] sm:$0xff] %v4791
    %4886 = vst [vmem:[#allocation5 + $0x60] sm:$0xff] %v4796
    %4887 = vst [vmem:[#allocation5 + $0x68] sm:$0xff] %v4799
    %4888 = vst [vmem:[#allocation5 + $0x70] sm:$0xff] %v4804
    %4889 = vst [vmem:[#allocation5 + $0x78] sm:$0xff] %v4807
    %4890 = vst [vmem:[#allocation5 + $0x80] sm:$0xff] %v4812
    %4891 = vst [vmem:[#allocation5 + $0x88] sm:$0xff] %v4815
    %4892 = vst [vmem:[#allocation5 + $0x90] sm:$0xff] %v4820
    %4893 = vst [vmem:[#allocation5 + $0x98] sm:$0xff] %v4823
    %4894 = vst [vmem:[#allocation5 + $0xa0] sm:$0xff] %v4828
    %4895 = vst [vmem:[#allocation5 + $0xa8] sm:$0xff] %v4831
    %4896 = vst [vmem:[#allocation5 + $0xb0] sm:$0xff] %v4836
    %4897 = vst [vmem:[#allocation5 + $0xb8] sm:$0xff] %v4839
    %4898 = vst [vmem:[#allocation5 + $0xc0] sm:$0xff] %v4844
    %4899 = vst [vmem:[#allocation5 + $0xc8] sm:$0xff] %v4847
    %4900 = vst [vmem:[#allocation5 + $0xd0] sm:$0xff] %v4852
    %4901 = vst [vmem:[#allocation5 + $0xd8] sm:$0xff] %v4855
    %4902 = vst [vmem:[#allocation5 + $0xe0] sm:$0xff] %v4860
    %4903 = vst [vmem:[#allocation5 + $0xe8] sm:$0xff] %v4863
    %4904 = vst [vmem:[#allocation5 + $0xf0] sm:$0xff] %v4868
    %4905 = vst [vmem:[#allocation5 + $0xf8] sm:$0xff] %v4871
    // Predicated region
    $region38: #{tpu_custom_call.1} parent=1 // pred_check
      _
    $region39: #{tpu_custom_call.1} parent=1 // pred_check_branch
      %4907 = sbr.rel (0) target = $region41
    $region40: #{tpu_custom_call.1} parent=1 // pred_region
      %s4909 = ssub.s32 4096, 4096
      %4910 = vsyncadd [#allocation4], %s4909
      %s4911 = sshll.u32 [#allocation5], 4
      %s4912 = int_to_ptr.vmem [resolvable:$true] %s4911
      %4917 = dma.vmem_to_hbm [thread:$0]  %s4912, 4096, %s8, [#allocation4], 128, 128, 8
    $region41: #{tpu_custom_call.1} parent=1 // pred_fallthru
      _
    // Predicated region
    $region42: #{tpu_custom_call.1} parent=1 // pred_check
      _
    $region43: #{tpu_custom_call.1} parent=1 // pred_check_branch
      %4919 = sbr.rel (0) target = $region45
    $region44: #{tpu_custom_call.1} parent=1 // pred_region
      %4920 = dma.done [#allocation4], 4096
    $region45: #{tpu_custom_call.1} parent=1 // pred_fallthru
      _
    %4921 = vsyncpa [#allocation3], 1
    %4922 = vsyncpa [#allocation4], 1

</llo_original>
